<compile_context>
chip_gen: v7x
topology: tpu7x:2x2x1
jax: 0.10.0
libtpu: 0.0.40
codegen_flags: <defaults>
</compile_context>

<pallas_src>
import functools
import math

import jax
import jax.numpy as jnp
from jax import lax
from jax.experimental import pallas as pl
from jax.experimental.pallas import tpu as pltpu


# ------------------------- fused encoder-layer kernel -------------------------

def _encoder_layer_kernel(
    x_ref,          # (S, E)  f32   current batch element
    wqkv_ref,       # (E, 3E) bf16  (scale folded into Q columns)
    bqkv_ref,       # (1, 3E) f32
    wo_ref,         # (E, E)  bf16
    bo_ref,         # (1, E)  f32
    ln1g_ref,       # (1, E)  f32
    ln1b_ref,       # (1, E)  f32
    w1_ref,         # (E, F)  bf16
    b1_ref,         # (1, F)  f32
    w2_ref,         # (F, E)  bf16
    b2_ref,         # (1, E)  f32
    ln2g_ref,       # (1, E)  f32
    ln2b_ref,       # (1, E)  f32
    o_ref,          # (S, E)  f32
    *,
    nhead,
):
    S, E = x_ref.shape
    Dh = E // nhead

    x = x_ref[...]                                     # (S, E) f32
    xb = x.astype(jnp.bfloat16)

    # ---- fused QKV projection (one MXU matmul) ----
    qkv = (
        jnp.dot(xb, wqkv_ref[...], preferred_element_type=jnp.float32)
        + bqkv_ref[...]
    )                                                  # (S, 3E) f32

    # ---- multi-head self-attention; heads rebuilt lane-dense into (S, E) ----
    heads = []
    for h in range(nhead):
        q = qkv[:, h * Dh:(h + 1) * Dh].astype(jnp.bfloat16)          # (S, Dh)
        k = qkv[:, E + h * Dh:E + (h + 1) * Dh].astype(jnp.bfloat16)  # (S, Dh)
        v = qkv[:, 2 * E + h * Dh:2 * E + (h + 1) * Dh].astype(jnp.bfloat16)

        # scores: q @ k^T  (scale already folded into Q projection weights)
        s = lax.dot_general(
            q, k, (((1,), (1,)), ((), ())), preferred_element_type=jnp.float32
        )                                              # (S, S) f32
        s = s - jnp.max(s, axis=-1, keepdims=True)
        p = jnp.exp(s)
        p = p * pl.reciprocal(jnp.sum(p, axis=-1, keepdims=True), approx=True)
        heads.append(
            jnp.dot(p.astype(jnp.bfloat16), v, preferred_element_type=jnp.float32)
        )                                              # (S, Dh) f32
    ctx = jnp.concatenate(heads, axis=-1)              # (S, E) f32, lane-dense

    # ---- output projection ----
    attn = (
        jnp.dot(ctx.astype(jnp.bfloat16), wo_ref[...],
                preferred_element_type=jnp.float32)
        + bo_ref[...]
    )                                                  # (S, E) f32

    # ---- residual + LayerNorm 1 (f32 statistics, eps = 1e-5) ----
    h1 = x + attn
    mu1 = jnp.mean(h1, axis=-1, keepdims=True)
    c1 = h1 - mu1
    v1 = jnp.mean(c1 * c1, axis=-1, keepdims=True)
    x1 = c1 * lax.rsqrt(v1 + 1e-5) * ln1g_ref[...] + ln1b_ref[...]

    # ---- feed-forward: relu(x1 @ W1 + b1) @ W2 + b2 ----
    ff = (
        jnp.dot(x1.astype(jnp.bfloat16), w1_ref[...],
                preferred_element_type=jnp.float32)
        + b1_ref[...]
    )
    ff = jnp.maximum(ff, 0.0)
    ff = (
        jnp.dot(ff.astype(jnp.bfloat16), w2_ref[...],
                preferred_element_type=jnp.float32)
        + b2_ref[...]
    )

    # ---- residual + LayerNorm 2 ----
    h2 = x1 + ff
    mu2 = jnp.mean(h2, axis=-1, keepdims=True)
    c2 = h2 - mu2
    v2 = jnp.mean(c2 * c2, axis=-1, keepdims=True)
    o_ref[...] = c2 * lax.rsqrt(v2 + 1e-5) * ln2g_ref[...] + ln2b_ref[...]


# ------------------------- layer wrapper -------------------------

def encoder_layer(x_nse, p, nhead):
    """x_nse: (N, S, E) f32 -> (N, S, E) f32. One fused pallas_call."""
    N, S, E = x_nse.shape

    def whole(arr):
        nd = arr.ndim
        return pl.BlockSpec(arr.shape, lambda n, _nd=nd: (0,) * _nd)

    x_spec = pl.BlockSpec((None, S, E), lambda n: (n, 0, 0))

    return pl.pallas_call(
        functools.partial(_encoder_layer_kernel, nhead=nhead),
        grid=(N,),
        out_shape=jax.ShapeDtypeStruct((N, S, E), jnp.float32),
        in_specs=[
            x_spec,
            whole(p["in_proj_w_t"]), whole(p["in_proj_b"]),
            whole(p["out_proj_w_t"]), whole(p["out_proj_b"]),
            whole(p["ln1_g"]), whole(p["ln1_b"]),
            whole(p["ff_w1_t"]), whole(p["ff_b1"]),
            whole(p["ff_w2_t"]), whole(p["ff_b2"]),
            whole(p["ln2_g"]), whole(p["ln2_b"]),
        ],
        out_specs=x_spec,
        compiler_params=pltpu.CompilerParams(
            dimension_semantics=("parallel",),
        ),
    )(
        x_nse,
        p["in_proj_w_t"], p["in_proj_b"],
        p["out_proj_w_t"], p["out_proj_b"],
        p["ln1_g"], p["ln1_b"],
        p["ff_w1_t"], p["ff_b1"],
        p["ff_w2_t"], p["ff_b2"],
        p["ln2_g"], p["ln2_b"],
    )


# ------------------------- encoder model -------------------------

def transformer_encoder(src_sne, layer_params, nhead):
    """src_sne: (S, N, E) f32 (PyTorch batch_first=False layout)."""
    x = jnp.transpose(src_sne, (1, 0, 2))      # (N, S, E), once per forward
    for p in layer_params:
        x = encoder_layer(x, p, nhead)
    return jnp.transpose(x, (1, 0, 2))         # back to (S, N, E)


def init_params(key, d_model, nhead, num_layers, dim_feedforward):
    """Deterministic synthetic weights (same shapes as the PyTorch module).

    The 1/sqrt(head_dim) attention scale is folded into the Q slice of the
    in-projection weights/bias; matmul weights are stored bf16 (f32 accum in
    the kernel), biases / LayerNorm params stay f32.
    """
    scale = 1.0 / math.sqrt(d_model // nhead)
    layers = []
    for l in range(num_layers):
        kl = jax.random.fold_in(key, l)
        ks = jax.random.split(kl, 4)
        in_proj_w = 0.02 * jax.random.normal(ks[0], (3 * d_model, d_model), jnp.float32)
        in_proj_b = jnp.zeros((3 * d_model,), jnp.float32)
        in_proj_w = in_proj_w.at[:d_model].multiply(scale)   # fold scale into Q
        in_proj_b = in_proj_b.at[:d_model].multiply(scale)
        out_proj_w = 0.02 * jax.random.normal(ks[1], (d_model, d_model), jnp.float32)
        ff_w1 = 0.02 * jax.random.normal(ks[2], (dim_feedforward, d_model), jnp.float32)
        ff_w2 = 0.02 * jax.random.normal(ks[3], (d_model, dim_feedforward), jnp.float32)
        layers.append(
            dict(
                in_proj_w_t=in_proj_w.T.astype(jnp.bfloat16),      # (E, 3E)
                in_proj_b=in_proj_b.reshape(1, 3 * d_model),
                out_proj_w_t=out_proj_w.T.astype(jnp.bfloat16),    # (E, E)
                out_proj_b=jnp.zeros((1, d_model), jnp.float32),
                ln1_g=jnp.ones((1, d_model), jnp.float32),
                ln1_b=jnp.zeros((1, d_model), jnp.float32),
                ln2_g=jnp.ones((1, d_model), jnp.float32),
                ln2_b=jnp.zeros((1, d_model), jnp.float32),
                ff_w1_t=ff_w1.T.astype(jnp.bfloat16),              # (E, F)
                ff_b1=jnp.zeros((1, dim_feedforward), jnp.float32),
                ff_w2_t=ff_w2.T.astype(jnp.bfloat16),              # (F, E)
                ff_b2=jnp.zeros((1, d_model), jnp.float32),
            )
        )
    return layers


if __name__ == "__main__":
    # Small-but-consistent configuration (d_model divisible by nhead).
    d_model, nhead, num_layers, dim_feedforward = 128, 4, 2, 256
    seq_len, batch = 8, 2

    key = jax.random.PRNGKey(0)
    kx, kp = jax.random.split(key)
    src = jax.random.normal(kx, (seq_len, batch, d_model), jnp.float32)
    params = init_params(kp, d_model, nhead, num_layers, dim_feedforward)

    fwd = jax.jit(functools.partial(transformer_encoder, nhead=nhead))
    out = fwd(src, params)
    out = jax.block_until_ready(out)

    assert out.shape == (seq_len, batch, d_model)
    assert bool(jnp.all(jnp.isfinite(out)))
    # TODO(synk): dropout is identity (inference semantics); training-mode
    # dropout would need pltpu.prng_seed/prng_random_bits inside the kernel.
    print("KERNEL_OK")
</pallas_src>

<mosaic_0001>
module attributes {stable_mosaic.version = 11 : i64} {
  func.func @_encoder_layer_kernel(%arg0: i32, %arg1: memref<1x8x128xf32, #tpu.memory_space<vmem>>, %arg2: memref<128x384xbf16, #tpu.memory_space<vmem>>, %arg3: memref<1x384xf32, #tpu.memory_space<vmem>>, %arg4: memref<128x128xbf16, #tpu.memory_space<vmem>>, %arg5: memref<1x128xf32, #tpu.memory_space<vmem>>, %arg6: memref<1x128xf32, #tpu.memory_space<vmem>>, %arg7: memref<1x128xf32, #tpu.memory_space<vmem>>, %arg8: memref<128x256xbf16, #tpu.memory_space<vmem>>, %arg9: memref<1x256xf32, #tpu.memory_space<vmem>>, %arg10: memref<256x128xbf16, #tpu.memory_space<vmem>>, %arg11: memref<1x128xf32, #tpu.memory_space<vmem>>, %arg12: memref<1x128xf32, #tpu.memory_space<vmem>>, %arg13: memref<1x128xf32, #tpu.memory_space<vmem>>, %arg14: memref<1x8x128xf32, #tpu.memory_space<vmem>>) attributes {dimension_semantics = [#tpu.dimension_semantics<parallel>], iteration_bounds = array<i64: 2>, scalar_prefetch = 0 : i64, scratch_operands = 0 : i64, tpu.core_type = #tpu.core_type<tc>, window_params = [{transform_indices = @transform_0, window_bounds = array<i64: 1, 8, 128>}, {pipeline_mode = #tpu.pipeline_mode<synchronous>, transform_indices = @transform_1, window_bounds = array<i64: 128, 384>}, {pipeline_mode = #tpu.pipeline_mode<synchronous>, transform_indices = @transform_2, window_bounds = array<i64: 1, 384>}, {pipeline_mode = #tpu.pipeline_mode<synchronous>, transform_indices = @transform_3, window_bounds = array<i64: 128, 128>}, {pipeline_mode = #tpu.pipeline_mode<synchronous>, transform_indices = @transform_4, window_bounds = array<i64: 1, 128>}, {pipeline_mode = #tpu.pipeline_mode<synchronous>, transform_indices = @transform_5, window_bounds = array<i64: 1, 128>}, {pipeline_mode = #tpu.pipeline_mode<synchronous>, transform_indices = @transform_6, window_bounds = array<i64: 1, 128>}, {pipeline_mode = #tpu.pipeline_mode<synchronous>, transform_indices = @transform_7, window_bounds = array<i64: 128, 256>}, {pipeline_mode = #tpu.pipeline_mode<synchronous>, transform_indices = @transform_8, window_bounds = array<i64: 1, 256>}, {pipeline_mode = #tpu.pipeline_mode<synchronous>, transform_indices = @transform_9, window_bounds = array<i64: 256, 128>}, {pipeline_mode = #tpu.pipeline_mode<synchronous>, transform_indices = @transform_10, window_bounds = array<i64: 1, 128>}, {pipeline_mode = #tpu.pipeline_mode<synchronous>, transform_indices = @transform_11, window_bounds = array<i64: 1, 128>}, {pipeline_mode = #tpu.pipeline_mode<synchronous>, transform_indices = @transform_12, window_bounds = array<i64: 1, 128>}, {transform_indices = @transform_13, window_bounds = array<i64: 1, 8, 128>}]} {
    %c0 = arith.constant 0 : index
    %c0_0 = arith.constant 0 : index
    %c0_1 = arith.constant 0 : index
    %0 = vector.load %arg1[%c0, %c0_0, %c0_1] : memref<1x8x128xf32, #tpu.memory_space<vmem>>, vector<1x8x128xf32>
    %1 = vector.shape_cast %0 : vector<1x8x128xf32> to vector<8x128xf32>
    %2 = arith.truncf %1 : vector<8x128xf32> to vector<8x128xbf16>
    %c0_2 = arith.constant 0 : index
    %c0_3 = arith.constant 0 : index
    %3 = vector.load %arg2[%c0_2, %c0_3] : memref<128x384xbf16, #tpu.memory_space<vmem>>, vector<128x384xbf16>
    %cst = arith.constant dense<0.000000e+00> : vector<8x384xf32>
    %4 = tpu.matmul %2, %3, %cst {dimension_numbers = #tpu.dot_dimension_numbers<[1], [0], [0], [1], [0, 0, 1, 1], [], []>} : vector<8x128xbf16>, vector<128x384xbf16>, vector<8x384xf32> -> vector<8x384xf32>
    %c0_4 = arith.constant 0 : index
    %c0_5 = arith.constant 0 : index
    %5 = vector.load %arg3[%c0_4, %c0_5] : memref<1x384xf32, #tpu.memory_space<vmem>>, vector<1x384xf32>
    %6 = vector.broadcast %5 : vector<1x384xf32> to vector<8x384xf32>
    %7 = arith.addf %4, %6 : vector<8x384xf32>
    %8 = vector.extract_strided_slice %7 {offsets = [0, 0], sizes = [8, 32], strides = [1, 1]} : vector<8x384xf32> to vector<8x32xf32>
    %9 = arith.truncf %8 : vector<8x32xf32> to vector<8x32xbf16>
    %10 = vector.extract_strided_slice %7 {offsets = [0, 128], sizes = [8, 32], strides = [1, 1]} : vector<8x384xf32> to vector<8x32xf32>
    %11 = arith.truncf %10 : vector<8x32xf32> to vector<8x32xbf16>
    %12 = vector.extract_strided_slice %7 {offsets = [0, 256], sizes = [8, 32], strides = [1, 1]} : vector<8x384xf32> to vector<8x32xf32>
    %13 = arith.truncf %12 : vector<8x32xf32> to vector<8x32xbf16>
    %cst_6 = arith.constant dense<0.000000e+00> : vector<8x8xf32>
    %14 = tpu.matmul %9, %11, %cst_6 {dimension_numbers = #tpu.dot_dimension_numbers<[1], [1], [0], [0], [0, 0, 1, 0], [], []>} : vector<8x32xbf16>, vector<8x32xbf16>, vector<8x8xf32> -> vector<8x8xf32>
    %cst_7 = arith.constant dense<0xFF800000> : vector<8xf32>
    %15 = vector.multi_reduction <maximumf>, %14, %cst_7 [1] : vector<8x8xf32> to vector<8xf32>
    %16 = vector.shape_cast %15 : vector<8xf32> to vector<8x1xf32>
    %17 = vector.broadcast %16 : vector<8x1xf32> to vector<8x8xf32>
    %18 = arith.subf %14, %17 : vector<8x8xf32>
    %19 = math.exp %18 : vector<8x8xf32>
    %cst_8 = arith.constant dense<0.000000e+00> : vector<8xf32>
    %20 = vector.multi_reduction <add>, %19, %cst_8 [1] : vector<8x8xf32> to vector<8xf32>
    %21 = vector.shape_cast %20 : vector<8xf32> to vector<8x1xf32>
    %22 = tpu.reciprocal %21 {approx = true} : vector<8x1xf32> -> vector<8x1xf32>
    %23 = vector.broadcast %22 : vector<8x1xf32> to vector<8x8xf32>
    %24 = arith.mulf %19, %23 : vector<8x8xf32>
    %25 = arith.truncf %24 : vector<8x8xf32> to vector<8x8xbf16>
    %cst_9 = arith.constant dense<0.000000e+00> : vector<8x32xf32>
    %26 = tpu.matmul %25, %13, %cst_9 {dimension_numbers = #tpu.dot_dimension_numbers<[1], [0], [0], [1], [0, 0, 1, 1], [], []>} : vector<8x8xbf16>, vector<8x32xbf16>, vector<8x32xf32> -> vector<8x32xf32>
    %27 = vector.extract_strided_slice %7 {offsets = [0, 32], sizes = [8, 32], strides = [1, 1]} : vector<8x384xf32> to vector<8x32xf32>
    %28 = arith.truncf %27 : vector<8x32xf32> to vector<8x32xbf16>
    %29 = vector.extract_strided_slice %7 {offsets = [0, 160], sizes = [8, 32], strides = [1, 1]} : vector<8x384xf32> to vector<8x32xf32>
    %30 = arith.truncf %29 : vector<8x32xf32> to vector<8x32xbf16>
    %31 = vector.extract_strided_slice %7 {offsets = [0, 288], sizes = [8, 32], strides = [1, 1]} : vector<8x384xf32> to vector<8x32xf32>
    %32 = arith.truncf %31 : vector<8x32xf32> to vector<8x32xbf16>
    %cst_10 = arith.constant dense<0.000000e+00> : vector<8x8xf32>
    %33 = tpu.matmul %28, %30, %cst_10 {dimension_numbers = #tpu.dot_dimension_numbers<[1], [1], [0], [0], [0, 0, 1, 0], [], []>} : vector<8x32xbf16>, vector<8x32xbf16>, vector<8x8xf32> -> vector<8x8xf32>
    %cst_11 = arith.constant dense<0xFF800000> : vector<8xf32>
    %34 = vector.multi_reduction <maximumf>, %33, %cst_11 [1] : vector<8x8xf32> to vector<8xf32>
    %35 = vector.shape_cast %34 : vector<8xf32> to vector<8x1xf32>
    %36 = vector.broadcast %35 : vector<8x1xf32> to vector<8x8xf32>
    %37 = arith.subf %33, %36 : vector<8x8xf32>
    %38 = math.exp %37 : vector<8x8xf32>
    %cst_12 = arith.constant dense<0.000000e+00> : vector<8xf32>
    %39 = vector.multi_reduction <add>, %38, %cst_12 [1] : vector<8x8xf32> to vector<8xf32>
    %40 = vector.shape_cast %39 : vector<8xf32> to vector<8x1xf32>
    %41 = tpu.reciprocal %40 {approx = true} : vector<8x1xf32> -> vector<8x1xf32>
    %42 = vector.broadcast %41 : vector<8x1xf32> to vector<8x8xf32>
    %43 = arith.mulf %38, %42 : vector<8x8xf32>
    %44 = arith.truncf %43 : vector<8x8xf32> to vector<8x8xbf16>
    %cst_13 = arith.constant dense<0.000000e+00> : vector<8x32xf32>
    %45 = tpu.matmul %44, %32, %cst_13 {dimension_numbers = #tpu.dot_dimension_numbers<[1], [0], [0], [1], [0, 0, 1, 1], [], []>} : vector<8x8xbf16>, vector<8x32xbf16>, vector<8x32xf32> -> vector<8x32xf32>
    %46 = vector.extract_strided_slice %7 {offsets = [0, 64], sizes = [8, 32], strides = [1, 1]} : vector<8x384xf32> to vector<8x32xf32>
    %47 = arith.truncf %46 : vector<8x32xf32> to vector<8x32xbf16>
    %48 = vector.extract_strided_slice %7 {offsets = [0, 192], sizes = [8, 32], strides = [1, 1]} : vector<8x384xf32> to vector<8x32xf32>
    %49 = arith.truncf %48 : vector<8x32xf32> to vector<8x32xbf16>
    %50 = vector.extract_strided_slice %7 {offsets = [0, 320], sizes = [8, 32], strides = [1, 1]} : vector<8x384xf32> to vector<8x32xf32>
    %51 = arith.truncf %50 : vector<8x32xf32> to vector<8x32xbf16>
    %cst_14 = arith.constant dense<0.000000e+00> : vector<8x8xf32>
    %52 = tpu.matmul %47, %49, %cst_14 {dimension_numbers = #tpu.dot_dimension_numbers<[1], [1], [0], [0], [0, 0, 1, 0], [], []>} : vector<8x32xbf16>, vector<8x32xbf16>, vector<8x8xf32> -> vector<8x8xf32>
    %cst_15 = arith.constant dense<0xFF800000> : vector<8xf32>
    %53 = vector.multi_reduction <maximumf>, %52, %cst_15 [1] : vector<8x8xf32> to vector<8xf32>
    %54 = vector.shape_cast %53 : vector<8xf32> to vector<8x1xf32>
    %55 = vector.broadcast %54 : vector<8x1xf32> to vector<8x8xf32>
    %56 = arith.subf %52, %55 : vector<8x8xf32>
    %57 = math.exp %56 : vector<8x8xf32>
    %cst_16 = arith.constant dense<0.000000e+00> : vector<8xf32>
    %58 = vector.multi_reduction <add>, %57, %cst_16 [1] : vector<8x8xf32> to vector<8xf32>
    %59 = vector.shape_cast %58 : vector<8xf32> to vector<8x1xf32>
    %60 = tpu.reciprocal %59 {approx = true} : vector<8x1xf32> -> vector<8x1xf32>
    %61 = vector.broadcast %60 : vector<8x1xf32> to vector<8x8xf32>
    %62 = arith.mulf %57, %61 : vector<8x8xf32>
    %63 = arith.truncf %62 : vector<8x8xf32> to vector<8x8xbf16>
    %cst_17 = arith.constant dense<0.000000e+00> : vector<8x32xf32>
    %64 = tpu.matmul %63, %51, %cst_17 {dimension_numbers = #tpu.dot_dimension_numbers<[1], [0], [0], [1], [0, 0, 1, 1], [], []>} : vector<8x8xbf16>, vector<8x32xbf16>, vector<8x32xf32> -> vector<8x32xf32>
    %65 = vector.extract_strided_slice %7 {offsets = [0, 96], sizes = [8, 32], strides = [1, 1]} : vector<8x384xf32> to vector<8x32xf32>
    %66 = arith.truncf %65 : vector<8x32xf32> to vector<8x32xbf16>
    %67 = vector.extract_strided_slice %7 {offsets = [0, 224], sizes = [8, 32], strides = [1, 1]} : vector<8x384xf32> to vector<8x32xf32>
    %68 = arith.truncf %67 : vector<8x32xf32> to vector<8x32xbf16>
    %69 = vector.extract_strided_slice %7 {offsets = [0, 352], sizes = [8, 32], strides = [1, 1]} : vector<8x384xf32> to vector<8x32xf32>
    %70 = arith.truncf %69 : vector<8x32xf32> to vector<8x32xbf16>
    %cst_18 = arith.constant dense<0.000000e+00> : vector<8x8xf32>
    %71 = tpu.matmul %66, %68, %cst_18 {dimension_numbers = #tpu.dot_dimension_numbers<[1], [1], [0], [0], [0, 0, 1, 0], [], []>} : vector<8x32xbf16>, vector<8x32xbf16>, vector<8x8xf32> -> vector<8x8xf32>
    %cst_19 = arith.constant dense<0xFF800000> : vector<8xf32>
    %72 = vector.multi_reduction <maximumf>, %71, %cst_19 [1] : vector<8x8xf32> to vector<8xf32>
    %73 = vector.shape_cast %72 : vector<8xf32> to vector<8x1xf32>
    %74 = vector.broadcast %73 : vector<8x1xf32> to vector<8x8xf32>
    %75 = arith.subf %71, %74 : vector<8x8xf32>
    %76 = math.exp %75 : vector<8x8xf32>
    %cst_20 = arith.constant dense<0.000000e+00> : vector<8xf32>
    %77 = vector.multi_reduction <add>, %76, %cst_20 [1] : vector<8x8xf32> to vector<8xf32>
    %78 = vector.shape_cast %77 : vector<8xf32> to vector<8x1xf32>
    %79 = tpu.reciprocal %78 {approx = true} : vector<8x1xf32> -> vector<8x1xf32>
    %80 = vector.broadcast %79 : vector<8x1xf32> to vector<8x8xf32>
    %81 = arith.mulf %76, %80 : vector<8x8xf32>
    %82 = arith.truncf %81 : vector<8x8xf32> to vector<8x8xbf16>
    %cst_21 = arith.constant dense<0.000000e+00> : vector<8x32xf32>
    %83 = tpu.matmul %82, %70, %cst_21 {dimension_numbers = #tpu.dot_dimension_numbers<[1], [0], [0], [1], [0, 0, 1, 1], [], []>} : vector<8x8xbf16>, vector<8x32xbf16>, vector<8x32xf32> -> vector<8x32xf32>
    %84 = tpu.concatenate %26, %45, %64, %83 in 1 : vector<8x32xf32>, vector<8x32xf32>, vector<8x32xf32>, vector<8x32xf32> -> vector<8x128xf32>
    %85 = arith.truncf %84 : vector<8x128xf32> to vector<8x128xbf16>
    %c0_22 = arith.constant 0 : index
    %c0_23 = arith.constant 0 : index
    %86 = vector.load %arg4[%c0_22, %c0_23] : memref<128x128xbf16, #tpu.memory_space<vmem>>, vector<128x128xbf16>
    %cst_24 = arith.constant dense<0.000000e+00> : vector<8x128xf32>
    %87 = tpu.matmul %85, %86, %cst_24 {dimension_numbers = #tpu.dot_dimension_numbers<[1], [0], [0], [1], [0, 0, 1, 1], [], []>} : vector<8x128xbf16>, vector<128x128xbf16>, vector<8x128xf32> -> vector<8x128xf32>
    %c0_25 = arith.constant 0 : index
    %c0_26 = arith.constant 0 : index
    %88 = vector.load %arg5[%c0_25, %c0_26] : memref<1x128xf32, #tpu.memory_space<vmem>>, vector<1x128xf32>
    %89 = vector.broadcast %88 : vector<1x128xf32> to vector<8x128xf32>
    %90 = arith.addf %87, %89 : vector<8x128xf32>
    %91 = arith.addf %1, %90 : vector<8x128xf32>
    %cst_27 = arith.constant dense<0.000000e+00> : vector<8xf32>
    %92 = vector.multi_reduction <add>, %91, %cst_27 [1] : vector<8x128xf32> to vector<8xf32>
    %93 = vector.shape_cast %92 : vector<8xf32> to vector<8x1xf32>
    %cst_28 = arith.constant 1.280000e+02 : f32
    %94 = vector.broadcast %cst_28 : f32 to vector<8x1xf32>
    %95 = arith.divf %93, %94 : vector<8x1xf32>
    %96 = vector.broadcast %95 : vector<8x1xf32> to vector<8x128xf32>
    %97 = arith.subf %91, %96 : vector<8x128xf32>
    %98 = arith.mulf %97, %97 : vector<8x128xf32>
    %cst_29 = arith.constant dense<0.000000e+00> : vector<8xf32>
    %99 = vector.multi_reduction <add>, %98, %cst_29 [1] : vector<8x128xf32> to vector<8xf32>
    %100 = vector.shape_cast %99 : vector<8xf32> to vector<8x1xf32>
    %cst_30 = arith.constant 1.280000e+02 : f32
    %101 = vector.broadcast %cst_30 : f32 to vector<8x1xf32>
    %102 = arith.divf %100, %101 : vector<8x1xf32>
    %cst_31 = arith.constant 9.99999974E-6 : f32
    %103 = vector.broadcast %cst_31 : f32 to vector<8x1xf32>
    %104 = arith.addf %102, %103 : vector<8x1xf32>
    %105 = math.rsqrt %104 : vector<8x1xf32>
    %106 = vector.broadcast %105 : vector<8x1xf32> to vector<8x128xf32>
    %107 = arith.mulf %97, %106 : vector<8x128xf32>
    %c0_32 = arith.constant 0 : index
    %c0_33 = arith.constant 0 : index
    %108 = vector.load %arg6[%c0_32, %c0_33] : memref<1x128xf32, #tpu.memory_space<vmem>>, vector<1x128xf32>
    %109 = vector.broadcast %108 : vector<1x128xf32> to vector<8x128xf32>
    %110 = arith.mulf %107, %109 : vector<8x128xf32>
    %c0_34 = arith.constant 0 : index
    %c0_35 = arith.constant 0 : index
    %111 = vector.load %arg7[%c0_34, %c0_35] : memref<1x128xf32, #tpu.memory_space<vmem>>, vector<1x128xf32>
    %112 = vector.broadcast %111 : vector<1x128xf32> to vector<8x128xf32>
    %113 = arith.addf %110, %112 : vector<8x128xf32>
    %114 = arith.truncf %113 : vector<8x128xf32> to vector<8x128xbf16>
    %c0_36 = arith.constant 0 : index
    %c0_37 = arith.constant 0 : index
    %115 = vector.load %arg8[%c0_36, %c0_37] : memref<128x256xbf16, #tpu.memory_space<vmem>>, vector<128x256xbf16>
    %cst_38 = arith.constant dense<0.000000e+00> : vector<8x256xf32>
    %116 = tpu.matmul %114, %115, %cst_38 {dimension_numbers = #tpu.dot_dimension_numbers<[1], [0], [0], [1], [0, 0, 1, 1], [], []>} : vector<8x128xbf16>, vector<128x256xbf16>, vector<8x256xf32> -> vector<8x256xf32>
    %c0_39 = arith.constant 0 : index
    %c0_40 = arith.constant 0 : index
    %117 = vector.load %arg9[%c0_39, %c0_40] : memref<1x256xf32, #tpu.memory_space<vmem>>, vector<1x256xf32>
    %118 = vector.broadcast %117 : vector<1x256xf32> to vector<8x256xf32>
    %119 = arith.addf %116, %118 : vector<8x256xf32>
    %cst_41 = arith.constant 0.000000e+00 : f32
    %120 = vector.broadcast %cst_41 : f32 to vector<8x256xf32>
    %121 = arith.maximumf %119, %120 : vector<8x256xf32>
    %122 = arith.truncf %121 : vector<8x256xf32> to vector<8x256xbf16>
    %c0_42 = arith.constant 0 : index
    %c0_43 = arith.constant 0 : index
    %123 = vector.load %arg10[%c0_42, %c0_43] : memref<256x128xbf16, #tpu.memory_space<vmem>>, vector<256x128xbf16>
    %cst_44 = arith.constant dense<0.000000e+00> : vector<8x128xf32>
    %124 = tpu.matmul %122, %123, %cst_44 {dimension_numbers = #tpu.dot_dimension_numbers<[1], [0], [0], [1], [0, 0, 1, 1], [], []>} : vector<8x256xbf16>, vector<256x128xbf16>, vector<8x128xf32> -> vector<8x128xf32>
    %c0_45 = arith.constant 0 : index
    %c0_46 = arith.constant 0 : index
    %125 = vector.load %arg11[%c0_45, %c0_46] : memref<1x128xf32, #tpu.memory_space<vmem>>, vector<1x128xf32>
    %126 = vector.broadcast %125 : vector<1x128xf32> to vector<8x128xf32>
    %127 = arith.addf %124, %126 : vector<8x128xf32>
    %128 = arith.addf %113, %127 : vector<8x128xf32>
    %cst_47 = arith.constant dense<0.000000e+00> : vector<8xf32>
    %129 = vector.multi_reduction <add>, %128, %cst_47 [1] : vector<8x128xf32> to vector<8xf32>
    %130 = vector.shape_cast %129 : vector<8xf32> to vector<8x1xf32>
    %cst_48 = arith.constant 1.280000e+02 : f32
    %131 = vector.broadcast %cst_48 : f32 to vector<8x1xf32>
    %132 = arith.divf %130, %131 : vector<8x1xf32>
    %133 = vector.broadcast %132 : vector<8x1xf32> to vector<8x128xf32>
    %134 = arith.subf %128, %133 : vector<8x128xf32>
    %135 = arith.mulf %134, %134 : vector<8x128xf32>
    %cst_49 = arith.constant dense<0.000000e+00> : vector<8xf32>
    %136 = vector.multi_reduction <add>, %135, %cst_49 [1] : vector<8x128xf32> to vector<8xf32>
    %137 = vector.shape_cast %136 : vector<8xf32> to vector<8x1xf32>
    %cst_50 = arith.constant 1.280000e+02 : f32
    %138 = vector.broadcast %cst_50 : f32 to vector<8x1xf32>
    %139 = arith.divf %137, %138 : vector<8x1xf32>
    %cst_51 = arith.constant 9.99999974E-6 : f32
    %140 = vector.broadcast %cst_51 : f32 to vector<8x1xf32>
    %141 = arith.addf %139, %140 : vector<8x1xf32>
    %142 = math.rsqrt %141 : vector<8x1xf32>
    %143 = vector.broadcast %142 : vector<8x1xf32> to vector<8x128xf32>
    %144 = arith.mulf %134, %143 : vector<8x128xf32>
    %c0_52 = arith.constant 0 : index
    %c0_53 = arith.constant 0 : index
    %145 = vector.load %arg12[%c0_52, %c0_53] : memref<1x128xf32, #tpu.memory_space<vmem>>, vector<1x128xf32>
    %146 = vector.broadcast %145 : vector<1x128xf32> to vector<8x128xf32>
    %147 = arith.mulf %144, %146 : vector<8x128xf32>
    %c0_54 = arith.constant 0 : index
    %c0_55 = arith.constant 0 : index
    %148 = vector.load %arg13[%c0_54, %c0_55] : memref<1x128xf32, #tpu.memory_space<vmem>>, vector<1x128xf32>
    %149 = vector.broadcast %148 : vector<1x128xf32> to vector<8x128xf32>
    %150 = arith.addf %147, %149 : vector<8x128xf32>
    %c0_56 = arith.constant 0 : index
    %c0_57 = arith.constant 0 : index
    %c0_58 = arith.constant 0 : index
    %151 = vector.load %arg14[%c0_56, %c0_57, %c0_58] : memref<1x8x128xf32, #tpu.memory_space<vmem>>, vector<1x8x128xf32>
    %152 = vector.shape_cast %151 : vector<1x8x128xf32> to vector<8x128xf32>
    %153 = vector.shape_cast %150 : vector<8x128xf32> to vector<1x8x128xf32>
    tpu.vector_store %arg14[%c0_56, %c0_57, %c0_58], %153 {strides = array<i32>} : memref<1x8x128xf32, #tpu.memory_space<vmem>>, vector<1x8x128xf32>,
    return
  }
  func.func @transform_0(%arg0: i32) -> (i32, i32, i32) {
    %c0_i32 = arith.constant 0 : i32
    %c0_i32_0 = arith.constant 0 : i32
    %c0_i32_1 = arith.constant 0 : i32
    return %arg0, %c0_i32, %c0_i32_0 : i32, i32, i32
  }
  func.func @transform_1(%arg0: i32) -> (i32, i32) {
    %c0_i32 = arith.constant 0 : i32
    %c0_i32_0 = arith.constant 0 : i32
    %c0_i32_1 = arith.constant 0 : i32
    return %c0_i32, %c0_i32_0 : i32, i32
  }
  func.func @transform_2(%arg0: i32) -> (i32, i32) {
    %c0_i32 = arith.constant 0 : i32
    %c0_i32_0 = arith.constant 0 : i32
    %c0_i32_1 = arith.constant 0 : i32
    return %c0_i32, %c0_i32_0 : i32, i32
  }
  func.func @transform_3(%arg0: i32) -> (i32, i32) {
    %c0_i32 = arith.constant 0 : i32
    %c0_i32_0 = arith.constant 0 : i32
    %c0_i32_1 = arith.constant 0 : i32
    return %c0_i32, %c0_i32_0 : i32, i32
  }
  func.func @transform_4(%arg0: i32) -> (i32, i32) {
    %c0_i32 = arith.constant 0 : i32
    %c0_i32_0 = arith.constant 0 : i32
    %c0_i32_1 = arith.constant 0 : i32
    return %c0_i32, %c0_i32_0 : i32, i32
  }
  func.func @transform_5(%arg0: i32) -> (i32, i32) {
    %c0_i32 = arith.constant 0 : i32
    %c0_i32_0 = arith.constant 0 : i32
    %c0_i32_1 = arith.constant 0 : i32
    return %c0_i32, %c0_i32_0 : i32, i32
  }
  func.func @transform_6(%arg0: i32) -> (i32, i32) {
    %c0_i32 = arith.constant 0 : i32
    %c0_i32_0 = arith.constant 0 : i32
    %c0_i32_1 = arith.constant 0 : i32
    return %c0_i32, %c0_i32_0 : i32, i32
  }
  func.func @transform_7(%arg0: i32) -> (i32, i32) {
    %c0_i32 = arith.constant 0 : i32
    %c0_i32_0 = arith.constant 0 : i32
    %c0_i32_1 = arith.constant 0 : i32
    return %c0_i32, %c0_i32_0 : i32, i32
  }
  func.func @transform_8(%arg0: i32) -> (i32, i32) {
    %c0_i32 = arith.constant 0 : i32
    %c0_i32_0 = arith.constant 0 : i32
    %c0_i32_1 = arith.constant 0 : i32
    return %c0_i32, %c0_i32_0 : i32, i32
  }
  func.func @transform_9(%arg0: i32) -> (i32, i32) {
    %c0_i32 = arith.constant 0 : i32
    %c0_i32_0 = arith.constant 0 : i32
    %c0_i32_1 = arith.constant 0 : i32
    return %c0_i32, %c0_i32_0 : i32, i32
  }
  func.func @transform_10(%arg0: i32) -> (i32, i32) {
    %c0_i32 = arith.constant 0 : i32
    %c0_i32_0 = arith.constant 0 : i32
    %c0_i32_1 = arith.constant 0 : i32
    return %c0_i32, %c0_i32_0 : i32, i32
  }
  func.func @transform_11(%arg0: i32) -> (i32, i32) {
    %c0_i32 = arith.constant 0 : i32
    %c0_i32_0 = arith.constant 0 : i32
    %c0_i32_1 = arith.constant 0 : i32
    return %c0_i32, %c0_i32_0 : i32, i32
  }
  func.func @transform_12(%arg0: i32) -> (i32, i32) {
    %c0_i32 = arith.constant 0 : i32
    %c0_i32_0 = arith.constant 0 : i32
    %c0_i32_1 = arith.constant 0 : i32
    return %c0_i32, %c0_i32_0 : i32, i32
  }
  func.func @transform_13(%arg0: i32) -> (i32, i32, i32) {
    %c0_i32 = arith.constant 0 : i32
    %c0_i32_0 = arith.constant 0 : i32
    %c0_i32_1 = arith.constant 0 : i32
    return %arg0, %c0_i32, %c0_i32_0 : i32, i32, i32
  }
}

module attributes {stable_mosaic.version = 11 : i64} {
  func.func @_encoder_layer_kernel(%arg0: i32, %arg1: memref<1x8x128xf32, #tpu.memory_space<vmem>>, %arg2: memref<128x384xbf16, #tpu.memory_space<vmem>>, %arg3: memref<1x384xf32, #tpu.memory_space<vmem>>, %arg4: memref<128x128xbf16, #tpu.memory_space<vmem>>, %arg5: memref<1x128xf32, #tpu.memory_space<vmem>>, %arg6: memref<1x128xf32, #tpu.memory_space<vmem>>, %arg7: memref<1x128xf32, #tpu.memory_space<vmem>>, %arg8: memref<128x256xbf16, #tpu.memory_space<vmem>>, %arg9: memref<1x256xf32, #tpu.memory_space<vmem>>, %arg10: memref<256x128xbf16, #tpu.memory_space<vmem>>, %arg11: memref<1x128xf32, #tpu.memory_space<vmem>>, %arg12: memref<1x128xf32, #tpu.memory_space<vmem>>, %arg13: memref<1x128xf32, #tpu.memory_space<vmem>>, %arg14: memref<1x8x128xf32, #tpu.memory_space<vmem>>) attributes {dimension_semantics = [#tpu.dimension_semantics<parallel>], iteration_bounds = array<i64: 2>, scalar_prefetch = 0 : i64, scratch_operands = 0 : i64, tpu.core_type = #tpu.core_type<tc>, window_params = [{transform_indices = @transform_0, window_bounds = array<i64: 1, 8, 128>}, {pipeline_mode = #tpu.pipeline_mode<synchronous>, transform_indices = @transform_1, window_bounds = array<i64: 128, 384>}, {pipeline_mode = #tpu.pipeline_mode<synchronous>, transform_indices = @transform_2, window_bounds = array<i64: 1, 384>}, {pipeline_mode = #tpu.pipeline_mode<synchronous>, transform_indices = @transform_3, window_bounds = array<i64: 128, 128>}, {pipeline_mode = #tpu.pipeline_mode<synchronous>, transform_indices = @transform_4, window_bounds = array<i64: 1, 128>}, {pipeline_mode = #tpu.pipeline_mode<synchronous>, transform_indices = @transform_5, window_bounds = array<i64: 1, 128>}, {pipeline_mode = #tpu.pipeline_mode<synchronous>, transform_indices = @transform_6, window_bounds = array<i64: 1, 128>}, {pipeline_mode = #tpu.pipeline_mode<synchronous>, transform_indices = @transform_7, window_bounds = array<i64: 128, 256>}, {pipeline_mode = #tpu.pipeline_mode<synchronous>, transform_indices = @transform_8, window_bounds = array<i64: 1, 256>}, {pipeline_mode = #tpu.pipeline_mode<synchronous>, transform_indices = @transform_9, window_bounds = array<i64: 256, 128>}, {pipeline_mode = #tpu.pipeline_mode<synchronous>, transform_indices = @transform_10, window_bounds = array<i64: 1, 128>}, {pipeline_mode = #tpu.pipeline_mode<synchronous>, transform_indices = @transform_11, window_bounds = array<i64: 1, 128>}, {pipeline_mode = #tpu.pipeline_mode<synchronous>, transform_indices = @transform_12, window_bounds = array<i64: 1, 128>}, {transform_indices = @transform_13, window_bounds = array<i64: 1, 8, 128>}]} {
    %c0 = arith.constant 0 : index
    %c0_0 = arith.constant 0 : index
    %c0_1 = arith.constant 0 : index
    %0 = vector.load %arg1[%c0, %c0_0, %c0_1] : memref<1x8x128xf32, #tpu.memory_space<vmem>>, vector<1x8x128xf32>
    %1 = vector.shape_cast %0 : vector<1x8x128xf32> to vector<8x128xf32>
    %2 = arith.truncf %1 : vector<8x128xf32> to vector<8x128xbf16>
    %c0_2 = arith.constant 0 : index
    %c0_3 = arith.constant 0 : index
    %3 = vector.load %arg2[%c0_2, %c0_3] : memref<128x384xbf16, #tpu.memory_space<vmem>>, vector<128x384xbf16>
    %cst = arith.constant dense<0.000000e+00> : vector<8x384xf32>
    %4 = tpu.matmul %2, %3, %cst {dimension_numbers = #tpu.dot_dimension_numbers<[1], [0], [0], [1], [0, 0, 1, 1], [], []>} : vector<8x128xbf16>, vector<128x384xbf16>, vector<8x384xf32> -> vector<8x384xf32>
    %c0_4 = arith.constant 0 : index
    %c0_5 = arith.constant 0 : index
    %5 = vector.load %arg3[%c0_4, %c0_5] : memref<1x384xf32, #tpu.memory_space<vmem>>, vector<1x384xf32>
    %6 = vector.broadcast %5 : vector<1x384xf32> to vector<8x384xf32>
    %7 = arith.addf %4, %6 : vector<8x384xf32>
    %8 = vector.extract_strided_slice %7 {offsets = [0, 0], sizes = [8, 32], strides = [1, 1]} : vector<8x384xf32> to vector<8x32xf32>
    %9 = arith.truncf %8 : vector<8x32xf32> to vector<8x32xbf16>
    %10 = vector.extract_strided_slice %7 {offsets = [0, 128], sizes = [8, 32], strides = [1, 1]} : vector<8x384xf32> to vector<8x32xf32>
    %11 = arith.truncf %10 : vector<8x32xf32> to vector<8x32xbf16>
    %12 = vector.extract_strided_slice %7 {offsets = [0, 256], sizes = [8, 32], strides = [1, 1]} : vector<8x384xf32> to vector<8x32xf32>
    %13 = arith.truncf %12 : vector<8x32xf32> to vector<8x32xbf16>
    %cst_6 = arith.constant dense<0.000000e+00> : vector<8x8xf32>
    %14 = tpu.matmul %9, %11, %cst_6 {dimension_numbers = #tpu.dot_dimension_numbers<[1], [1], [0], [0], [0, 0, 1, 0], [], []>} : vector<8x32xbf16>, vector<8x32xbf16>, vector<8x8xf32> -> vector<8x8xf32>
    %cst_7 = arith.constant dense<0xFF800000> : vector<8xf32>
    %15 = vector.multi_reduction <maximumf>, %14, %cst_7 [1] : vector<8x8xf32> to vector<8xf32>
    %16 = vector.shape_cast %15 : vector<8xf32> to vector<8x1xf32>
    %17 = vector.broadcast %16 : vector<8x1xf32> to vector<8x8xf32>
    %18 = arith.subf %14, %17 : vector<8x8xf32>
    %19 = math.exp %18 : vector<8x8xf32>
    %cst_8 = arith.constant dense<0.000000e+00> : vector<8xf32>
    %20 = vector.multi_reduction <add>, %19, %cst_8 [1] : vector<8x8xf32> to vector<8xf32>
    %21 = vector.shape_cast %20 : vector<8xf32> to vector<8x1xf32>
    %22 = tpu.reciprocal %21 {approx = true} : vector<8x1xf32> -> vector<8x1xf32>
    %23 = vector.broadcast %22 : vector<8x1xf32> to vector<8x8xf32>
    %24 = arith.mulf %19, %23 : vector<8x8xf32>
    %25 = arith.truncf %24 : vector<8x8xf32> to vector<8x8xbf16>
    %cst_9 = arith.constant dense<0.000000e+00> : vector<8x32xf32>
    %26 = tpu.matmul %25, %13, %cst_9 {dimension_numbers = #tpu.dot_dimension_numbers<[1], [0], [0], [1], [0, 0, 1, 1], [], []>} : vector<8x8xbf16>, vector<8x32xbf16>, vector<8x32xf32> -> vector<8x32xf32>
    %27 = vector.extract_strided_slice %7 {offsets = [0, 32], sizes = [8, 32], strides = [1, 1]} : vector<8x384xf32> to vector<8x32xf32>
    %28 = arith.truncf %27 : vector<8x32xf32> to vector<8x32xbf16>
    %29 = vector.extract_strided_slice %7 {offsets = [0, 160], sizes = [8, 32], strides = [1, 1]} : vector<8x384xf32> to vector<8x32xf32>
    %30 = arith.truncf %29 : vector<8x32xf32> to vector<8x32xbf16>
    %31 = vector.extract_strided_slice %7 {offsets = [0, 288], sizes = [8, 32], strides = [1, 1]} : vector<8x384xf32> to vector<8x32xf32>
    %32 = arith.truncf %31 : vector<8x32xf32> to vector<8x32xbf16>
    %cst_10 = arith.constant dense<0.000000e+00> : vector<8x8xf32>
    %33 = tpu.matmul %28, %30, %cst_10 {dimension_numbers = #tpu.dot_dimension_numbers<[1], [1], [0], [0], [0, 0, 1, 0], [], []>} : vector<8x32xbf16>, vector<8x32xbf16>, vector<8x8xf32> -> vector<8x8xf32>
    %cst_11 = arith.constant dense<0xFF800000> : vector<8xf32>
    %34 = vector.multi_reduction <maximumf>, %33, %cst_11 [1] : vector<8x8xf32> to vector<8xf32>
    %35 = vector.shape_cast %34 : vector<8xf32> to vector<8x1xf32>
    %36 = vector.broadcast %35 : vector<8x1xf32> to vector<8x8xf32>
    %37 = arith.subf %33, %36 : vector<8x8xf32>
    %38 = math.exp %37 : vector<8x8xf32>
    %cst_12 = arith.constant dense<0.000000e+00> : vector<8xf32>
    %39 = vector.multi_reduction <add>, %38, %cst_12 [1] : vector<8x8xf32> to vector<8xf32>
    %40 = vector.shape_cast %39 : vector<8xf32> to vector<8x1xf32>
    %41 = tpu.reciprocal %40 {approx = true} : vector<8x1xf32> -> vector<8x1xf32>
    %42 = vector.broadcast %41 : vector<8x1xf32> to vector<8x8xf32>
    %43 = arith.mulf %38, %42 : vector<8x8xf32>
    %44 = arith.truncf %43 : vector<8x8xf32> to vector<8x8xbf16>
    %cst_13 = arith.constant dense<0.000000e+00> : vector<8x32xf32>
    %45 = tpu.matmul %44, %32, %cst_13 {dimension_numbers = #tpu.dot_dimension_numbers<[1], [0], [0], [1], [0, 0, 1, 1], [], []>} : vector<8x8xbf16>, vector<8x32xbf16>, vector<8x32xf32> -> vector<8x32xf32>
    %46 = vector.extract_strided_slice %7 {offsets = [0, 64], sizes = [8, 32], strides = [1, 1]} : vector<8x384xf32> to vector<8x32xf32>
    %47 = arith.truncf %46 : vector<8x32xf32> to vector<8x32xbf16>
    %48 = vector.extract_strided_slice %7 {offsets = [0, 192], sizes = [8, 32], strides = [1, 1]} : vector<8x384xf32> to vector<8x32xf32>
    %49 = arith.truncf %48 : vector<8x32xf32> to vector<8x32xbf16>
    %50 = vector.extract_strided_slice %7 {offsets = [0, 320], sizes = [8, 32], strides = [1, 1]} : vector<8x384xf32> to vector<8x32xf32>
    %51 = arith.truncf %50 : vector<8x32xf32> to vector<8x32xbf16>
    %cst_14 = arith.constant dense<0.000000e+00> : vector<8x8xf32>
    %52 = tpu.matmul %47, %49, %cst_14 {dimension_numbers = #tpu.dot_dimension_numbers<[1], [1], [0], [0], [0, 0, 1, 0], [], []>} : vector<8x32xbf16>, vector<8x32xbf16>, vector<8x8xf32> -> vector<8x8xf32>
    %cst_15 = arith.constant dense<0xFF800000> : vector<8xf32>
    %53 = vector.multi_reduction <maximumf>, %52, %cst_15 [1] : vector<8x8xf32> to vector<8xf32>
    %54 = vector.shape_cast %53 : vector<8xf32> to vector<8x1xf32>
    %55 = vector.broadcast %54 : vector<8x1xf32> to vector<8x8xf32>
    %56 = arith.subf %52, %55 : vector<8x8xf32>
    %57 = math.exp %56 : vector<8x8xf32>
    %cst_16 = arith.constant dense<0.000000e+00> : vector<8xf32>
    %58 = vector.multi_reduction <add>, %57, %cst_16 [1] : vector<8x8xf32> to vector<8xf32>
    %59 = vector.shape_cast %58 : vector<8xf32> to vector<8x1xf32>
    %60 = tpu.reciprocal %59 {approx = true} : vector<8x1xf32> -> vector<8x1xf32>
    %61 = vector.broadcast %60 : vector<8x1xf32> to vector<8x8xf32>
    %62 = arith.mulf %57, %61 : vector<8x8xf32>
    %63 = arith.truncf %62 : vector<8x8xf32> to vector<8x8xbf16>
    %cst_17 = arith.constant dense<0.000000e+00> : vector<8x32xf32>
    %64 = tpu.matmul %63, %51, %cst_17 {dimension_numbers = #tpu.dot_dimension_numbers<[1], [0], [0], [1], [0, 0, 1, 1], [], []>} : vector<8x8xbf16>, vector<8x32xbf16>, vector<8x32xf32> -> vector<8x32xf32>
    %65 = vector.extract_strided_slice %7 {offsets = [0, 96], sizes = [8, 32], strides = [1, 1]} : vector<8x384xf32> to vector<8x32xf32>
    %66 = arith.truncf %65 : vector<8x32xf32> to vector<8x32xbf16>
    %67 = vector.extract_strided_slice %7 {offsets = [0, 224], sizes = [8, 32], strides = [1, 1]} : vector<8x384xf32> to vector<8x32xf32>
    %68 = arith.truncf %67 : vector<8x32xf32> to vector<8x32xbf16>
    %69 = vector.extract_strided_slice %7 {offsets = [0, 352], sizes = [8, 32], strides = [1, 1]} : vector<8x384xf32> to vector<8x32xf32>
    %70 = arith.truncf %69 : vector<8x32xf32> to vector<8x32xbf16>
    %cst_18 = arith.constant dense<0.000000e+00> : vector<8x8xf32>
    %71 = tpu.matmul %66, %68, %cst_18 {dimension_numbers = #tpu.dot_dimension_numbers<[1], [1], [0], [0], [0, 0, 1, 0], [], []>} : vector<8x32xbf16>, vector<8x32xbf16>, vector<8x8xf32> -> vector<8x8xf32>
    %cst_19 = arith.constant dense<0xFF800000> : vector<8xf32>
    %72 = vector.multi_reduction <maximumf>, %71, %cst_19 [1] : vector<8x8xf32> to vector<8xf32>
    %73 = vector.shape_cast %72 : vector<8xf32> to vector<8x1xf32>
    %74 = vector.broadcast %73 : vector<8x1xf32> to vector<8x8xf32>
    %75 = arith.subf %71, %74 : vector<8x8xf32>
    %76 = math.exp %75 : vector<8x8xf32>
    %cst_20 = arith.constant dense<0.000000e+00> : vector<8xf32>
    %77 = vector.multi_reduction <add>, %76, %cst_20 [1] : vector<8x8xf32> to vector<8xf32>
    %78 = vector.shape_cast %77 : vector<8xf32> to vector<8x1xf32>
    %79 = tpu.reciprocal %78 {approx = true} : vector<8x1xf32> -> vector<8x1xf32>
    %80 = vector.broadcast %79 : vector<8x1xf32> to vector<8x8xf32>
    %81 = arith.mulf %76, %80 : vector<8x8xf32>
    %82 = arith.truncf %81 : vector<8x8xf32> to vector<8x8xbf16>
    %cst_21 = arith.constant dense<0.000000e+00> : vector<8x32xf32>
    %83 = tpu.matmul %82, %70, %cst_21 {dimension_numbers = #tpu.dot_dimension_numbers<[1], [0], [0], [1], [0, 0, 1, 1], [], []>} : vector<8x8xbf16>, vector<8x32xbf16>, vector<8x32xf32> -> vector<8x32xf32>
    %84 = tpu.concatenate %26, %45, %64, %83 in 1 : vector<8x32xf32>, vector<8x32xf32>, vector<8x32xf32>, vector<8x32xf32> -> vector<8x128xf32>
    %85 = arith.truncf %84 : vector<8x128xf32> to vector<8x128xbf16>
    %c0_22 = arith.constant 0 : index
    %c0_23 = arith.constant 0 : index
    %86 = vector.load %arg4[%c0_22, %c0_23] : memref<128x128xbf16, #tpu.memory_space<vmem>>, vector<128x128xbf16>
    %cst_24 = arith.constant dense<0.000000e+00> : vector<8x128xf32>
    %87 = tpu.matmul %85, %86, %cst_24 {dimension_numbers = #tpu.dot_dimension_numbers<[1], [0], [0], [1], [0, 0, 1, 1], [], []>} : vector<8x128xbf16>, vector<128x128xbf16>, vector<8x128xf32> -> vector<8x128xf32>
    %c0_25 = arith.constant 0 : index
    %c0_26 = arith.constant 0 : index
    %88 = vector.load %arg5[%c0_25, %c0_26] : memref<1x128xf32, #tpu.memory_space<vmem>>, vector<1x128xf32>
    %89 = vector.broadcast %88 : vector<1x128xf32> to vector<8x128xf32>
    %90 = arith.addf %87, %89 : vector<8x128xf32>
    %91 = arith.addf %1, %90 : vector<8x128xf32>
    %cst_27 = arith.constant dense<0.000000e+00> : vector<8xf32>
    %92 = vector.multi_reduction <add>, %91, %cst_27 [1] : vector<8x128xf32> to vector<8xf32>
    %93 = vector.shape_cast %92 : vector<8xf32> to vector<8x1xf32>
    %cst_28 = arith.constant 1.280000e+02 : f32
    %94 = vector.broadcast %cst_28 : f32 to vector<8x1xf32>
    %95 = arith.divf %93, %94 : vector<8x1xf32>
    %96 = vector.broadcast %95 : vector<8x1xf32> to vector<8x128xf32>
    %97 = arith.subf %91, %96 : vector<8x128xf32>
    %98 = arith.mulf %97, %97 : vector<8x128xf32>
    %cst_29 = arith.constant dense<0.000000e+00> : vector<8xf32>
    %99 = vector.multi_reduction <add>, %98, %cst_29 [1] : vector<8x128xf32> to vector<8xf32>
    %100 = vector.shape_cast %99 : vector<8xf32> to vector<8x1xf32>
    %cst_30 = arith.constant 1.280000e+02 : f32
    %101 = vector.broadcast %cst_30 : f32 to vector<8x1xf32>
    %102 = arith.divf %100, %101 : vector<8x1xf32>
    %cst_31 = arith.constant 9.99999974E-6 : f32
    %103 = vector.broadcast %cst_31 : f32 to vector<8x1xf32>
    %104 = arith.addf %102, %103 : vector<8x1xf32>
    %105 = math.rsqrt %104 : vector<8x1xf32>
    %106 = vector.broadcast %105 : vector<8x1xf32> to vector<8x128xf32>
    %107 = arith.mulf %97, %106 : vector<8x128xf32>
    %c0_32 = arith.constant 0 : index
    %c0_33 = arith.constant 0 : index
    %108 = vector.load %arg6[%c0_32, %c0_33] : memref<1x128xf32, #tpu.memory_space<vmem>>, vector<1x128xf32>
    %109 = vector.broadcast %108 : vector<1x128xf32> to vector<8x128xf32>
    %110 = arith.mulf %107, %109 : vector<8x128xf32>
    %c0_34 = arith.constant 0 : index
    %c0_35 = arith.constant 0 : index
    %111 = vector.load %arg7[%c0_34, %c0_35] : memref<1x128xf32, #tpu.memory_space<vmem>>, vector<1x128xf32>
    %112 = vector.broadcast %111 : vector<1x128xf32> to vector<8x128xf32>
    %113 = arith.addf %110, %112 : vector<8x128xf32>
    %114 = arith.truncf %113 : vector<8x128xf32> to vector<8x128xbf16>
    %c0_36 = arith.constant 0 : index
    %c0_37 = arith.constant 0 : index
    %115 = vector.load %arg8[%c0_36, %c0_37] : memref<128x256xbf16, #tpu.memory_space<vmem>>, vector<128x256xbf16>
    %cst_38 = arith.constant dense<0.000000e+00> : vector<8x256xf32>
    %116 = tpu.matmul %114, %115, %cst_38 {dimension_numbers = #tpu.dot_dimension_numbers<[1], [0], [0], [1], [0, 0, 1, 1], [], []>} : vector<8x128xbf16>, vector<128x256xbf16>, vector<8x256xf32> -> vector<8x256xf32>
    %c0_39 = arith.constant 0 : index
    %c0_40 = arith.constant 0 : index
    %117 = vector.load %arg9[%c0_39, %c0_40] : memref<1x256xf32, #tpu.memory_space<vmem>>, vector<1x256xf32>
    %118 = vector.broadcast %117 : vector<1x256xf32> to vector<8x256xf32>
    %119 = arith.addf %116, %118 : vector<8x256xf32>
    %cst_41 = arith.constant 0.000000e+00 : f32
    %120 = vector.broadcast %cst_41 : f32 to vector<8x256xf32>
    %121 = arith.maximumf %119, %120 : vector<8x256xf32>
    %122 = arith.truncf %121 : vector<8x256xf32> to vector<8x256xbf16>
    %c0_42 = arith.constant 0 : index
    %c0_43 = arith.constant 0 : index
    %123 = vector.load %arg10[%c0_42, %c0_43] : memref<256x128xbf16, #tpu.memory_space<vmem>>, vector<256x128xbf16>
    %cst_44 = arith.constant dense<0.000000e+00> : vector<8x128xf32>
    %124 = tpu.matmul %122, %123, %cst_44 {dimension_numbers = #tpu.dot_dimension_numbers<[1], [0], [0], [1], [0, 0, 1, 1], [], []>} : vector<8x256xbf16>, vector<256x128xbf16>, vector<8x128xf32> -> vector<8x128xf32>
    %c0_45 = arith.constant 0 : index
    %c0_46 = arith.constant 0 : index
    %125 = vector.load %arg11[%c0_45, %c0_46] : memref<1x128xf32, #tpu.memory_space<vmem>>, vector<1x128xf32>
    %126 = vector.broadcast %125 : vector<1x128xf32> to vector<8x128xf32>
    %127 = arith.addf %124, %126 : vector<8x128xf32>
    %128 = arith.addf %113, %127 : vector<8x128xf32>
    %cst_47 = arith.constant dense<0.000000e+00> : vector<8xf32>
    %129 = vector.multi_reduction <add>, %128, %cst_47 [1] : vector<8x128xf32> to vector<8xf32>
    %130 = vector.shape_cast %129 : vector<8xf32> to vector<8x1xf32>
    %cst_48 = arith.constant 1.280000e+02 : f32
    %131 = vector.broadcast %cst_48 : f32 to vector<8x1xf32>
    %132 = arith.divf %130, %131 : vector<8x1xf32>
    %133 = vector.broadcast %132 : vector<8x1xf32> to vector<8x128xf32>
    %134 = arith.subf %128, %133 : vector<8x128xf32>
    %135 = arith.mulf %134, %134 : vector<8x128xf32>
    %cst_49 = arith.constant dense<0.000000e+00> : vector<8xf32>
    %136 = vector.multi_reduction <add>, %135, %cst_49 [1] : vector<8x128xf32> to vector<8xf32>
    %137 = vector.shape_cast %136 : vector<8xf32> to vector<8x1xf32>
    %cst_50 = arith.constant 1.280000e+02 : f32
    %138 = vector.broadcast %cst_50 : f32 to vector<8x1xf32>
    %139 = arith.divf %137, %138 : vector<8x1xf32>
    %cst_51 = arith.constant 9.99999974E-6 : f32
    %140 = vector.broadcast %cst_51 : f32 to vector<8x1xf32>
    %141 = arith.addf %139, %140 : vector<8x1xf32>
    %142 = math.rsqrt %141 : vector<8x1xf32>
    %143 = vector.broadcast %142 : vector<8x1xf32> to vector<8x128xf32>
    %144 = arith.mulf %134, %143 : vector<8x128xf32>
    %c0_52 = arith.constant 0 : index
    %c0_53 = arith.constant 0 : index
    %145 = vector.load %arg12[%c0_52, %c0_53] : memref<1x128xf32, #tpu.memory_space<vmem>>, vector<1x128xf32>
    %146 = vector.broadcast %145 : vector<1x128xf32> to vector<8x128xf32>
    %147 = arith.mulf %144, %146 : vector<8x128xf32>
    %c0_54 = arith.constant 0 : index
    %c0_55 = arith.constant 0 : index
    %148 = vector.load %arg13[%c0_54, %c0_55] : memref<1x128xf32, #tpu.memory_space<vmem>>, vector<1x128xf32>
    %149 = vector.broadcast %148 : vector<1x128xf32> to vector<8x128xf32>
    %150 = arith.addf %147, %149 : vector<8x128xf32>
    %c0_56 = arith.constant 0 : index
    %c0_57 = arith.constant 0 : index
    %c0_58 = arith.constant 0 : index
    %151 = vector.load %arg14[%c0_56, %c0_57, %c0_58] : memref<1x8x128xf32, #tpu.memory_space<vmem>>, vector<1x8x128xf32>
    %152 = vector.shape_cast %151 : vector<1x8x128xf32> to vector<8x128xf32>
    %153 = vector.shape_cast %150 : vector<8x128xf32> to vector<1x8x128xf32>
    tpu.vector_store %arg14[%c0_56, %c0_57, %c0_58], %153 {strides = array<i32>} : memref<1x8x128xf32, #tpu.memory_space<vmem>>, vector<1x8x128xf32>,
    return
  }
  func.func @transform_0(%arg0: i32) -> (i32, i32, i32) {
    %c0_i32 = arith.constant 0 : i32
    %c0_i32_0 = arith.constant 0 : i32
    %c0_i32_1 = arith.constant 0 : i32
    return %arg0, %c0_i32, %c0_i32_0 : i32, i32, i32
  }
  func.func @transform_1(%arg0: i32) -> (i32, i32) {
    %c0_i32 = arith.constant 0 : i32
    %c0_i32_0 = arith.constant 0 : i32
    %c0_i32_1 = arith.constant 0 : i32
    return %c0_i32, %c0_i32_0 : i32, i32
  }
  func.func @transform_2(%arg0: i32) -> (i32, i32) {
    %c0_i32 = arith.constant 0 : i32
    %c0_i32_0 = arith.constant 0 : i32
    %c0_i32_1 = arith.constant 0 : i32
    return %c0_i32, %c0_i32_0 : i32, i32
  }
  func.func @transform_3(%arg0: i32) -> (i32, i32) {
    %c0_i32 = arith.constant 0 : i32
    %c0_i32_0 = arith.constant 0 : i32
    %c0_i32_1 = arith.constant 0 : i32
    return %c0_i32, %c0_i32_0 : i32, i32
  }
  func.func @transform_4(%arg0: i32) -> (i32, i32) {
    %c0_i32 = arith.constant 0 : i32
    %c0_i32_0 = arith.constant 0 : i32
    %c0_i32_1 = arith.constant 0 : i32
    return %c0_i32, %c0_i32_0 : i32, i32
  }
  func.func @transform_5(%arg0: i32) -> (i32, i32) {
    %c0_i32 = arith.constant 0 : i32
    %c0_i32_0 = arith.constant 0 : i32
    %c0_i32_1 = arith.constant 0 : i32
    return %c0_i32, %c0_i32_0 : i32, i32
  }
  func.func @transform_6(%arg0: i32) -> (i32, i32) {
    %c0_i32 = arith.constant 0 : i32
    %c0_i32_0 = arith.constant 0 : i32
    %c0_i32_1 = arith.constant 0 : i32
    return %c0_i32, %c0_i32_0 : i32, i32
  }
  func.func @transform_7(%arg0: i32) -> (i32, i32) {
    %c0_i32 = arith.constant 0 : i32
    %c0_i32_0 = arith.constant 0 : i32
    %c0_i32_1 = arith.constant 0 : i32
    return %c0_i32, %c0_i32_0 : i32, i32
  }
  func.func @transform_8(%arg0: i32) -> (i32, i32) {
    %c0_i32 = arith.constant 0 : i32
    %c0_i32_0 = arith.constant 0 : i32
    %c0_i32_1 = arith.constant 0 : i32
    return %c0_i32, %c0_i32_0 : i32, i32
  }
  func.func @transform_9(%arg0: i32) -> (i32, i32) {
    %c0_i32 = arith.constant 0 : i32
    %c0_i32_0 = arith.constant 0 : i32
    %c0_i32_1 = arith.constant 0 : i32
    return %c0_i32, %c0_i32_0 : i32, i32
  }
  func.func @transform_10(%arg0: i32) -> (i32, i32) {
    %c0_i32 = arith.constant 0 : i32
    %c0_i32_0 = arith.constant 0 : i32
    %c0_i32_1 = arith.constant 0 : i32
    return %c0_i32, %c0_i32_0 : i32, i32
  }
  func.func @transform_11(%arg0: i32) -> (i32, i32) {
    %c0_i32 = arith.constant 0 : i32
    %c0_i32_0 = arith.constant 0 : i32
    %c0_i32_1 = arith.constant 0 : i32
    return %c0_i32, %c0_i32_0 : i32, i32
  }
  func.func @transform_12(%arg0: i32) -> (i32, i32) {
    %c0_i32 = arith.constant 0 : i32
    %c0_i32_0 = arith.constant 0 : i32
    %c0_i32_1 = arith.constant 0 : i32
    return %c0_i32, %c0_i32_0 : i32, i32
  }
  func.func @transform_13(%arg0: i32) -> (i32, i32, i32) {
    %c0_i32 = arith.constant 0 : i32
    %c0_i32_0 = arith.constant 0 : i32
    %c0_i32_1 = arith.constant 0 : i32
    return %arg0, %c0_i32, %c0_i32_0 : i32, i32, i32
  }
}

</mosaic_0001>

<llo_original>
// kernel: transformer_encoder.3
$region0: #{transformer_encoder.3}
  #allocation0 [shape = 'u32[]', space=smem, size = 0x4, offset = 0x4, fixed_abs, tag = 'smem constant byte address 0x4 - core index']
  #allocation1 [shape = 'u32[144,128]{1,0:T(1,128)}', space=vmem, size = 0x12000, scoped, tag = 'internal scratch']
  %s0 = inlined_call_operand.vmem [shape: f32[2,8,128], index: 0, kind: input, shape index: {}]
  %s1 = inlined_call_operand.vmem [shape: bf16[128,384], index: 1, kind: input, shape index: {}]
  %s2 = inlined_call_operand.vmem [shape: f32[1,384], index: 2, kind: input, shape index: {}]
  %s3 = inlined_call_operand.vmem [shape: bf16[128,128], index: 3, kind: input, shape index: {}]
  %s4 = inlined_call_operand.vmem [shape: f32[1,128], index: 4, kind: input, shape index: {}]
  %s5 = inlined_call_operand.vmem [shape: f32[1,128], index: 5, kind: input, shape index: {}]
  %s6 = inlined_call_operand.vmem [shape: f32[1,128], index: 6, kind: input, shape index: {}]
  %s7 = inlined_call_operand.vmem [shape: bf16[128,256], index: 7, kind: input, shape index: {}]
  %s8 = inlined_call_operand.vmem [shape: f32[1,256], index: 8, kind: input, shape index: {}]
  %s9 = inlined_call_operand.vmem [shape: bf16[256,128], index: 9, kind: input, shape index: {}]
  %s10 = inlined_call_operand.vmem [shape: f32[1,128], index: 10, kind: input, shape index: {}]
  %s11 = inlined_call_operand.vmem [shape: f32[1,128], index: 11, kind: input, shape index: {}]
  %s12 = inlined_call_operand.vmem [shape: f32[1,128], index: 12, kind: input, shape index: {}]
  %s13 = inlined_call_operand.vmem [shape: f32[2,8,128], index: 13, kind: output, shape index: {}]
  %s14 = sld [smem:[#allocation0]]
  $region85: #{transformer_encoder.3} parent=0
    _
  %s16 = ssub.s32 1, %s14
  %s17 = scalar_select 0, %s16, %s14
  loop: start=0, step=1, limit=4
  $region2: #{transformer_encoder.3} parent=0 // loop_pre_header
    _
  $region3: #{transformer_encoder.3} parent=0 // loop_header
    %s19 = sphi 0, %s23
    %p20 = scmp.ge.s32.totalorder %s19, 4
    %s29 = sphi 0, %s31
    %s32 = sphi 0, %s29
    %s33 = sphi 0, %s32
    %s49 = sphi 0, %s33
    %s53 = sphi 0, %s53
    %s55 = sphi 0, %s53
    %s56 = sphi 0, %s55
    %s70 = sphi 0, %s56
    %s74 = sphi 0, %s74
    %s76 = sphi 0, %s74
    %s77 = sphi 0, %s76
    %s91 = sphi 0, %s77
    %s95 = sphi 0, %s95
    %s97 = sphi 0, %s95
    %s98 = sphi 0, %s97
    %s112 = sphi 0, %s98
    %s116 = sphi 0, %s116
    %s118 = sphi 0, %s116
    %s119 = sphi 0, %s118
    %s133 = sphi 0, %s119
    %s137 = sphi 0, %s137
    %s139 = sphi 0, %s137
    %s140 = sphi 0, %s139
    %s154 = sphi 0, %s140
    %s158 = sphi 0, %s158
    %s160 = sphi 0, %s158
    %s161 = sphi 0, %s160
    %s175 = sphi 0, %s161
    %s179 = sphi 0, %s179
    %s181 = sphi 0, %s179
    %s182 = sphi 0, %s181
    %s196 = sphi 0, %s182
    %s200 = sphi 0, %s200
    %s202 = sphi 0, %s200
    %s203 = sphi 0, %s202
    %s217 = sphi 0, %s203
    %s221 = sphi 0, %s221
    %s223 = sphi 0, %s221
    %s224 = sphi 0, %s223
    %s238 = sphi 0, %s224
    %s242 = sphi 0, %s242
    %s244 = sphi 0, %s242
    %s245 = sphi 0, %s244
    %s259 = sphi 0, %s245
    %s263 = sphi 0, %s263
    %s265 = sphi 0, %s263
    %s266 = sphi 0, %s265
    %s280 = sphi 0, %s266
    %s284 = sphi 0, %s284
    %s286 = sphi 0, %s284
    %s287 = sphi 0, %s286
    %s301 = sphi 0, %s287
    %s307 = sphi 0, %s309
    %s310 = sphi 0, %s307
    %s311 = sphi 0, %s310
    %s327 = sphi 0, %s311
  $region4: #{transformer_encoder.3} parent=0 // loop_header_branch
    %22 = sbr.rel (%p20) target = $region8
  $region5: #{transformer_encoder.3} parent=0 // loop_body
    %s24 = ssub.s32 %s19, 1
    %s25 = ssub.s32 %s19, 2
    %s26 = sadd.s32 %s19, 1
    %s27 = ssub.s32 %s19, %s26
    %p28 = scmp.eq.s32.totalorder %s27, 0
    %s30 = sadd.s32 %s29, 1
    %s31 = scalar_select %p28, %s29, %s30
    %p34 = pneg %p28
    %p35 = scmp.eq.s32.totalorder %s19, 1
    %p36 = por %p34, %p35
    %p37 = scmp.ne.s32.totalorder %s29, %s32
    %p38 = scmp.eq.s32.totalorder %s19, 0
    %p39 = por %p37, %p38
    %p40 = scmp.ne.s32.totalorder %s29, %s32
    %p41 = scmp.eq.s32.totalorder %s24, 1
    %p42 = por %p40, %p41
    %p43 = scmp.ne.s32.totalorder %s32, %s33
    %p44 = scmp.eq.s32.totalorder %s24, 0
    %p45 = por %p43, %p44
    %p46 = scmp.ne.s32.totalorder %s32, %s33
    %p47 = scmp.eq.s32.totalorder %s25, 1
    %p48 = por %p46, %p47
    %p50 = scmp.ne.s32.totalorder %s33, %s49
    %p51 = scmp.eq.s32.totalorder %s25, 0
    %p52 = por %p50, %p51
    %s54 = sadd.s32 %s53, 1
    %p57 = scmp.eq.s32.totalorder %s19, 1
    %p58 = scmp.ne.s32.totalorder %s53, %s55
    %p59 = scmp.eq.s32.totalorder %s19, 0
    %p60 = por %p58, %p59
    %p61 = scmp.ne.s32.totalorder %s53, %s55
    %p62 = scmp.eq.s32.totalorder %s24, 1
    %p63 = por %p61, %p62
    %p64 = scmp.ne.s32.totalorder %s55, %s56
    %p65 = scmp.eq.s32.totalorder %s24, 0
    %p66 = por %p64, %p65
    %p67 = scmp.ne.s32.totalorder %s55, %s56
    %p68 = scmp.eq.s32.totalorder %s25, 1
    %p69 = por %p67, %p68
    %p71 = scmp.ne.s32.totalorder %s56, %s70
    %p72 = scmp.eq.s32.totalorder %s25, 0
    %p73 = por %p71, %p72
    %s75 = sadd.s32 %s74, 1
    %p78 = scmp.eq.s32.totalorder %s19, 1
    %p79 = scmp.ne.s32.totalorder %s74, %s76
    %p80 = scmp.eq.s32.totalorder %s19, 0
    %p81 = por %p79, %p80
    %p82 = scmp.ne.s32.totalorder %s74, %s76
    %p83 = scmp.eq.s32.totalorder %s24, 1
    %p84 = por %p82, %p83
    %p85 = scmp.ne.s32.totalorder %s76, %s77
    %p86 = scmp.eq.s32.totalorder %s24, 0
    %p87 = por %p85, %p86
    %p88 = scmp.ne.s32.totalorder %s76, %s77
    %p89 = scmp.eq.s32.totalorder %s25, 1
    %p90 = por %p88, %p89
    %p92 = scmp.ne.s32.totalorder %s77, %s91
    %p93 = scmp.eq.s32.totalorder %s25, 0
    %p94 = por %p92, %p93
    %s96 = sadd.s32 %s95, 1
    %p99 = scmp.eq.s32.totalorder %s19, 1
    %p100 = scmp.ne.s32.totalorder %s95, %s97
    %p101 = scmp.eq.s32.totalorder %s19, 0
    %p102 = por %p100, %p101
    %p103 = scmp.ne.s32.totalorder %s95, %s97
    %p104 = scmp.eq.s32.totalorder %s24, 1
    %p105 = por %p103, %p104
    %p106 = scmp.ne.s32.totalorder %s97, %s98
    %p107 = scmp.eq.s32.totalorder %s24, 0
    %p108 = por %p106, %p107
    %p109 = scmp.ne.s32.totalorder %s97, %s98
    %p110 = scmp.eq.s32.totalorder %s25, 1
    %p111 = por %p109, %p110
    %p113 = scmp.ne.s32.totalorder %s98, %s112
    %p114 = scmp.eq.s32.totalorder %s25, 0
    %p115 = por %p113, %p114
    %s117 = sadd.s32 %s116, 1
    %p120 = scmp.eq.s32.totalorder %s19, 1
    %p121 = scmp.ne.s32.totalorder %s116, %s118
    %p122 = scmp.eq.s32.totalorder %s19, 0
    %p123 = por %p121, %p122
    %p124 = scmp.ne.s32.totalorder %s116, %s118
    %p125 = scmp.eq.s32.totalorder %s24, 1
    %p126 = por %p124, %p125
    %p127 = scmp.ne.s32.totalorder %s118, %s119
    %p128 = scmp.eq.s32.totalorder %s24, 0
    %p129 = por %p127, %p128
    %p130 = scmp.ne.s32.totalorder %s118, %s119
    %p131 = scmp.eq.s32.totalorder %s25, 1
    %p132 = por %p130, %p131
    %p134 = scmp.ne.s32.totalorder %s119, %s133
    %p135 = scmp.eq.s32.totalorder %s25, 0
    %p136 = por %p134, %p135
    %s138 = sadd.s32 %s137, 1
    %p141 = scmp.eq.s32.totalorder %s19, 1
    %p142 = scmp.ne.s32.totalorder %s137, %s139
    %p143 = scmp.eq.s32.totalorder %s19, 0
    %p144 = por %p142, %p143
    %p145 = scmp.ne.s32.totalorder %s137, %s139
    %p146 = scmp.eq.s32.totalorder %s24, 1
    %p147 = por %p145, %p146
    %p148 = scmp.ne.s32.totalorder %s139, %s140
    %p149 = scmp.eq.s32.totalorder %s24, 0
    %p150 = por %p148, %p149
    %p151 = scmp.ne.s32.totalorder %s139, %s140
    %p152 = scmp.eq.s32.totalorder %s25, 1
    %p153 = por %p151, %p152
    %p155 = scmp.ne.s32.totalorder %s140, %s154
    %p156 = scmp.eq.s32.totalorder %s25, 0
    %p157 = por %p155, %p156
    %s159 = sadd.s32 %s158, 1
    %p162 = scmp.eq.s32.totalorder %s19, 1
    %p163 = scmp.ne.s32.totalorder %s158, %s160
    %p164 = scmp.eq.s32.totalorder %s19, 0
    %p165 = por %p163, %p164
    %p166 = scmp.ne.s32.totalorder %s158, %s160
    %p167 = scmp.eq.s32.totalorder %s24, 1
    %p168 = por %p166, %p167
    %p169 = scmp.ne.s32.totalorder %s160, %s161
    %p170 = scmp.eq.s32.totalorder %s24, 0
    %p171 = por %p169, %p170
    %p172 = scmp.ne.s32.totalorder %s160, %s161
    %p173 = scmp.eq.s32.totalorder %s25, 1
    %p174 = por %p172, %p173
    %p176 = scmp.ne.s32.totalorder %s161, %s175
    %p177 = scmp.eq.s32.totalorder %s25, 0
    %p178 = por %p176, %p177
    %s180 = sadd.s32 %s179, 1
    %p183 = scmp.eq.s32.totalorder %s19, 1
    %p184 = scmp.ne.s32.totalorder %s179, %s181
    %p185 = scmp.eq.s32.totalorder %s19, 0
    %p186 = por %p184, %p185
    %p187 = scmp.ne.s32.totalorder %s179, %s181
    %p188 = scmp.eq.s32.totalorder %s24, 1
    %p189 = por %p187, %p188
    %p190 = scmp.ne.s32.totalorder %s181, %s182
    %p191 = scmp.eq.s32.totalorder %s24, 0
    %p192 = por %p190, %p191
    %p193 = scmp.ne.s32.totalorder %s181, %s182
    %p194 = scmp.eq.s32.totalorder %s25, 1
    %p195 = por %p193, %p194
    %p197 = scmp.ne.s32.totalorder %s182, %s196
    %p198 = scmp.eq.s32.totalorder %s25, 0
    %p199 = por %p197, %p198
    %s201 = sadd.s32 %s200, 1
    %p204 = scmp.eq.s32.totalorder %s19, 1
    %p205 = scmp.ne.s32.totalorder %s200, %s202
    %p206 = scmp.eq.s32.totalorder %s19, 0
    %p207 = por %p205, %p206
    %p208 = scmp.ne.s32.totalorder %s200, %s202
    %p209 = scmp.eq.s32.totalorder %s24, 1
    %p210 = por %p208, %p209
    %p211 = scmp.ne.s32.totalorder %s202, %s203
    %p212 = scmp.eq.s32.totalorder %s24, 0
    %p213 = por %p211, %p212
    %p214 = scmp.ne.s32.totalorder %s202, %s203
    %p215 = scmp.eq.s32.totalorder %s25, 1
    %p216 = por %p214, %p215
    %p218 = scmp.ne.s32.totalorder %s203, %s217
    %p219 = scmp.eq.s32.totalorder %s25, 0
    %p220 = por %p218, %p219
    %s222 = sadd.s32 %s221, 1
    %p225 = scmp.eq.s32.totalorder %s19, 1
    %p226 = scmp.ne.s32.totalorder %s221, %s223
    %p227 = scmp.eq.s32.totalorder %s19, 0
    %p228 = por %p226, %p227
    %p229 = scmp.ne.s32.totalorder %s221, %s223
    %p230 = scmp.eq.s32.totalorder %s24, 1
    %p231 = por %p229, %p230
    %p232 = scmp.ne.s32.totalorder %s223, %s224
    %p233 = scmp.eq.s32.totalorder %s24, 0
    %p234 = por %p232, %p233
    %p235 = scmp.ne.s32.totalorder %s223, %s224
    %p236 = scmp.eq.s32.totalorder %s25, 1
    %p237 = por %p235, %p236
    %p239 = scmp.ne.s32.totalorder %s224, %s238
    %p240 = scmp.eq.s32.totalorder %s25, 0
    %p241 = por %p239, %p240
    %s243 = sadd.s32 %s242, 1
    %p246 = scmp.eq.s32.totalorder %s19, 1
    %p247 = scmp.ne.s32.totalorder %s242, %s244
    %p248 = scmp.eq.s32.totalorder %s19, 0
    %p249 = por %p247, %p248
    %p250 = scmp.ne.s32.totalorder %s242, %s244
    %p251 = scmp.eq.s32.totalorder %s24, 1
    %p252 = por %p250, %p251
    %p253 = scmp.ne.s32.totalorder %s244, %s245
    %p254 = scmp.eq.s32.totalorder %s24, 0
    %p255 = por %p253, %p254
    %p256 = scmp.ne.s32.totalorder %s244, %s245
    %p257 = scmp.eq.s32.totalorder %s25, 1
    %p258 = por %p256, %p257
    %p260 = scmp.ne.s32.totalorder %s245, %s259
    %p261 = scmp.eq.s32.totalorder %s25, 0
    %p262 = por %p260, %p261
    %s264 = sadd.s32 %s263, 1
    %p267 = scmp.eq.s32.totalorder %s19, 1
    %p268 = scmp.ne.s32.totalorder %s263, %s265
    %p269 = scmp.eq.s32.totalorder %s19, 0
    %p270 = por %p268, %p269
    %p271 = scmp.ne.s32.totalorder %s263, %s265
    %p272 = scmp.eq.s32.totalorder %s24, 1
    %p273 = por %p271, %p272
    %p274 = scmp.ne.s32.totalorder %s265, %s266
    %p275 = scmp.eq.s32.totalorder %s24, 0
    %p276 = por %p274, %p275
    %p277 = scmp.ne.s32.totalorder %s265, %s266
    %p278 = scmp.eq.s32.totalorder %s25, 1
    %p279 = por %p277, %p278
    %p281 = scmp.ne.s32.totalorder %s266, %s280
    %p282 = scmp.eq.s32.totalorder %s25, 0
    %p283 = por %p281, %p282
    %s285 = sadd.s32 %s284, 1
    %p288 = scmp.eq.s32.totalorder %s19, 1
    %p289 = scmp.ne.s32.totalorder %s284, %s286
    %p290 = scmp.eq.s32.totalorder %s19, 0
    %p291 = por %p289, %p290
    %p292 = scmp.ne.s32.totalorder %s284, %s286
    %p293 = scmp.eq.s32.totalorder %s24, 1
    %p294 = por %p292, %p293
    %p295 = scmp.ne.s32.totalorder %s286, %s287
    %p296 = scmp.eq.s32.totalorder %s24, 0
    %p297 = por %p295, %p296
    %p298 = scmp.ne.s32.totalorder %s286, %s287
    %p299 = scmp.eq.s32.totalorder %s25, 1
    %p300 = por %p298, %p299
    %p302 = scmp.ne.s32.totalorder %s287, %s301
    %p303 = scmp.eq.s32.totalorder %s25, 0
    %p304 = por %p302, %p303
    %s305 = ssub.s32 %s19, %s26
    %p306 = scmp.eq.s32.totalorder %s305, 0
    %s308 = sadd.s32 %s307, 1
    %s309 = scalar_select %p306, %s307, %s308
    %p312 = pneg %p306
    %p313 = scmp.eq.s32.totalorder %s19, 1
    %p314 = por %p312, %p313
    %p315 = scmp.ne.s32.totalorder %s307, %s310
    %p316 = scmp.eq.s32.totalorder %s19, 0
    %p317 = por %p315, %p316
    %p318 = scmp.ne.s32.totalorder %s307, %s310
    %p319 = scmp.eq.s32.totalorder %s24, 1
    %p320 = por %p318, %p319
    %p321 = scmp.ne.s32.totalorder %s310, %s311
    %p322 = scmp.eq.s32.totalorder %s24, 0
    %p323 = por %p321, %p322
    %p324 = scmp.ne.s32.totalorder %s310, %s311
    %p325 = scmp.eq.s32.totalorder %s25, 1
    %p326 = por %p324, %p325
    %p328 = scmp.ne.s32.totalorder %s311, %s327
    %p329 = scmp.eq.s32.totalorder %s25, 0
    %p330 = por %p328, %p329
    %p331 = scmp.le.s32.totalorder 1, %s19
    %p332 = scmp.lt.s32.totalorder %s19, 3
    %p333 = pnand %p331, %p332
    %p334 = pneg %p333
    // Predicated region
    $region9: #{transformer_encoder.3} parent=5 // pred_check
      _
    $region10: #{transformer_encoder.3} parent=5 // pred_check_branch
      %336 = sbr.rel (%p333) target = $region12
    $region11: #{transformer_encoder.3} parent=5 // pred_region
      %s337 = ssub.s32 %s19, 1
      // Predicated region
      $region13: #{transformer_encoder.3} parent=11 // pred_check
        %p338 = pneg %p66
      $region14: #{transformer_encoder.3} parent=11 // pred_check_branch
        %340 = sbr.rel (%p338) target = $region16
      $region15: #{transformer_encoder.3} parent=11 // pred_region
        _
      $region16: #{transformer_encoder.3} parent=11 // pred_fallthru
        _
      // Predicated region
      $region17: #{transformer_encoder.3} parent=11 // pred_check
        %p341 = pneg %p87
      $region18: #{transformer_encoder.3} parent=11 // pred_check_branch
        %343 = sbr.rel (%p341) target = $region20
      $region19: #{transformer_encoder.3} parent=11 // pred_region
        _
      $region20: #{transformer_encoder.3} parent=11 // pred_fallthru
        _
      // Predicated region
      $region21: #{transformer_encoder.3} parent=11 // pred_check
        %p344 = pneg %p108
      $region22: #{transformer_encoder.3} parent=11 // pred_check_branch
        %346 = sbr.rel (%p344) target = $region24
      $region23: #{transformer_encoder.3} parent=11 // pred_region
        _
      $region24: #{transformer_encoder.3} parent=11 // pred_fallthru
        _
      // Predicated region
      $region25: #{transformer_encoder.3} parent=11 // pred_check
        %p347 = pneg %p129
      $region26: #{transformer_encoder.3} parent=11 // pred_check_branch
        %349 = sbr.rel (%p347) target = $region28
      $region27: #{transformer_encoder.3} parent=11 // pred_region
        _
      $region28: #{transformer_encoder.3} parent=11 // pred_fallthru
        _
      // Predicated region
      $region29: #{transformer_encoder.3} parent=11 // pred_check
        %p350 = pneg %p150
      $region30: #{transformer_encoder.3} parent=11 // pred_check_branch
        %352 = sbr.rel (%p350) target = $region32
      $region31: #{transformer_encoder.3} parent=11 // pred_region
        _
      $region32: #{transformer_encoder.3} parent=11 // pred_fallthru
        _
      // Predicated region
      $region33: #{transformer_encoder.3} parent=11 // pred_check
        %p353 = pneg %p171
      $region34: #{transformer_encoder.3} parent=11 // pred_check_branch
        %355 = sbr.rel (%p353) target = $region36
      $region35: #{transformer_encoder.3} parent=11 // pred_region
        _
      $region36: #{transformer_encoder.3} parent=11 // pred_fallthru
        _
      // Predicated region
      $region37: #{transformer_encoder.3} parent=11 // pred_check
        %p356 = pneg %p192
      $region38: #{transformer_encoder.3} parent=11 // pred_check_branch
        %358 = sbr.rel (%p356) target = $region40
      $region39: #{transformer_encoder.3} parent=11 // pred_region
        _
      $region40: #{transformer_encoder.3} parent=11 // pred_fallthru
        _
      // Predicated region
      $region41: #{transformer_encoder.3} parent=11 // pred_check
        %p359 = pneg %p213
      $region42: #{transformer_encoder.3} parent=11 // pred_check_branch
        %361 = sbr.rel (%p359) target = $region44
      $region43: #{transformer_encoder.3} parent=11 // pred_region
        _
      $region44: #{transformer_encoder.3} parent=11 // pred_fallthru
        _
      // Predicated region
      $region45: #{transformer_encoder.3} parent=11 // pred_check
        %p362 = pneg %p234
      $region46: #{transformer_encoder.3} parent=11 // pred_check_branch
        %364 = sbr.rel (%p362) target = $region48
      $region47: #{transformer_encoder.3} parent=11 // pred_region
        _
      $region48: #{transformer_encoder.3} parent=11 // pred_fallthru
        _
      // Predicated region
      $region49: #{transformer_encoder.3} parent=11 // pred_check
        %p365 = pneg %p255
      $region50: #{transformer_encoder.3} parent=11 // pred_check_branch
        %367 = sbr.rel (%p365) target = $region52
      $region51: #{transformer_encoder.3} parent=11 // pred_region
        _
      $region52: #{transformer_encoder.3} parent=11 // pred_fallthru
        _
      // Predicated region
      $region53: #{transformer_encoder.3} parent=11 // pred_check
        %p368 = pneg %p276
      $region54: #{transformer_encoder.3} parent=11 // pred_check_branch
        %370 = sbr.rel (%p368) target = $region56
      $region55: #{transformer_encoder.3} parent=11 // pred_region
        _
      $region56: #{transformer_encoder.3} parent=11 // pred_fallthru
        _
      // Predicated region
      $region57: #{transformer_encoder.3} parent=11 // pred_check
        %p371 = pneg %p297
      $region58: #{transformer_encoder.3} parent=11 // pred_check_branch
        %373 = sbr.rel (%p371) target = $region60
      $region59: #{transformer_encoder.3} parent=11 // pred_region
        _
      $region60: #{transformer_encoder.3} parent=11 // pred_fallthru
        _
    $region12: #{transformer_encoder.3} parent=5 // pred_fallthru
      _
    %p374 = scmp.lt.s32.totalorder %s19, 2
    // Predicated region
    $region61: #{transformer_encoder.3} parent=5 // pred_check
      %p375 = pneg %p374
    $region62: #{transformer_encoder.3} parent=5 // pred_check_branch
      %377 = sbr.rel (%p375) target = $region64
    $region63: #{transformer_encoder.3} parent=5 // pred_region
      // Predicated region
      $region65: #{transformer_encoder.3} parent=63 // pred_check
        %p378 = pneg %p39
      $region66: #{transformer_encoder.3} parent=63 // pred_check_branch
        %380 = sbr.rel (%p378) target = $region68
      $region67: #{transformer_encoder.3} parent=63 // pred_region
        %p381 = scmp.lt.s32.totalorder %s19, 1
        %s382 = scalar_select %p381, %s19, 1
        %s383 = smul.addr %s382, 8
        %s384 = scalar_lea.vmem %s0, %s383
      $region68: #{transformer_encoder.3} parent=63 // pred_fallthru
        _
    $region64: #{transformer_encoder.3} parent=5 // pred_fallthru
      _
    %p385 = scmp.le.s32.totalorder 1, %s19
    %p386 = scmp.lt.s32.totalorder %s19, 3
    %p387 = pnand %p385, %p386
    %p388 = pneg %p387
    // Predicated region
    $region69: #{transformer_encoder.3} parent=5 // pred_check
      _
    $region70: #{transformer_encoder.3} parent=5 // pred_check_branch
      %390 = sbr.rel (%p387) target = $region72
    $region71: #{transformer_encoder.3} parent=5 // pred_region
      %s391 = ssub.s32 %s19, 1
      %p392 = scmp.lt.s32.totalorder %s24, 1
      %s393 = scalar_select %p392, %s24, 1
      %s394 = smul.addr %s393, 8
      %s395 = scalar_lea.vmem %s0, %s394
      %p396 = pneg %p45
      %p397 = pneg %p42
      %p398 = pneg %p66
      %p399 = pneg %p63
      %p400 = pneg %p87
      %p401 = pneg %p84
      %p402 = pneg %p108
      %p403 = pneg %p105
      %p404 = pneg %p129
      %p405 = pneg %p126
      %p406 = pneg %p150
      %p407 = pneg %p147
      %p408 = pneg %p171
      %p409 = pneg %p168
      %p410 = pneg %p192
      %p411 = pneg %p189
      %p412 = pneg %p213
      %p413 = pneg %p210
      %p414 = pneg %p234
      %p415 = pneg %p231
      %p416 = pneg %p255
      %p417 = pneg %p252
      %p418 = pneg %p276
      %p419 = pneg %p273
      %p420 = pneg %p297
      %p421 = pneg %p294
      %p422 = pneg %p323
      %p423 = pneg %p320
      %p424 = scmp.lt.s32.totalorder %s24, 1
      %s425 = scalar_select %p424, %s24, 1
      %s426 = smul.addr %s425, 8
      %s427 = scalar_lea.vmem %s13, %s426
      %p428 = scmp.lt.s32.totalorder %s24, 1
      %s429 = scalar_select %p428, %s24, 1
      %s430 = smul.addr %s429, 8
      %s431 = scalar_lea.vmem %s0, %s430
      %p432 = scmp.lt.s32.totalorder %s24, 1
      %s433 = scalar_select %p432, %s24, 1
      %s434 = smul.addr %s433, 8
      %s435 = scalar_lea.vmem %s13, %s434
      %v437 = vld [vmem:[%s431] sm:$0xff]
      %v438 = vpack.c.bf16 %v437, %v437
      %v439 = vld [vmem:[%s1] sm:$0xff]
      %v440 = vld [vmem:[%s1 + $0x8] sm:$0xf]
      %v441 = vld [vmem:[%s1 + $0xc] sm:$0xff]
      %v442 = vld [vmem:[%s1 + $0x14] sm:$0xf]
      %v443 = vld [vmem:[%s1 + $0x18] sm:$0xff]
      %v444 = vld [vmem:[%s1 + $0x20] sm:$0xf]
      %v445 = vld [vmem:[%s1 + $0x24] sm:$0xff]
      %v446 = vld [vmem:[%s1 + $0x2c] sm:$0xf]
      %v447 = vld [vmem:[%s1 + $0x30] sm:$0xff]
      %v448 = vld [vmem:[%s1 + $0x38] sm:$0xf]
      %v449 = vld [vmem:[%s1 + $0x3c] sm:$0xff]
      %v450 = vld [vmem:[%s1 + $0x44] sm:$0xf]
      %v451 = vld [vmem:[%s1 + $0x48] sm:$0xff]
      %v452 = vld [vmem:[%s1 + $0x50] sm:$0xf]
      %v453 = vld [vmem:[%s1 + $0x54] sm:$0xff]
      %v454 = vld [vmem:[%s1 + $0x5c] sm:$0xf]
      %v455 = vld [vmem:[%s1 + $0x60] sm:$0xff]
      %v456 = vld [vmem:[%s1 + $0x68] sm:$0xf]
      %v457 = vld [vmem:[%s1 + $0x6c] sm:$0xff]
      %v458 = vld [vmem:[%s1 + $0x74] sm:$0xf]
      %v459 = vld [vmem:[%s1 + $0x78] sm:$0xff]
      %v460 = vld [vmem:[%s1 + $0x80] sm:$0xf]
      %v461 = vld [vmem:[%s1 + $0x84] sm:$0xff]
      %v462 = vld [vmem:[%s1 + $0x8c] sm:$0xf]
      %v463 = vld [vmem:[%s1 + $0x90] sm:$0xff]
      %v464 = vld [vmem:[%s1 + $0x98] sm:$0xf]
      %v465 = vld [vmem:[%s1 + $0x9c] sm:$0xff]
      %v466 = vld [vmem:[%s1 + $0xa4] sm:$0xf]
      %v467 = vld [vmem:[%s1 + $0xa8] sm:$0xff]
      %v468 = vld [vmem:[%s1 + $0xb0] sm:$0xf]
      %v469 = vld [vmem:[%s1 + $0xb4] sm:$0xff]
      %v470 = vld [vmem:[%s1 + $0xbc] sm:$0xf]
      %v471 = vld [vmem:[%s2] sm:$0x7]
      %v473 = vlaneseq
      %v474 = vshrl.u32 %v473, 7
      %v475 = vsub.s32 0, %v474
      %v476 = vrot.slane %v471, %v475
      %v477 = vlaneseq
      %v478 = vshrl.u32 %v477, 7
      %v479 = vsub.s32 1, %v478
      %v480 = vrot.slane %v471, %v479
      %v481 = vlaneseq
      %v482 = vshrl.u32 %v481, 7
      %v483 = vsub.s32 2, %v482
      %v484 = vrot.slane %v471, %v483
      %v520 = vunpack.c.l.b16 %v439
      %v521 = vunpack.c.h.b16 %v439
      %v522 = vunpack.c.l.b16 %v440
      %v523 = vunpack.c.l.b16 %v441
      %v524 = vunpack.c.h.b16 %v441
      %v525 = vunpack.c.l.b16 %v442
      %v526 = vunpack.c.l.b16 %v443
      %v527 = vunpack.c.h.b16 %v443
      %v528 = vunpack.c.l.b16 %v444
      %v529 = vunpack.c.l.b16 %v445
      %v530 = vunpack.c.h.b16 %v445
      %v531 = vunpack.c.l.b16 %v446
      %v532 = vunpack.c.l.b16 %v447
      %v533 = vunpack.c.h.b16 %v447
      %v534 = vunpack.c.l.b16 %v448
      %v535 = vunpack.c.l.b16 %v449
      %v536 = vunpack.c.h.b16 %v449
      %v537 = vunpack.c.l.b16 %v450
      %v538 = vunpack.c.l.b16 %v451
      %v539 = vunpack.c.h.b16 %v451
      %v540 = vunpack.c.l.b16 %v452
      %v541 = vunpack.c.l.b16 %v453
      %v542 = vunpack.c.h.b16 %v453
      %v543 = vunpack.c.l.b16 %v454
      %v544 = vunpack.c.l.b16 %v455
      %v545 = vunpack.c.h.b16 %v455
      %v546 = vunpack.c.l.b16 %v456
      %v547 = vunpack.c.l.b16 %v457
      %v548 = vunpack.c.h.b16 %v457
      %v549 = vunpack.c.l.b16 %v458
      %v550 = vunpack.c.l.b16 %v459
      %v551 = vunpack.c.h.b16 %v459
      %v552 = vunpack.c.l.b16 %v460
      %v553 = vunpack.c.l.b16 %v461
      %v554 = vunpack.c.h.b16 %v461
      %v555 = vunpack.c.l.b16 %v462
      %v556 = vunpack.c.l.b16 %v463
      %v557 = vunpack.c.h.b16 %v463
      %v558 = vunpack.c.l.b16 %v464
      %v559 = vunpack.c.l.b16 %v465
      %v560 = vunpack.c.h.b16 %v465
      %v561 = vunpack.c.l.b16 %v466
      %v562 = vunpack.c.l.b16 %v467
      %v563 = vunpack.c.h.b16 %v467
      %v564 = vunpack.c.l.b16 %v468
      %v565 = vunpack.c.l.b16 %v469
      %v566 = vunpack.c.h.b16 %v469
      %v567 = vunpack.c.l.b16 %v470
      %v568 = vpack.c.b16 %v523, %v520
      %v569 = vpack.c.b16 %v524, %v521
      %v570 = vpack.c.b16 %v525, %v522
      %v571 = vpack.c.b16 %v529, %v526
      %v572 = vpack.c.b16 %v530, %v527
      %v573 = vpack.c.b16 %v531, %v528
      %v574 = vpack.c.b16 %v535, %v532
      %v575 = vpack.c.b16 %v536, %v533
      %v576 = vpack.c.b16 %v537, %v534
      %v577 = vpack.c.b16 %v541, %v538
      %v578 = vpack.c.b16 %v542, %v539
      %v579 = vpack.c.b16 %v543, %v540
      %v580 = vpack.c.b16 %v547, %v544
      %v581 = vpack.c.b16 %v548, %v545
      %v582 = vpack.c.b16 %v549, %v546
      %v583 = vpack.c.b16 %v553, %v550
      %v584 = vpack.c.b16 %v554, %v551
      %v585 = vpack.c.b16 %v555, %v552
      %v586 = vpack.c.b16 %v559, %v556
      %v587 = vpack.c.b16 %v560, %v557
      %v588 = vpack.c.b16 %v561, %v558
      %v589 = vpack.c.b16 %v565, %v562
      %v590 = vpack.c.b16 %v566, %v563
      %v591 = vpack.c.b16 %v567, %v564
      %616 = vmatprep.subr.bf16.mxu0 %v569
      %617 = vmatpush1.bf16.msra.mxu0 %v568
      %618 = vmatprep.subr.bf16.mxu0 %v572
      %619 = vmatpush1.bf16.msra.mxu0 %v571
      %620 = vmatprep.subr.bf16.mxu0 %v575
      %621 = vmatpush1.bf16.msra.mxu0 %v574
      %622 = vmatprep.subr.bf16.mxu0 %v578
      %623 = vmatpush1.bf16.msra.mxu0 %v577
      %624 = vmatprep.subr.bf16.mxu0 %v581
      %625 = vmatpush1.bf16.msra.mxu0 %v580
      %626 = vmatprep.subr.bf16.mxu0 %v584
      %627 = vmatpush1.bf16.msra.mxu0 %v583
      %628 = vmatprep.subr.bf16.mxu0 %v587
      %629 = vmatpush1.bf16.msra.mxu0 %v586
      %630 = vmatprep.subr.bf16.mxu0 %v590
      %631 = vmatpush1.bf16.msra.mxu0 %v589
      %632 = vmatprep.subr.bf16.mxu0 0
      %633 = vmatpush1.bf16.msra.mxu0 0
      %634 = vmatprep.subr.bf16.mxu0 0
      %635 = vmatpush1.bf16.msra.mxu0 0
      %636 = vmatprep.subr.bf16.mxu0 0
      %637 = vmatpush1.bf16.msra.mxu0 0
      %638 = vmatprep.subr.bf16.mxu0 0
      %639 = vmatpush1.bf16.msra.mxu0 0
      %640 = vmatprep.subr.bf16.mxu0 0
      %641 = vmatpush1.bf16.msra.mxu0 0
      %642 = vmatprep.subr.bf16.mxu0 0
      %643 = vmatpush1.bf16.msra.mxu0 0
      %644 = vmatprep.subr.bf16.mxu0 0
      %645 = vmatpush1.bf16.msra.mxu0 0
      %646 = vmatprep.subr.bf16.mxu0 0
      %647 = vmatpush1.bf16.msra.mxu0 0
      %648 = vmatprep.mubr.bf16.mxu0 0
      %649 = vmatmul.mubr.bf16.gmra.mrb[0].mxu0 %v438
      %v650 = vpop.f32.mrb[0].mxu0
      %v651 = vadd.f32 %v476, %v650
      %v652 = vpop.f32.mrb[0].mxu0
      %v653 = vadd.f32 %v480, %v652
      %v654 = vpop.f32.mrb[0].mxu0
      %v655 = vpop.f32.mrb[0].mxu0
      %656 = vdwg.mxu0
      %657 = vmatprep.subr.bf16.mxu0 0
      %658 = vmatpush1.bf16.msra.mxu0 %v570
      %659 = vmatprep.subr.bf16.mxu0 0
      %660 = vmatpush1.bf16.msra.mxu0 %v573
      %661 = vmatprep.subr.bf16.mxu0 0
      %662 = vmatpush1.bf16.msra.mxu0 %v576
      %663 = vmatprep.subr.bf16.mxu0 0
      %664 = vmatpush1.bf16.msra.mxu0 %v579
      %665 = vmatprep.subr.bf16.mxu0 0
      %666 = vmatpush1.bf16.msra.mxu0 %v582
      %667 = vmatprep.subr.bf16.mxu0 0
      %668 = vmatpush1.bf16.msra.mxu0 %v585
      %669 = vmatprep.subr.bf16.mxu0 0
      %670 = vmatpush1.bf16.msra.mxu0 %v588
      %671 = vmatprep.subr.bf16.mxu0 0
      %672 = vmatpush1.bf16.msra.mxu0 %v591
      %673 = vmatprep.subr.bf16.mxu0 0
      %674 = vmatpush1.bf16.msra.mxu0 0
      %675 = vmatprep.subr.bf16.mxu0 0
      %676 = vmatpush1.bf16.msra.mxu0 0
      %677 = vmatprep.subr.bf16.mxu0 0
      %678 = vmatpush1.bf16.msra.mxu0 0
      %679 = vmatprep.subr.bf16.mxu0 0
      %680 = vmatpush1.bf16.msra.mxu0 0
      %681 = vmatprep.subr.bf16.mxu0 0
      %682 = vmatpush1.bf16.msra.mxu0 0
      %683 = vmatprep.subr.bf16.mxu0 0
      %684 = vmatpush1.bf16.msra.mxu0 0
      %685 = vmatprep.subr.bf16.mxu0 0
      %686 = vmatpush1.bf16.msra.mxu0 0
      %687 = vmatprep.subr.bf16.mxu0 0
      %688 = vmatpush1.bf16.msra.mxu0 0
      %689 = vmatprep.mubr.bf16.mxu0 0
      %690 = vmatmul.mubr.bf16.gmra.mrb[0].mxu0 %v438
      %v691 = vpop.f32.mrb[0].mxu0
      %v692 = vadd.f32 %v484, %v691
      %v693 = vpop.f32.mrb[0].mxu0
      %v694 = vpop.f32.mrb[0].mxu0
      %v695 = vpop.f32.mrb[0].mxu0
      %696 = vdwg.mxu0
      %v697 = vpack.c.bf16 %v651, %v651
      %v698 = vpack.c.bf16 %v653, %v653
      %v699 = vpack.c.bf16 %v692, %v692
      %vm700 = vcmask 261120
      %v702 = vsel %vm700, %v697, 0
      %v705 = vsel %vm700, %v698, 0
      %707 = vmatprep.subr.bf16.mxu0 0
      %708 = vmatpush1.bf16.xpose.msra.mxu0 %v705
      %709 = vmatprep.subr.bf16.mxu0 0
      %710 = vmatpush1.bf16.xpose.msra.mxu0 0
      %711 = vmatprep.subr.bf16.mxu0 0
      %712 = vmatpush1.bf16.xpose.msra.mxu0 0
      %713 = vmatprep.subr.bf16.mxu0 0
      %714 = vmatpush1.bf16.xpose.msra.mxu0 0
      %715 = vmatprep.subr.bf16.mxu0 0
      %716 = vmatpush1.bf16.xpose.msra.mxu0 0
      %717 = vmatprep.subr.bf16.mxu0 0
      %718 = vmatpush1.bf16.xpose.msra.mxu0 0
      %719 = vmatprep.subr.bf16.mxu0 0
      %720 = vmatpush1.bf16.xpose.msra.mxu0 0
      %721 = vmatprep.subr.bf16.mxu0 0
      %722 = vmatpush1.bf16.xpose.msra.mxu0 0
      %723 = vmatprep.subr.bf16.mxu0 0
      %724 = vmatpush1.bf16.xpose.msra.mxu0 0
      %725 = vmatprep.subr.bf16.mxu0 0
      %726 = vmatpush1.bf16.xpose.msra.mxu0 0
      %727 = vmatprep.subr.bf16.mxu0 0
      %728 = vmatpush1.bf16.xpose.msra.mxu0 0
      %729 = vmatprep.subr.bf16.mxu0 0
      %730 = vmatpush1.bf16.xpose.msra.mxu0 0
      %731 = vmatprep.subr.bf16.mxu0 0
      %732 = vmatpush1.bf16.xpose.msra.mxu0 0
      %733 = vmatprep.subr.bf16.mxu0 0
      %734 = vmatpush1.bf16.xpose.msra.mxu0 0
      %735 = vmatprep.subr.bf16.mxu0 0
      %736 = vmatpush1.bf16.xpose.msra.mxu0 0
      %737 = vmatprep.subr.bf16.mxu0 0
      %738 = vmatpush1.bf16.xpose.msra.mxu0 0
      %739 = vmatprep.mubr.bf16.mxu0 0
      %740 = vmatmul.mubr.bf16.gmra.mrb[0].mxu0 %v702
      %v741 = vpop.f32.mrb[0].mxu0
      %v742 = vadd.f32 0.0, %v741
      %v743 = vpop.f32.mrb[0].mxu0
      %v744 = vpop.f32.mrb[0].mxu0
      %v745 = vpop.f32.mrb[0].mxu0
      %746 = vdwg.mxu0
      %vm747 = vcmask 64512
      %v748 = vsel %vm747, %v742, -inf
      %749 = vmax.xlane.f32.xlu0 %v748
      %v750 = vpop.xlane.xlu0 %749
      %v751 = vsub.f32 %v742, %v750
      %v752 = vmul.f32 %v751, 1.442695
      %v753 = vpow.pop %v752
      %v754 = vsel %vm747, %v753, 0.0
      %755 = vadd.xlane.f32.xlu0 %v754
      %v756 = vpop.xlane.xlu0 %755
      %v757 = vrcp.pop %v756
      %v758 = vmul.f32 %v753, %v757
      %v759 = vpack.c.bf16 %v758, %v758
      %v761 = vsel %vm747, %v759, 0
      %vm763 = vcmask 1043456
      %v765 = vsel %vm763, %v699, 0
      %767 = vmatprep.subr.bf16.mxu0 0
      %768 = vmatpush1.bf16.msra.mxu0 %v765
      %769 = vmatprep.subr.bf16.mxu0 0
      %770 = vmatpush1.bf16.msra.mxu0 0
      %771 = vmatprep.subr.bf16.mxu0 0
      %772 = vmatpush1.bf16.msra.mxu0 0
      %773 = vmatprep.subr.bf16.mxu0 0
      %774 = vmatpush1.bf16.msra.mxu0 0
      %775 = vmatprep.subr.bf16.mxu0 0
      %776 = vmatpush1.bf16.msra.mxu0 0
      %777 = vmatprep.subr.bf16.mxu0 0
      %778 = vmatpush1.bf16.msra.mxu0 0
      %779 = vmatprep.subr.bf16.mxu0 0
      %780 = vmatpush1.bf16.msra.mxu0 0
      %781 = vmatprep.subr.bf16.mxu0 0
      %782 = vmatpush1.bf16.msra.mxu0 0
      %783 = vmatprep.subr.bf16.mxu0 0
      %784 = vmatpush1.bf16.msra.mxu0 0
      %785 = vmatprep.subr.bf16.mxu0 0
      %786 = vmatpush1.bf16.msra.mxu0 0
      %787 = vmatprep.subr.bf16.mxu0 0
      %788 = vmatpush1.bf16.msra.mxu0 0
      %789 = vmatprep.subr.bf16.mxu0 0
      %790 = vmatpush1.bf16.msra.mxu0 0
      %791 = vmatprep.subr.bf16.mxu0 0
      %792 = vmatpush1.bf16.msra.mxu0 0
      %793 = vmatprep.subr.bf16.mxu0 0
      %794 = vmatpush1.bf16.msra.mxu0 0
      %795 = vmatprep.subr.bf16.mxu0 0
      %796 = vmatpush1.bf16.msra.mxu0 0
      %797 = vmatprep.subr.bf16.mxu0 0
      %798 = vmatpush1.bf16.msra.mxu0 0
      %799 = vmatprep.mubr.bf16.mxu0 0
      %800 = vmatmul.mubr.bf16.gmra.mrb[0].mxu0 %v761
      %v801 = vpop.f32.mrb[0].mxu0
      %v802 = vadd.f32 0.0, %v801
      %v803 = vpop.f32.mrb[0].mxu0
      %v804 = vpop.f32.mrb[0].mxu0
      %v805 = vpop.f32.mrb[0].mxu0
      %806 = vdwg.mxu0
      %808 = vrot.lane.b32.xlu0 %v697, 96
      %v809 = vpop.permute.xlu0 %808
      %811 = vrot.lane.b32.xlu0 %v698, 96
      %v812 = vpop.permute.xlu0 %811
      %v814 = vsel %vm700, %v809, 0
      %v817 = vsel %vm700, %v812, 0
      %819 = vmatprep.subr.bf16.mxu0 0
      %820 = vmatpush1.bf16.xpose.msra.mxu0 %v817
      %821 = vmatprep.subr.bf16.mxu0 0
      %822 = vmatpush1.bf16.xpose.msra.mxu0 0
      %823 = vmatprep.subr.bf16.mxu0 0
      %824 = vmatpush1.bf16.xpose.msra.mxu0 0
      %825 = vmatprep.subr.bf16.mxu0 0
      %826 = vmatpush1.bf16.xpose.msra.mxu0 0
      %827 = vmatprep.subr.bf16.mxu0 0
      %828 = vmatpush1.bf16.xpose.msra.mxu0 0
      %829 = vmatprep.subr.bf16.mxu0 0
      %830 = vmatpush1.bf16.xpose.msra.mxu0 0
      %831 = vmatprep.subr.bf16.mxu0 0
      %832 = vmatpush1.bf16.xpose.msra.mxu0 0
      %833 = vmatprep.subr.bf16.mxu0 0
      %834 = vmatpush1.bf16.xpose.msra.mxu0 0
      %835 = vmatprep.subr.bf16.mxu0 0
      %836 = vmatpush1.bf16.xpose.msra.mxu0 0
      %837 = vmatprep.subr.bf16.mxu0 0
      %838 = vmatpush1.bf16.xpose.msra.mxu0 0
      %839 = vmatprep.subr.bf16.mxu0 0
      %840 = vmatpush1.bf16.xpose.msra.mxu0 0
      %841 = vmatprep.subr.bf16.mxu0 0
      %842 = vmatpush1.bf16.xpose.msra.mxu0 0
      %843 = vmatprep.subr.bf16.mxu0 0
      %844 = vmatpush1.bf16.xpose.msra.mxu0 0
      %845 = vmatprep.subr.bf16.mxu0 0
      %846 = vmatpush1.bf16.xpose.msra.mxu0 0
      %847 = vmatprep.subr.bf16.mxu0 0
      %848 = vmatpush1.bf16.xpose.msra.mxu0 0
      %849 = vmatprep.subr.bf16.mxu0 0
      %850 = vmatpush1.bf16.xpose.msra.mxu0 0
      %851 = vmatprep.mubr.bf16.mxu0 0
      %852 = vmatmul.mubr.bf16.gmra.mrb[0].mxu0 %v814
      %v853 = vpop.f32.mrb[0].mxu0
      %v854 = vadd.f32 0.0, %v853
      %v855 = vpop.f32.mrb[0].mxu0
      %v856 = vpop.f32.mrb[0].mxu0
      %v857 = vpop.f32.mrb[0].mxu0
      %858 = vdwg.mxu0
      %v859 = vsel %vm747, %v854, -inf
      %860 = vmax.xlane.f32.xlu0 %v859
      %v861 = vpop.xlane.xlu0 %860
      %v862 = vsub.f32 %v854, %v861
      %v863 = vmul.f32 %v862, 1.442695
      %v864 = vpow.pop %v863
      %v865 = vsel %vm747, %v864, 0.0
      %866 = vadd.xlane.f32.xlu0 %v865
      %v867 = vpop.xlane.xlu0 %866
      %v868 = vrcp.pop %v867
      %v869 = vmul.f32 %v864, %v868
      %v870 = vpack.c.bf16 %v869, %v869
      %872 = vrot.lane.b32.xlu0 %v699, 96
      %v873 = vpop.permute.xlu0 %872
      %v875 = vsel %vm747, %v870, 0
      %v878 = vsel %vm763, %v873, 0
      %880 = vmatprep.subr.bf16.mxu0 0
      %881 = vmatpush1.bf16.msra.mxu0 %v878
      %882 = vmatprep.subr.bf16.mxu0 0
      %883 = vmatpush1.bf16.msra.mxu0 0
      %884 = vmatprep.subr.bf16.mxu0 0
      %885 = vmatpush1.bf16.msra.mxu0 0
      %886 = vmatprep.subr.bf16.mxu0 0
      %887 = vmatpush1.bf16.msra.mxu0 0
      %888 = vmatprep.subr.bf16.mxu0 0
      %889 = vmatpush1.bf16.msra.mxu0 0
      %890 = vmatprep.subr.bf16.mxu0 0
      %891 = vmatpush1.bf16.msra.mxu0 0
      %892 = vmatprep.subr.bf16.mxu0 0
      %893 = vmatpush1.bf16.msra.mxu0 0
      %894 = vmatprep.subr.bf16.mxu0 0
      %895 = vmatpush1.bf16.msra.mxu0 0
      %896 = vmatprep.subr.bf16.mxu0 0
      %897 = vmatpush1.bf16.msra.mxu0 0
      %898 = vmatprep.subr.bf16.mxu0 0
      %899 = vmatpush1.bf16.msra.mxu0 0
      %900 = vmatprep.subr.bf16.mxu0 0
      %901 = vmatpush1.bf16.msra.mxu0 0
      %902 = vmatprep.subr.bf16.mxu0 0
      %903 = vmatpush1.bf16.msra.mxu0 0
      %904 = vmatprep.subr.bf16.mxu0 0
      %905 = vmatpush1.bf16.msra.mxu0 0
      %906 = vmatprep.subr.bf16.mxu0 0
      %907 = vmatpush1.bf16.msra.mxu0 0
      %908 = vmatprep.subr.bf16.mxu0 0
      %909 = vmatpush1.bf16.msra.mxu0 0
      %910 = vmatprep.subr.bf16.mxu0 0
      %911 = vmatpush1.bf16.msra.mxu0 0
      %912 = vmatprep.mubr.bf16.mxu0 0
      %913 = vmatmul.mubr.bf16.gmra.mrb[0].mxu0 %v875
      %v914 = vpop.f32.mrb[0].mxu0
      %v915 = vadd.f32 0.0, %v914
      %v916 = vpop.f32.mrb[0].mxu0
      %v917 = vpop.f32.mrb[0].mxu0
      %v918 = vpop.f32.mrb[0].mxu0
      %919 = vdwg.mxu0
      %920 = vrot.lane.b32.xlu0 %v697, 64
      %v921 = vpop.permute.xlu0 %920
      %922 = vrot.lane.b32.xlu0 %v698, 64
      %v923 = vpop.permute.xlu0 %922
      %v925 = vsel %vm700, %v921, 0
      %v928 = vsel %vm700, %v923, 0
      %930 = vmatprep.subr.bf16.mxu0 0
      %931 = vmatpush1.bf16.xpose.msra.mxu0 %v928
      %932 = vmatprep.subr.bf16.mxu0 0
      %933 = vmatpush1.bf16.xpose.msra.mxu0 0
      %934 = vmatprep.subr.bf16.mxu0 0
      %935 = vmatpush1.bf16.xpose.msra.mxu0 0
      %936 = vmatprep.subr.bf16.mxu0 0
      %937 = vmatpush1.bf16.xpose.msra.mxu0 0
      %938 = vmatprep.subr.bf16.mxu0 0
      %939 = vmatpush1.bf16.xpose.msra.mxu0 0
      %940 = vmatprep.subr.bf16.mxu0 0
      %941 = vmatpush1.bf16.xpose.msra.mxu0 0
      %942 = vmatprep.subr.bf16.mxu0 0
      %943 = vmatpush1.bf16.xpose.msra.mxu0 0
      %944 = vmatprep.subr.bf16.mxu0 0
      %945 = vmatpush1.bf16.xpose.msra.mxu0 0
      %946 = vmatprep.subr.bf16.mxu0 0
      %947 = vmatpush1.bf16.xpose.msra.mxu0 0
      %948 = vmatprep.subr.bf16.mxu0 0
      %949 = vmatpush1.bf16.xpose.msra.mxu0 0
      %950 = vmatprep.subr.bf16.mxu0 0
      %951 = vmatpush1.bf16.xpose.msra.mxu0 0
      %952 = vmatprep.subr.bf16.mxu0 0
      %953 = vmatpush1.bf16.xpose.msra.mxu0 0
      %954 = vmatprep.subr.bf16.mxu0 0
      %955 = vmatpush1.bf16.xpose.msra.mxu0 0
      %956 = vmatprep.subr.bf16.mxu0 0
      %957 = vmatpush1.bf16.xpose.msra.mxu0 0
      %958 = vmatprep.subr.bf16.mxu0 0
      %959 = vmatpush1.bf16.xpose.msra.mxu0 0
      %960 = vmatprep.subr.bf16.mxu0 0
      %961 = vmatpush1.bf16.xpose.msra.mxu0 0
      %962 = vmatprep.mubr.bf16.mxu0 0
      %963 = vmatmul.mubr.bf16.gmra.mrb[0].mxu0 %v925
      %v964 = vpop.f32.mrb[0].mxu0
      %v965 = vadd.f32 0.0, %v964
      %v966 = vpop.f32.mrb[0].mxu0
      %v967 = vpop.f32.mrb[0].mxu0
      %v968 = vpop.f32.mrb[0].mxu0
      %969 = vdwg.mxu0
      %v970 = vsel %vm747, %v965, -inf
      %971 = vmax.xlane.f32.xlu0 %v970
      %v972 = vpop.xlane.xlu0 %971
      %v973 = vsub.f32 %v965, %v972
      %v974 = vmul.f32 %v973, 1.442695
      %v975 = vpow.pop %v974
      %v976 = vsel %vm747, %v975, 0.0
      %977 = vadd.xlane.f32.xlu0 %v976
      %v978 = vpop.xlane.xlu0 %977
      %v979 = vrcp.pop %v978
      %v980 = vmul.f32 %v975, %v979
      %v981 = vpack.c.bf16 %v980, %v980
      %982 = vrot.lane.b32.xlu0 %v699, 64
      %v983 = vpop.permute.xlu0 %982
      %v985 = vsel %vm747, %v981, 0
      %v988 = vsel %vm763, %v983, 0
      %990 = vmatprep.subr.bf16.mxu0 0
      %991 = vmatpush1.bf16.msra.mxu0 %v988
      %992 = vmatprep.subr.bf16.mxu0 0
      %993 = vmatpush1.bf16.msra.mxu0 0
      %994 = vmatprep.subr.bf16.mxu0 0
      %995 = vmatpush1.bf16.msra.mxu0 0
      %996 = vmatprep.subr.bf16.mxu0 0
      %997 = vmatpush1.bf16.msra.mxu0 0
      %998 = vmatprep.subr.bf16.mxu0 0
      %999 = vmatpush1.bf16.msra.mxu0 0
      %1000 = vmatprep.subr.bf16.mxu0 0
      %1001 = vmatpush1.bf16.msra.mxu0 0
      %1002 = vmatprep.subr.bf16.mxu0 0
      %1003 = vmatpush1.bf16.msra.mxu0 0
      %1004 = vmatprep.subr.bf16.mxu0 0
      %1005 = vmatpush1.bf16.msra.mxu0 0
      %1006 = vmatprep.subr.bf16.mxu0 0
      %1007 = vmatpush1.bf16.msra.mxu0 0
      %1008 = vmatprep.subr.bf16.mxu0 0
      %1009 = vmatpush1.bf16.msra.mxu0 0
      %1010 = vmatprep.subr.bf16.mxu0 0
      %1011 = vmatpush1.bf16.msra.mxu0 0
      %1012 = vmatprep.subr.bf16.mxu0 0
      %1013 = vmatpush1.bf16.msra.mxu0 0
      %1014 = vmatprep.subr.bf16.mxu0 0
      %1015 = vmatpush1.bf16.msra.mxu0 0
      %1016 = vmatprep.subr.bf16.mxu0 0
      %1017 = vmatpush1.bf16.msra.mxu0 0
      %1018 = vmatprep.subr.bf16.mxu0 0
      %1019 = vmatpush1.bf16.msra.mxu0 0
      %1020 = vmatprep.subr.bf16.mxu0 0
      %1021 = vmatpush1.bf16.msra.mxu0 0
      %1022 = vmatprep.mubr.bf16.mxu0 0
      %1023 = vmatmul.mubr.bf16.gmra.mrb[0].mxu0 %v985
      %v1024 = vpop.f32.mrb[0].mxu0
      %v1025 = vadd.f32 0.0, %v1024
      %v1026 = vpop.f32.mrb[0].mxu0
      %v1027 = vpop.f32.mrb[0].mxu0
      %v1028 = vpop.f32.mrb[0].mxu0
      %1029 = vdwg.mxu0
      %1030 = vrot.lane.b32.xlu0 %v697, 32
      %v1031 = vpop.permute.xlu0 %1030
      %1032 = vrot.lane.b32.xlu0 %v698, 32
      %v1033 = vpop.permute.xlu0 %1032
      %v1035 = vsel %vm700, %v1031, 0
      %v1038 = vsel %vm700, %v1033, 0
      %1040 = vmatprep.subr.bf16.mxu0 0
      %1041 = vmatpush1.bf16.xpose.msra.mxu0 %v1038
      %1042 = vmatprep.subr.bf16.mxu0 0
      %1043 = vmatpush1.bf16.xpose.msra.mxu0 0
      %1044 = vmatprep.subr.bf16.mxu0 0
      %1045 = vmatpush1.bf16.xpose.msra.mxu0 0
      %1046 = vmatprep.subr.bf16.mxu0 0
      %1047 = vmatpush1.bf16.xpose.msra.mxu0 0
      %1048 = vmatprep.subr.bf16.mxu0 0
      %1049 = vmatpush1.bf16.xpose.msra.mxu0 0
      %1050 = vmatprep.subr.bf16.mxu0 0
      %1051 = vmatpush1.bf16.xpose.msra.mxu0 0
      %1052 = vmatprep.subr.bf16.mxu0 0
      %1053 = vmatpush1.bf16.xpose.msra.mxu0 0
      %1054 = vmatprep.subr.bf16.mxu0 0
      %1055 = vmatpush1.bf16.xpose.msra.mxu0 0
      %1056 = vmatprep.subr.bf16.mxu0 0
      %1057 = vmatpush1.bf16.xpose.msra.mxu0 0
      %1058 = vmatprep.subr.bf16.mxu0 0
      %1059 = vmatpush1.bf16.xpose.msra.mxu0 0
      %1060 = vmatprep.subr.bf16.mxu0 0
      %1061 = vmatpush1.bf16.xpose.msra.mxu0 0
      %1062 = vmatprep.subr.bf16.mxu0 0
      %1063 = vmatpush1.bf16.xpose.msra.mxu0 0
      %1064 = vmatprep.subr.bf16.mxu0 0
      %1065 = vmatpush1.bf16.xpose.msra.mxu0 0
      %1066 = vmatprep.subr.bf16.mxu0 0
      %1067 = vmatpush1.bf16.xpose.msra.mxu0 0
      %1068 = vmatprep.subr.bf16.mxu0 0
      %1069 = vmatpush1.bf16.xpose.msra.mxu0 0
      %1070 = vmatprep.subr.bf16.mxu0 0
      %1071 = vmatpush1.bf16.xpose.msra.mxu0 0
      %1072 = vmatprep.mubr.bf16.mxu0 0
      %1073 = vmatmul.mubr.bf16.gmra.mrb[0].mxu0 %v1035
      %v1074 = vpop.f32.mrb[0].mxu0
      %v1075 = vadd.f32 0.0, %v1074
      %v1076 = vpop.f32.mrb[0].mxu0
      %v1077 = vpop.f32.mrb[0].mxu0
      %v1078 = vpop.f32.mrb[0].mxu0
      %1079 = vdwg.mxu0
      %v1080 = vsel %vm747, %v1075, -inf
      %1081 = vmax.xlane.f32.xlu0 %v1080
      %v1082 = vpop.xlane.xlu0 %1081
      %v1083 = vsub.f32 %v1075, %v1082
      %v1084 = vmul.f32 %v1083, 1.442695
      %v1085 = vpow.pop %v1084
      %v1086 = vsel %vm747, %v1085, 0.0
      %1087 = vadd.xlane.f32.xlu0 %v1086
      %v1088 = vpop.xlane.xlu0 %1087
      %v1089 = vrcp.pop %v1088
      %v1090 = vmul.f32 %v1085, %v1089
      %v1091 = vpack.c.bf16 %v1090, %v1090
      %1092 = vrot.lane.b32.xlu0 %v699, 32
      %v1093 = vpop.permute.xlu0 %1092
      %v1095 = vsel %vm747, %v1091, 0
      %v1098 = vsel %vm763, %v1093, 0
      %1100 = vmatprep.subr.bf16.mxu0 0
      %1101 = vmatpush1.bf16.msra.mxu0 %v1098
      %1102 = vmatprep.subr.bf16.mxu0 0
      %1103 = vmatpush1.bf16.msra.mxu0 0
      %1104 = vmatprep.subr.bf16.mxu0 0
      %1105 = vmatpush1.bf16.msra.mxu0 0
      %1106 = vmatprep.subr.bf16.mxu0 0
      %1107 = vmatpush1.bf16.msra.mxu0 0
      %1108 = vmatprep.subr.bf16.mxu0 0
      %1109 = vmatpush1.bf16.msra.mxu0 0
      %1110 = vmatprep.subr.bf16.mxu0 0
      %1111 = vmatpush1.bf16.msra.mxu0 0
      %1112 = vmatprep.subr.bf16.mxu0 0
      %1113 = vmatpush1.bf16.msra.mxu0 0
      %1114 = vmatprep.subr.bf16.mxu0 0
      %1115 = vmatpush1.bf16.msra.mxu0 0
      %1116 = vmatprep.subr.bf16.mxu0 0
      %1117 = vmatpush1.bf16.msra.mxu0 0
      %1118 = vmatprep.subr.bf16.mxu0 0
      %1119 = vmatpush1.bf16.msra.mxu0 0
      %1120 = vmatprep.subr.bf16.mxu0 0
      %1121 = vmatpush1.bf16.msra.mxu0 0
      %1122 = vmatprep.subr.bf16.mxu0 0
      %1123 = vmatpush1.bf16.msra.mxu0 0
      %1124 = vmatprep.subr.bf16.mxu0 0
      %1125 = vmatpush1.bf16.msra.mxu0 0
      %1126 = vmatprep.subr.bf16.mxu0 0
      %1127 = vmatpush1.bf16.msra.mxu0 0
      %1128 = vmatprep.subr.bf16.mxu0 0
      %1129 = vmatpush1.bf16.msra.mxu0 0
      %1130 = vmatprep.subr.bf16.mxu0 0
      %1131 = vmatpush1.bf16.msra.mxu0 0
      %1132 = vmatprep.mubr.bf16.mxu0 0
      %1133 = vmatmul.mubr.bf16.gmra.mrb[0].mxu0 %v1095
      %v1134 = vpop.f32.mrb[0].mxu0
      %v1135 = vadd.f32 0.0, %v1134
      %v1136 = vpop.f32.mrb[0].mxu0
      %v1137 = vpop.f32.mrb[0].mxu0
      %v1138 = vpop.f32.mrb[0].mxu0
      %1139 = vdwg.mxu0
      %1141 = vrot.lane.b32.xlu0 %v915, 32
      %v1142 = vpop.permute.xlu0 %1141
      %1145 = vrot.lane.b32.xlu0 %v1025, 64
      %v1146 = vpop.permute.xlu0 %1145
      %1149 = vrot.lane.b32.xlu0 %v1135, 96
      %v1150 = vpop.permute.xlu0 %1149
      %v1152 = vsel %vm700, %v802, %v1142
      %vm1153 = vcmask 523264
      %v1154 = vsel %vm1153, %v1152, %v1146
      %vm1155 = vcmask 785408
      %v1156 = vsel %vm1155, %v1154, %v1150
      %v1157 = vpack.c.bf16 %v1156, %v1156
      %v1158 = vld [vmem:[%s3] sm:$0xf]
      %v1159 = vld [vmem:[%s3 + $0x4] sm:$0xf]
      %v1160 = vld [vmem:[%s3 + $0x8] sm:$0xf]
      %v1161 = vld [vmem:[%s3 + $0xc] sm:$0xf]
      %v1162 = vld [vmem:[%s3 + $0x10] sm:$0xf]
      %v1163 = vld [vmem:[%s3 + $0x14] sm:$0xf]
      %v1164 = vld [vmem:[%s3 + $0x18] sm:$0xf]
      %v1165 = vld [vmem:[%s3 + $0x1c] sm:$0xf]
      %v1166 = vld [vmem:[%s3 + $0x20] sm:$0xf]
      %v1167 = vld [vmem:[%s3 + $0x24] sm:$0xf]
      %v1168 = vld [vmem:[%s3 + $0x28] sm:$0xf]
      %v1169 = vld [vmem:[%s3 + $0x2c] sm:$0xf]
      %v1170 = vld [vmem:[%s3 + $0x30] sm:$0xf]
      %v1171 = vld [vmem:[%s3 + $0x34] sm:$0xf]
      %v1172 = vld [vmem:[%s3 + $0x38] sm:$0xf]
      %v1173 = vld [vmem:[%s3 + $0x3c] sm:$0xf]
      %v1174 = vld [vmem:[%s4] sm:$0x1]
      %v1176 = vlaneseq
      %v1177 = vshrl.u32 %v1176, 7
      %v1178 = vsub.s32 0, %v1177
      %v1179 = vrot.slane %v1174, %v1178
      %v1197 = vunpack.c.l.b16 %v1158
      %v1198 = vunpack.c.l.b16 %v1159
      %v1199 = vunpack.c.l.b16 %v1160
      %v1200 = vunpack.c.l.b16 %v1161
      %v1201 = vunpack.c.l.b16 %v1162
      %v1202 = vunpack.c.l.b16 %v1163
      %v1203 = vunpack.c.l.b16 %v1164
      %v1204 = vunpack.c.l.b16 %v1165
      %v1205 = vunpack.c.l.b16 %v1166
      %v1206 = vunpack.c.l.b16 %v1167
      %v1207 = vunpack.c.l.b16 %v1168
      %v1208 = vunpack.c.l.b16 %v1169
      %v1209 = vunpack.c.l.b16 %v1170
      %v1210 = vunpack.c.l.b16 %v1171
      %v1211 = vunpack.c.l.b16 %v1172
      %v1212 = vunpack.c.l.b16 %v1173
      %v1213 = vpack.c.b16 %v1198, %v1197
      %v1214 = vpack.c.b16 %v1200, %v1199
      %v1215 = vpack.c.b16 %v1202, %v1201
      %v1216 = vpack.c.b16 %v1204, %v1203
      %v1217 = vpack.c.b16 %v1206, %v1205
      %v1218 = vpack.c.b16 %v1208, %v1207
      %v1219 = vpack.c.b16 %v1210, %v1209
      %v1220 = vpack.c.b16 %v1212, %v1211
      %1229 = vmatprep.subr.bf16.mxu0 0
      %1230 = vmatpush1.bf16.msra.mxu0 %v1213
      %1231 = vmatprep.subr.bf16.mxu0 0
      %1232 = vmatpush1.bf16.msra.mxu0 %v1214
      %1233 = vmatprep.subr.bf16.mxu0 0
      %1234 = vmatpush1.bf16.msra.mxu0 %v1215
      %1235 = vmatprep.subr.bf16.mxu0 0
      %1236 = vmatpush1.bf16.msra.mxu0 %v1216
      %1237 = vmatprep.subr.bf16.mxu0 0
      %1238 = vmatpush1.bf16.msra.mxu0 %v1217
      %1239 = vmatprep.subr.bf16.mxu0 0
      %1240 = vmatpush1.bf16.msra.mxu0 %v1218
      %1241 = vmatprep.subr.bf16.mxu0 0
      %1242 = vmatpush1.bf16.msra.mxu0 %v1219
      %1243 = vmatprep.subr.bf16.mxu0 0
      %1244 = vmatpush1.bf16.msra.mxu0 %v1220
      %1245 = vmatprep.subr.bf16.mxu0 0
      %1246 = vmatpush1.bf16.msra.mxu0 0
      %1247 = vmatprep.subr.bf16.mxu0 0
      %1248 = vmatpush1.bf16.msra.mxu0 0
      %1249 = vmatprep.subr.bf16.mxu0 0
      %1250 = vmatpush1.bf16.msra.mxu0 0
      %1251 = vmatprep.subr.bf16.mxu0 0
      %1252 = vmatpush1.bf16.msra.mxu0 0
      %1253 = vmatprep.subr.bf16.mxu0 0
      %1254 = vmatpush1.bf16.msra.mxu0 0
      %1255 = vmatprep.subr.bf16.mxu0 0
      %1256 = vmatpush1.bf16.msra.mxu0 0
      %1257 = vmatprep.subr.bf16.mxu0 0
      %1258 = vmatpush1.bf16.msra.mxu0 0
      %1259 = vmatprep.subr.bf16.mxu0 0
      %1260 = vmatpush1.bf16.msra.mxu0 0
      %1261 = vmatprep.mubr.bf16.mxu0 0
      %1262 = vmatmul.mubr.bf16.gmra.mrb[0].mxu0 %v1157
      %v1263 = vpop.f32.mrb[0].mxu0
      %v1264 = vadd.f32 %v1179, %v1263
      %v1265 = vpop.f32.mrb[0].mxu0
      %v1266 = vpop.f32.mrb[0].mxu0
      %v1267 = vpop.f32.mrb[0].mxu0
      %1268 = vdwg.mxu0
      %v1269 = vadd.f32 %v437, %v1264
      %1270 = vadd.xlane.f32.xlu0 %v1269
      %v1271 = vpop.xlane.xlu0 %1270
      %v1272 = vrcp.pop 128.0
      %v1273 = vmul.f32 %v1271, %v1272
      %v1274 = vsub.f32 %v1269, %v1273
      %v1275 = vmul.f32 %v1274, %v1274
      %1276 = vadd.xlane.f32.xlu0 %v1275
      %v1277 = vpop.xlane.xlu0 %1276
      %v1278 = vmul.f32 %v1277, %v1272
      %v1279 = vadd.f32 %v1278, 1e-05
      %v1280 = vrsqrt.pop %v1279
      %v1281 = vmul.f32 %v1274, %v1280
      %v1282 = vld [vmem:[%s5] sm:$0x1]
      %v1284 = vlaneseq
      %v1285 = vshrl.u32 %v1284, 7
      %v1286 = vsub.s32 0, %v1285
      %v1287 = vrot.slane %v1282, %v1286
      %v1289 = vmul.f32 %v1281, %v1287
      %v1290 = vld [vmem:[%s6] sm:$0x1]
      %v1292 = vlaneseq
      %v1293 = vshrl.u32 %v1292, 7
      %v1294 = vsub.s32 0, %v1293
      %v1295 = vrot.slane %v1290, %v1294
      %v1297 = vadd.f32 %v1289, %v1295
      %v1298 = vpack.c.bf16 %v1297, %v1297
      %v1299 = vld [vmem:[%s7] sm:$0xff]
      %v1300 = vld [vmem:[%s7 + $0x8] sm:$0xff]
      %v1301 = vld [vmem:[%s7 + $0x10] sm:$0xff]
      %v1302 = vld [vmem:[%s7 + $0x18] sm:$0xff]
      %v1303 = vld [vmem:[%s7 + $0x20] sm:$0xff]
      %v1304 = vld [vmem:[%s7 + $0x28] sm:$0xff]
      %v1305 = vld [vmem:[%s7 + $0x30] sm:$0xff]
      %v1306 = vld [vmem:[%s7 + $0x38] sm:$0xff]
      %v1307 = vld [vmem:[%s7 + $0x40] sm:$0xff]
      %v1308 = vld [vmem:[%s7 + $0x48] sm:$0xff]
      %v1309 = vld [vmem:[%s7 + $0x50] sm:$0xff]
      %v1310 = vld [vmem:[%s7 + $0x58] sm:$0xff]
      %v1311 = vld [vmem:[%s7 + $0x60] sm:$0xff]
      %v1312 = vld [vmem:[%s7 + $0x68] sm:$0xff]
      %v1313 = vld [vmem:[%s7 + $0x70] sm:$0xff]
      %v1314 = vld [vmem:[%s7 + $0x78] sm:$0xff]
      %v1315 = vld [vmem:[%s8] sm:$0x3]
      %v1317 = vlaneseq
      %v1318 = vshrl.u32 %v1317, 7
      %v1319 = vsub.s32 0, %v1318
      %v1320 = vrot.slane %v1315, %v1319
      %v1321 = vlaneseq
      %v1322 = vshrl.u32 %v1321, 7
      %v1323 = vsub.s32 1, %v1322
      %v1324 = vrot.slane %v1315, %v1323
      %v1343 = vunpack.c.l.b16 %v1299
      %v1344 = vunpack.c.h.b16 %v1299
      %v1345 = vunpack.c.l.b16 %v1300
      %v1346 = vunpack.c.h.b16 %v1300
      %v1347 = vunpack.c.l.b16 %v1301
      %v1348 = vunpack.c.h.b16 %v1301
      %v1349 = vunpack.c.l.b16 %v1302
      %v1350 = vunpack.c.h.b16 %v1302
      %v1351 = vunpack.c.l.b16 %v1303
      %v1352 = vunpack.c.h.b16 %v1303
      %v1353 = vunpack.c.l.b16 %v1304
      %v1354 = vunpack.c.h.b16 %v1304
      %v1355 = vunpack.c.l.b16 %v1305
      %v1356 = vunpack.c.h.b16 %v1305
      %v1357 = vunpack.c.l.b16 %v1306
      %v1358 = vunpack.c.h.b16 %v1306
      %v1359 = vunpack.c.l.b16 %v1307
      %v1360 = vunpack.c.h.b16 %v1307
      %v1361 = vunpack.c.l.b16 %v1308
      %v1362 = vunpack.c.h.b16 %v1308
      %v1363 = vunpack.c.l.b16 %v1309
      %v1364 = vunpack.c.h.b16 %v1309
      %v1365 = vunpack.c.l.b16 %v1310
      %v1366 = vunpack.c.h.b16 %v1310
      %v1367 = vunpack.c.l.b16 %v1311
      %v1368 = vunpack.c.h.b16 %v1311
      %v1369 = vunpack.c.l.b16 %v1312
      %v1370 = vunpack.c.h.b16 %v1312
      %v1371 = vunpack.c.l.b16 %v1313
      %v1372 = vunpack.c.h.b16 %v1313
      %v1373 = vunpack.c.l.b16 %v1314
      %v1374 = vunpack.c.h.b16 %v1314
      %v1375 = vpack.c.b16 %v1345, %v1343
      %v1376 = vpack.c.b16 %v1346, %v1344
      %v1377 = vpack.c.b16 %v1349, %v1347
      %v1378 = vpack.c.b16 %v1350, %v1348
      %v1379 = vpack.c.b16 %v1353, %v1351
      %v1380 = vpack.c.b16 %v1354, %v1352
      %v1381 = vpack.c.b16 %v1357, %v1355
      %v1382 = vpack.c.b16 %v1358, %v1356
      %v1383 = vpack.c.b16 %v1361, %v1359
      %v1384 = vpack.c.b16 %v1362, %v1360
      %v1385 = vpack.c.b16 %v1365, %v1363
      %v1386 = vpack.c.b16 %v1366, %v1364
      %v1387 = vpack.c.b16 %v1369, %v1367
      %v1388 = vpack.c.b16 %v1370, %v1368
      %v1389 = vpack.c.b16 %v1373, %v1371
      %v1390 = vpack.c.b16 %v1374, %v1372
      %1407 = vmatprep.subr.bf16.mxu0 %v1376
      %1408 = vmatpush1.bf16.msra.mxu0 %v1375
      %1409 = vmatprep.subr.bf16.mxu0 %v1378
      %1410 = vmatpush1.bf16.msra.mxu0 %v1377
      %1411 = vmatprep.subr.bf16.mxu0 %v1380
      %1412 = vmatpush1.bf16.msra.mxu0 %v1379
      %1413 = vmatprep.subr.bf16.mxu0 %v1382
      %1414 = vmatpush1.bf16.msra.mxu0 %v1381
      %1415 = vmatprep.subr.bf16.mxu0 %v1384
      %1416 = vmatpush1.bf16.msra.mxu0 %v1383
      %1417 = vmatprep.subr.bf16.mxu0 %v1386
      %1418 = vmatpush1.bf16.msra.mxu0 %v1385
      %1419 = vmatprep.subr.bf16.mxu0 %v1388
      %1420 = vmatpush1.bf16.msra.mxu0 %v1387
      %1421 = vmatprep.subr.bf16.mxu0 %v1390
      %1422 = vmatpush1.bf16.msra.mxu0 %v1389
      %1423 = vmatprep.subr.bf16.mxu0 0
      %1424 = vmatpush1.bf16.msra.mxu0 0
      %1425 = vmatprep.subr.bf16.mxu0 0
      %1426 = vmatpush1.bf16.msra.mxu0 0
      %1427 = vmatprep.subr.bf16.mxu0 0
      %1428 = vmatpush1.bf16.msra.mxu0 0
      %1429 = vmatprep.subr.bf16.mxu0 0
      %1430 = vmatpush1.bf16.msra.mxu0 0
      %1431 = vmatprep.subr.bf16.mxu0 0
      %1432 = vmatpush1.bf16.msra.mxu0 0
      %1433 = vmatprep.subr.bf16.mxu0 0
      %1434 = vmatpush1.bf16.msra.mxu0 0
      %1435 = vmatprep.subr.bf16.mxu0 0
      %1436 = vmatpush1.bf16.msra.mxu0 0
      %1437 = vmatprep.subr.bf16.mxu0 0
      %1438 = vmatpush1.bf16.msra.mxu0 0
      %1439 = vmatprep.mubr.bf16.mxu0 0
      %1440 = vmatmul.mubr.bf16.gmra.mrb[0].mxu0 %v1298
      %v1441 = vpop.f32.mrb[0].mxu0
      %v1442 = vadd.f32 %v1320, %v1441
      %v1443 = vpop.f32.mrb[0].mxu0
      %v1444 = vadd.f32 %v1324, %v1443
      %v1445 = vpop.f32.mrb[0].mxu0
      %v1446 = vpop.f32.mrb[0].mxu0
      %1447 = vdwg.mxu0
      %v1448 = vmax.f32 %v1442, 0.0
      %v1449 = vmax.f32 %v1444, 0.0
      %v1450 = vpack.c.bf16 %v1448, %v1448
      %v1451 = vpack.c.bf16 %v1449, %v1449
      %v1452 = vld [vmem:[%s9] sm:$0xf]
      %v1453 = vld [vmem:[%s9 + $0x4] sm:$0xf]
      %v1454 = vld [vmem:[%s9 + $0x8] sm:$0xf]
      %v1455 = vld [vmem:[%s9 + $0xc] sm:$0xf]
      %v1456 = vld [vmem:[%s9 + $0x10] sm:$0xf]
      %v1457 = vld [vmem:[%s9 + $0x14] sm:$0xf]
      %v1458 = vld [vmem:[%s9 + $0x18] sm:$0xf]
      %v1459 = vld [vmem:[%s9 + $0x1c] sm:$0xf]
      %v1460 = vld [vmem:[%s9 + $0x20] sm:$0xf]
      %v1461 = vld [vmem:[%s9 + $0x24] sm:$0xf]
      %v1462 = vld [vmem:[%s9 + $0x28] sm:$0xf]
      %v1463 = vld [vmem:[%s9 + $0x2c] sm:$0xf]
      %v1464 = vld [vmem:[%s9 + $0x30] sm:$0xf]
      %v1465 = vld [vmem:[%s9 + $0x34] sm:$0xf]
      %v1466 = vld [vmem:[%s9 + $0x38] sm:$0xf]
      %v1467 = vld [vmem:[%s9 + $0x3c] sm:$0xf]
      %v1468 = vld [vmem:[%s9 + $0x40] sm:$0xf]
      %v1469 = vld [vmem:[%s9 + $0x44] sm:$0xf]
      %v1470 = vld [vmem:[%s9 + $0x48] sm:$0xf]
      %v1471 = vld [vmem:[%s9 + $0x4c] sm:$0xf]
      %v1472 = vld [vmem:[%s9 + $0x50] sm:$0xf]
      %v1473 = vld [vmem:[%s9 + $0x54] sm:$0xf]
      %v1474 = vld [vmem:[%s9 + $0x58] sm:$0xf]
      %v1475 = vld [vmem:[%s9 + $0x5c] sm:$0xf]
      %v1476 = vld [vmem:[%s9 + $0x60] sm:$0xf]
      %v1477 = vld [vmem:[%s9 + $0x64] sm:$0xf]
      %v1478 = vld [vmem:[%s9 + $0x68] sm:$0xf]
      %v1479 = vld [vmem:[%s9 + $0x6c] sm:$0xf]
      %v1480 = vld [vmem:[%s9 + $0x70] sm:$0xf]
      %v1481 = vld [vmem:[%s9 + $0x74] sm:$0xf]
      %v1482 = vld [vmem:[%s9 + $0x78] sm:$0xf]
      %v1483 = vld [vmem:[%s9 + $0x7c] sm:$0xf]
      %v1484 = vld [vmem:[%s10] sm:$0x1]
      %v1486 = vlaneseq
      %v1487 = vshrl.u32 %v1486, 7
      %v1488 = vsub.s32 0, %v1487
      %v1489 = vrot.slane %v1484, %v1488
      %v1523 = vunpack.c.l.b16 %v1452
      %v1524 = vunpack.c.l.b16 %v1453
      %v1525 = vunpack.c.l.b16 %v1454
      %v1526 = vunpack.c.l.b16 %v1455
      %v1527 = vunpack.c.l.b16 %v1456
      %v1528 = vunpack.c.l.b16 %v1457
      %v1529 = vunpack.c.l.b16 %v1458
      %v1530 = vunpack.c.l.b16 %v1459
      %v1531 = vunpack.c.l.b16 %v1460
      %v1532 = vunpack.c.l.b16 %v1461
      %v1533 = vunpack.c.l.b16 %v1462
      %v1534 = vunpack.c.l.b16 %v1463
      %v1535 = vunpack.c.l.b16 %v1464
      %v1536 = vunpack.c.l.b16 %v1465
      %v1537 = vunpack.c.l.b16 %v1466
      %v1538 = vunpack.c.l.b16 %v1467
      %v1539 = vunpack.c.l.b16 %v1468
      %v1540 = vunpack.c.l.b16 %v1469
      %v1541 = vunpack.c.l.b16 %v1470
      %v1542 = vunpack.c.l.b16 %v1471
      %v1543 = vunpack.c.l.b16 %v1472
      %v1544 = vunpack.c.l.b16 %v1473
      %v1545 = vunpack.c.l.b16 %v1474
      %v1546 = vunpack.c.l.b16 %v1475
      %v1547 = vunpack.c.l.b16 %v1476
      %v1548 = vunpack.c.l.b16 %v1477
      %v1549 = vunpack.c.l.b16 %v1478
      %v1550 = vunpack.c.l.b16 %v1479
      %v1551 = vunpack.c.l.b16 %v1480
      %v1552 = vunpack.c.l.b16 %v1481
      %v1553 = vunpack.c.l.b16 %v1482
      %v1554 = vunpack.c.l.b16 %v1483
      %v1555 = vpack.c.b16 %v1524, %v1523
      %v1556 = vpack.c.b16 %v1526, %v1525
      %v1557 = vpack.c.b16 %v1528, %v1527
      %v1558 = vpack.c.b16 %v1530, %v1529
      %v1559 = vpack.c.b16 %v1532, %v1531
      %v1560 = vpack.c.b16 %v1534, %v1533
      %v1561 = vpack.c.b16 %v1536, %v1535
      %v1562 = vpack.c.b16 %v1538, %v1537
      %v1563 = vpack.c.b16 %v1540, %v1539
      %v1564 = vpack.c.b16 %v1542, %v1541
      %v1565 = vpack.c.b16 %v1544, %v1543
      %v1566 = vpack.c.b16 %v1546, %v1545
      %v1567 = vpack.c.b16 %v1548, %v1547
      %v1568 = vpack.c.b16 %v1550, %v1549
      %v1569 = vpack.c.b16 %v1552, %v1551
      %v1570 = vpack.c.b16 %v1554, %v1553
      %1587 = vmatprep.subr.bf16.mxu0 0
      %1588 = vmatpush1.bf16.msra.mxu0 %v1555
      %1589 = vmatprep.subr.bf16.mxu0 0
      %1590 = vmatpush1.bf16.msra.mxu0 %v1556
      %1591 = vmatprep.subr.bf16.mxu0 0
      %1592 = vmatpush1.bf16.msra.mxu0 %v1557
      %1593 = vmatprep.subr.bf16.mxu0 0
      %1594 = vmatpush1.bf16.msra.mxu0 %v1558
      %1595 = vmatprep.subr.bf16.mxu0 0
      %1596 = vmatpush1.bf16.msra.mxu0 %v1559
      %1597 = vmatprep.subr.bf16.mxu0 0
      %1598 = vmatpush1.bf16.msra.mxu0 %v1560
      %1599 = vmatprep.subr.bf16.mxu0 0
      %1600 = vmatpush1.bf16.msra.mxu0 %v1561
      %1601 = vmatprep.subr.bf16.mxu0 0
      %1602 = vmatpush1.bf16.msra.mxu0 %v1562
      %1603 = vmatprep.subr.bf16.mxu0 0
      %1604 = vmatpush1.bf16.msra.mxu0 %v1563
      %1605 = vmatprep.subr.bf16.mxu0 0
      %1606 = vmatpush1.bf16.msra.mxu0 %v1564
      %1607 = vmatprep.subr.bf16.mxu0 0
      %1608 = vmatpush1.bf16.msra.mxu0 %v1565
      %1609 = vmatprep.subr.bf16.mxu0 0
      %1610 = vmatpush1.bf16.msra.mxu0 %v1566
      %1611 = vmatprep.subr.bf16.mxu0 0
      %1612 = vmatpush1.bf16.msra.mxu0 %v1567
      %1613 = vmatprep.subr.bf16.mxu0 0
      %1614 = vmatpush1.bf16.msra.mxu0 %v1568
      %1615 = vmatprep.subr.bf16.mxu0 0
      %1616 = vmatpush1.bf16.msra.mxu0 %v1569
      %1617 = vmatprep.subr.bf16.mxu0 0
      %1618 = vmatpush1.bf16.msra.mxu0 %v1570
      %1619 = vmatprep.mubr.bf16.mxu0 %v1451
      %1620 = vmatmul.mubr.bf16.gmra.mrb[0].mxu0 %v1450
      %v1621 = vpop.f32.mrb[0].mxu0
      %v1622 = vadd.f32 %v1489, %v1621
      %v1623 = vpop.f32.mrb[0].mxu0
      %v1624 = vpop.f32.mrb[0].mxu0
      %v1625 = vpop.f32.mrb[0].mxu0
      %1626 = vdwg.mxu0
      %v1627 = vadd.f32 %v1297, %v1622
      %1628 = vadd.xlane.f32.xlu0 %v1627
      %v1629 = vpop.xlane.xlu0 %1628
      %v1630 = vmul.f32 %v1629, %v1272
      %v1631 = vsub.f32 %v1627, %v1630
      %v1632 = vmul.f32 %v1631, %v1631
      %1633 = vadd.xlane.f32.xlu0 %v1632
      %v1634 = vpop.xlane.xlu0 %1633
      %v1635 = vmul.f32 %v1634, %v1272
      %v1636 = vadd.f32 %v1635, 1e-05
      %v1637 = vrsqrt.pop %v1636
      %v1638 = vmul.f32 %v1631, %v1637
      %v1639 = vld [vmem:[%s11] sm:$0x1]
      %v1641 = vlaneseq
      %v1642 = vshrl.u32 %v1641, 7
      %v1643 = vsub.s32 0, %v1642
      %v1644 = vrot.slane %v1639, %v1643
      %v1646 = vmul.f32 %v1638, %v1644
      %v1647 = vld [vmem:[%s12] sm:$0x1]
      %v1649 = vlaneseq
      %v1650 = vshrl.u32 %v1649, 7
      %v1651 = vsub.s32 0, %v1650
      %v1652 = vrot.slane %v1647, %v1651
      %v1654 = vadd.f32 %v1646, %v1652
      %1655 = vst [vmem:[%s435] sm:$0xff] %v1654
      %p1656 = scmp.lt.s32.totalorder %s24, 1
      %s1657 = scalar_select %p1656, %s24, 1
      %s1658 = smul.addr %s1657, 8
      %s1659 = scalar_lea.vmem %s13, %s1658
      // Predicated region
      $region73: #{transformer_encoder.3} parent=71 // pred_check
        %p1660 = pneg %p320
      $region74: #{transformer_encoder.3} parent=71 // pred_check_branch
        %1662 = sbr.rel (%p1660) target = $region76
      $region75: #{transformer_encoder.3} parent=71 // pred_region
        _
      $region76: #{transformer_encoder.3} parent=71 // pred_fallthru
        _
    $region72: #{transformer_encoder.3} parent=5 // pred_fallthru
      _
    %p1663 = scmp.le.s32.totalorder 2, %s19
    // Predicated region
    $region77: #{transformer_encoder.3} parent=5 // pred_check
      %p1664 = pneg %p1663
    $region78: #{transformer_encoder.3} parent=5 // pred_check_branch
      %1666 = sbr.rel (%p1664) target = $region80
    $region79: #{transformer_encoder.3} parent=5 // pred_region
      %s1667 = ssub.s32 %s19, 2
      // Predicated region
      $region81: #{transformer_encoder.3} parent=79 // pred_check
        %p1668 = pneg %p326
      $region82: #{transformer_encoder.3} parent=79 // pred_check_branch
        %1670 = sbr.rel (%p1668) target = $region84
      $region83: #{transformer_encoder.3} parent=79 // pred_region
        %p1671 = scmp.lt.s32.totalorder %s25, 1
        %s1672 = scalar_select %p1671, %s25, 1
        %s1673 = smul.addr %s1672, 8
        %s1674 = scalar_lea.vmem %s13, %s1673
      $region84: #{transformer_encoder.3} parent=79 // pred_fallthru
        _
    $region80: #{transformer_encoder.3} parent=5 // pred_fallthru
      _
  $region6: #{transformer_encoder.3} parent=0 // loop_footer
    %s23 = sadd.s32 1, %s19
  $region7: #{transformer_encoder.3} parent=0 // loop_footer_branch
    %18 = sbr.rel target = $region3
  $region8: #{transformer_encoder.3} parent=0 // loop_exit
    _

// kernel: transformer_encoder.2
$region0: #{transformer_encoder.2}
  #allocation0 [shape = 'u32[]', space=smem, size = 0x4, offset = 0x4, fixed_abs, tag = 'smem constant byte address 0x4 - core index']
  #allocation1 [shape = 'u32[144,128]{1,0:T(1,128)}', space=vmem, size = 0x12000, scoped, tag = 'internal scratch']
  %s0 = inlined_call_operand.vmem [shape: f32[2,8,128], index: 0, kind: input, shape index: {}]
  %s1 = inlined_call_operand.hbm [shape: bf16[128,384], index: 1, kind: input, shape index: {}]
  %s2 = inlined_call_operand.vmem [shape: f32[1,384], index: 2, kind: input, shape index: {}]
  %s3 = inlined_call_operand.vmem [shape: bf16[128,128], index: 3, kind: input, shape index: {}]
  %s4 = inlined_call_operand.vmem [shape: f32[1,128], index: 4, kind: input, shape index: {}]
  %s5 = inlined_call_operand.vmem [shape: f32[1,128], index: 5, kind: input, shape index: {}]
  %s6 = inlined_call_operand.vmem [shape: f32[1,128], index: 6, kind: input, shape index: {}]
  %s7 = inlined_call_operand.hbm [shape: bf16[128,256], index: 7, kind: input, shape index: {}]
  %s8 = inlined_call_operand.vmem [shape: f32[1,256], index: 8, kind: input, shape index: {}]
  %s9 = inlined_call_operand.hbm [shape: bf16[256,128], index: 9, kind: input, shape index: {}]
  %s10 = inlined_call_operand.vmem [shape: f32[1,128], index: 10, kind: input, shape index: {}]
  %s11 = inlined_call_operand.vmem [shape: f32[1,128], index: 11, kind: input, shape index: {}]
  %s12 = inlined_call_operand.vmem [shape: f32[1,128], index: 12, kind: input, shape index: {}]
  %s13 = inlined_call_operand.vmem [shape: f32[2,8,128], index: 13, kind: output, shape index: {}]
  %s14 = sld [smem:[#allocation0]]
  $region97: #{transformer_encoder.2} parent=0
    _
  %s16 = ssub.s32 1, %s14
  %s17 = scalar_select 0, %s16, %s14
  $region1: #{transformer_encoder.2} parent=0
    #allocation2 [shape = 'u8[98304]{0}', space=vmem, size = 0x18000, scoped, tag = 'input window, operand 1, single buffered']
    #allocation3 [shape = 's32[2]{0}', space=sflag, size = 0x8, scoped, tag = 'scoped memory for transformer_encoder.2']
    #allocation4 [shape = 'u8[65536]{0}', space=vmem, size = 0x10000, scoped, tag = 'input window, operand 7, single buffered']
    #allocation5 [shape = 's32[1]{0}', space=sflag, size = 0x4, scoped, tag = 'scoped memory for transformer_encoder.2']
    #allocation6 [shape = 'u8[65536]{0}', space=vmem, size = 0x10000, scoped, tag = 'input window, operand 9, single buffered']
    %18 = vsyncpa [#allocation3], 0
    %19 = vsyncpa [#allocation5], 0
    loop: start=0, step=1, limit=4
    $region2: #{transformer_encoder.2} parent=1 // loop_pre_header
      _
    $region3: #{transformer_encoder.2} parent=1 // loop_header
      %s21 = sphi 0, %s25
      %p22 = scmp.ge.s32.totalorder %s21, 4
      %s31 = sphi 0, %s33
      %s34 = sphi 0, %s31
      %s35 = sphi 0, %s34
      %s51 = sphi 0, %s35
      %s55 = sphi 0, %s55
      %s57 = sphi 0, %s55
      %s58 = sphi 0, %s57
      %s72 = sphi 0, %s58
      %s76 = sphi 0, %s76
      %s78 = sphi 0, %s76
      %s79 = sphi 0, %s78
      %s93 = sphi 0, %s79
      %s97 = sphi 0, %s97
      %s99 = sphi 0, %s97
      %s100 = sphi 0, %s99
      %s114 = sphi 0, %s100
      %s118 = sphi 0, %s118
      %s120 = sphi 0, %s118
      %s121 = sphi 0, %s120
      %s135 = sphi 0, %s121
      %s139 = sphi 0, %s139
      %s141 = sphi 0, %s139
      %s142 = sphi 0, %s141
      %s156 = sphi 0, %s142
      %s160 = sphi 0, %s160
      %s162 = sphi 0, %s160
      %s163 = sphi 0, %s162
      %s177 = sphi 0, %s163
      %s181 = sphi 0, %s181
      %s183 = sphi 0, %s181
      %s184 = sphi 0, %s183
      %s198 = sphi 0, %s184
      %s202 = sphi 0, %s202
      %s204 = sphi 0, %s202
      %s205 = sphi 0, %s204
      %s219 = sphi 0, %s205
      %s223 = sphi 0, %s223
      %s225 = sphi 0, %s223
      %s226 = sphi 0, %s225
      %s240 = sphi 0, %s226
      %s244 = sphi 0, %s244
      %s246 = sphi 0, %s244
      %s247 = sphi 0, %s246
      %s261 = sphi 0, %s247
      %s265 = sphi 0, %s265
      %s267 = sphi 0, %s265
      %s268 = sphi 0, %s267
      %s282 = sphi 0, %s268
      %s286 = sphi 0, %s286
      %s288 = sphi 0, %s286
      %s289 = sphi 0, %s288
      %s303 = sphi 0, %s289
      %s309 = sphi 0, %s311
      %s312 = sphi 0, %s309
      %s313 = sphi 0, %s312
      %s329 = sphi 0, %s313
    $region4: #{transformer_encoder.2} parent=1 // loop_header_branch
      %24 = sbr.rel (%p22) target = $region8
    $region5: #{transformer_encoder.2} parent=1 // loop_body
      %s26 = ssub.s32 %s21, 1
      %s27 = ssub.s32 %s21, 2
      %s28 = sadd.s32 %s21, 1
      %s29 = ssub.s32 %s21, %s28
      %p30 = scmp.eq.s32.totalorder %s29, 0
      %s32 = sadd.s32 %s31, 1
      %s33 = scalar_select %p30, %s31, %s32
      %p36 = pneg %p30
      %p37 = scmp.eq.s32.totalorder %s21, 1
      %p38 = por %p36, %p37
      %p39 = scmp.ne.s32.totalorder %s31, %s34
      %p40 = scmp.eq.s32.totalorder %s21, 0
      %p41 = por %p39, %p40
      %p42 = scmp.ne.s32.totalorder %s31, %s34
      %p43 = scmp.eq.s32.totalorder %s26, 1
      %p44 = por %p42, %p43
      %p45 = scmp.ne.s32.totalorder %s34, %s35
      %p46 = scmp.eq.s32.totalorder %s26, 0
      %p47 = por %p45, %p46
      %p48 = scmp.ne.s32.totalorder %s34, %s35
      %p49 = scmp.eq.s32.totalorder %s27, 1
      %p50 = por %p48, %p49
      %p52 = scmp.ne.s32.totalorder %s35, %s51
      %p53 = scmp.eq.s32.totalorder %s27, 0
      %p54 = por %p52, %p53
      %s56 = sadd.s32 %s55, 1
      %p59 = scmp.eq.s32.totalorder %s21, 1
      %p60 = scmp.ne.s32.totalorder %s55, %s57
      %p61 = scmp.eq.s32.totalorder %s21, 0
      %p62 = por %p60, %p61
      %p63 = scmp.ne.s32.totalorder %s55, %s57
      %p64 = scmp.eq.s32.totalorder %s26, 1
      %p65 = por %p63, %p64
      %p66 = scmp.ne.s32.totalorder %s57, %s58
      %p67 = scmp.eq.s32.totalorder %s26, 0
      %p68 = por %p66, %p67
      %p69 = scmp.ne.s32.totalorder %s57, %s58
      %p70 = scmp.eq.s32.totalorder %s27, 1
      %p71 = por %p69, %p70
      %p73 = scmp.ne.s32.totalorder %s58, %s72
      %p74 = scmp.eq.s32.totalorder %s27, 0
      %p75 = por %p73, %p74
      %s77 = sadd.s32 %s76, 1
      %p80 = scmp.eq.s32.totalorder %s21, 1
      %p81 = scmp.ne.s32.totalorder %s76, %s78
      %p82 = scmp.eq.s32.totalorder %s21, 0
      %p83 = por %p81, %p82
      %p84 = scmp.ne.s32.totalorder %s76, %s78
      %p85 = scmp.eq.s32.totalorder %s26, 1
      %p86 = por %p84, %p85
      %p87 = scmp.ne.s32.totalorder %s78, %s79
      %p88 = scmp.eq.s32.totalorder %s26, 0
      %p89 = por %p87, %p88
      %p90 = scmp.ne.s32.totalorder %s78, %s79
      %p91 = scmp.eq.s32.totalorder %s27, 1
      %p92 = por %p90, %p91
      %p94 = scmp.ne.s32.totalorder %s79, %s93
      %p95 = scmp.eq.s32.totalorder %s27, 0
      %p96 = por %p94, %p95
      %s98 = sadd.s32 %s97, 1
      %p101 = scmp.eq.s32.totalorder %s21, 1
      %p102 = scmp.ne.s32.totalorder %s97, %s99
      %p103 = scmp.eq.s32.totalorder %s21, 0
      %p104 = por %p102, %p103
      %p105 = scmp.ne.s32.totalorder %s97, %s99
      %p106 = scmp.eq.s32.totalorder %s26, 1
      %p107 = por %p105, %p106
      %p108 = scmp.ne.s32.totalorder %s99, %s100
      %p109 = scmp.eq.s32.totalorder %s26, 0
      %p110 = por %p108, %p109
      %p111 = scmp.ne.s32.totalorder %s99, %s100
      %p112 = scmp.eq.s32.totalorder %s27, 1
      %p113 = por %p111, %p112
      %p115 = scmp.ne.s32.totalorder %s100, %s114
      %p116 = scmp.eq.s32.totalorder %s27, 0
      %p117 = por %p115, %p116
      %s119 = sadd.s32 %s118, 1
      %p122 = scmp.eq.s32.totalorder %s21, 1
      %p123 = scmp.ne.s32.totalorder %s118, %s120
      %p124 = scmp.eq.s32.totalorder %s21, 0
      %p125 = por %p123, %p124
      %p126 = scmp.ne.s32.totalorder %s118, %s120
      %p127 = scmp.eq.s32.totalorder %s26, 1
      %p128 = por %p126, %p127
      %p129 = scmp.ne.s32.totalorder %s120, %s121
      %p130 = scmp.eq.s32.totalorder %s26, 0
      %p131 = por %p129, %p130
      %p132 = scmp.ne.s32.totalorder %s120, %s121
      %p133 = scmp.eq.s32.totalorder %s27, 1
      %p134 = por %p132, %p133
      %p136 = scmp.ne.s32.totalorder %s121, %s135
      %p137 = scmp.eq.s32.totalorder %s27, 0
      %p138 = por %p136, %p137
      %s140 = sadd.s32 %s139, 1
      %p143 = scmp.eq.s32.totalorder %s21, 1
      %p144 = scmp.ne.s32.totalorder %s139, %s141
      %p145 = scmp.eq.s32.totalorder %s21, 0
      %p146 = por %p144, %p145
      %p147 = scmp.ne.s32.totalorder %s139, %s141
      %p148 = scmp.eq.s32.totalorder %s26, 1
      %p149 = por %p147, %p148
      %p150 = scmp.ne.s32.totalorder %s141, %s142
      %p151 = scmp.eq.s32.totalorder %s26, 0
      %p152 = por %p150, %p151
      %p153 = scmp.ne.s32.totalorder %s141, %s142
      %p154 = scmp.eq.s32.totalorder %s27, 1
      %p155 = por %p153, %p154
      %p157 = scmp.ne.s32.totalorder %s142, %s156
      %p158 = scmp.eq.s32.totalorder %s27, 0
      %p159 = por %p157, %p158
      %s161 = sadd.s32 %s160, 1
      %p164 = scmp.eq.s32.totalorder %s21, 1
      %p165 = scmp.ne.s32.totalorder %s160, %s162
      %p166 = scmp.eq.s32.totalorder %s21, 0
      %p167 = por %p165, %p166
      %p168 = scmp.ne.s32.totalorder %s160, %s162
      %p169 = scmp.eq.s32.totalorder %s26, 1
      %p170 = por %p168, %p169
      %p171 = scmp.ne.s32.totalorder %s162, %s163
      %p172 = scmp.eq.s32.totalorder %s26, 0
      %p173 = por %p171, %p172
      %p174 = scmp.ne.s32.totalorder %s162, %s163
      %p175 = scmp.eq.s32.totalorder %s27, 1
      %p176 = por %p174, %p175
      %p178 = scmp.ne.s32.totalorder %s163, %s177
      %p179 = scmp.eq.s32.totalorder %s27, 0
      %p180 = por %p178, %p179
      %s182 = sadd.s32 %s181, 1
      %p185 = scmp.eq.s32.totalorder %s21, 1
      %p186 = scmp.ne.s32.totalorder %s181, %s183
      %p187 = scmp.eq.s32.totalorder %s21, 0
      %p188 = por %p186, %p187
      %p189 = scmp.ne.s32.totalorder %s181, %s183
      %p190 = scmp.eq.s32.totalorder %s26, 1
      %p191 = por %p189, %p190
      %p192 = scmp.ne.s32.totalorder %s183, %s184
      %p193 = scmp.eq.s32.totalorder %s26, 0
      %p194 = por %p192, %p193
      %p195 = scmp.ne.s32.totalorder %s183, %s184
      %p196 = scmp.eq.s32.totalorder %s27, 1
      %p197 = por %p195, %p196
      %p199 = scmp.ne.s32.totalorder %s184, %s198
      %p200 = scmp.eq.s32.totalorder %s27, 0
      %p201 = por %p199, %p200
      %s203 = sadd.s32 %s202, 1
      %p206 = scmp.eq.s32.totalorder %s21, 1
      %p207 = scmp.ne.s32.totalorder %s202, %s204
      %p208 = scmp.eq.s32.totalorder %s21, 0
      %p209 = por %p207, %p208
      %p210 = scmp.ne.s32.totalorder %s202, %s204
      %p211 = scmp.eq.s32.totalorder %s26, 1
      %p212 = por %p210, %p211
      %p213 = scmp.ne.s32.totalorder %s204, %s205
      %p214 = scmp.eq.s32.totalorder %s26, 0
      %p215 = por %p213, %p214
      %p216 = scmp.ne.s32.totalorder %s204, %s205
      %p217 = scmp.eq.s32.totalorder %s27, 1
      %p218 = por %p216, %p217
      %p220 = scmp.ne.s32.totalorder %s205, %s219
      %p221 = scmp.eq.s32.totalorder %s27, 0
      %p222 = por %p220, %p221
      %s224 = sadd.s32 %s223, 1
      %p227 = scmp.eq.s32.totalorder %s21, 1
      %p228 = scmp.ne.s32.totalorder %s223, %s225
      %p229 = scmp.eq.s32.totalorder %s21, 0
      %p230 = por %p228, %p229
      %p231 = scmp.ne.s32.totalorder %s223, %s225
      %p232 = scmp.eq.s32.totalorder %s26, 1
      %p233 = por %p231, %p232
      %p234 = scmp.ne.s32.totalorder %s225, %s226
      %p235 = scmp.eq.s32.totalorder %s26, 0
      %p236 = por %p234, %p235
      %p237 = scmp.ne.s32.totalorder %s225, %s226
      %p238 = scmp.eq.s32.totalorder %s27, 1
      %p239 = por %p237, %p238
      %p241 = scmp.ne.s32.totalorder %s226, %s240
      %p242 = scmp.eq.s32.totalorder %s27, 0
      %p243 = por %p241, %p242
      %s245 = sadd.s32 %s244, 1
      %p248 = scmp.eq.s32.totalorder %s21, 1
      %p249 = scmp.ne.s32.totalorder %s244, %s246
      %p250 = scmp.eq.s32.totalorder %s21, 0
      %p251 = por %p249, %p250
      %p252 = scmp.ne.s32.totalorder %s244, %s246
      %p253 = scmp.eq.s32.totalorder %s26, 1
      %p254 = por %p252, %p253
      %p255 = scmp.ne.s32.totalorder %s246, %s247
      %p256 = scmp.eq.s32.totalorder %s26, 0
      %p257 = por %p255, %p256
      %p258 = scmp.ne.s32.totalorder %s246, %s247
      %p259 = scmp.eq.s32.totalorder %s27, 1
      %p260 = por %p258, %p259
      %p262 = scmp.ne.s32.totalorder %s247, %s261
      %p263 = scmp.eq.s32.totalorder %s27, 0
      %p264 = por %p262, %p263
      %s266 = sadd.s32 %s265, 1
      %p269 = scmp.eq.s32.totalorder %s21, 1
      %p270 = scmp.ne.s32.totalorder %s265, %s267
      %p271 = scmp.eq.s32.totalorder %s21, 0
      %p272 = por %p270, %p271
      %p273 = scmp.ne.s32.totalorder %s265, %s267
      %p274 = scmp.eq.s32.totalorder %s26, 1
      %p275 = por %p273, %p274
      %p276 = scmp.ne.s32.totalorder %s267, %s268
      %p277 = scmp.eq.s32.totalorder %s26, 0
      %p278 = por %p276, %p277
      %p279 = scmp.ne.s32.totalorder %s267, %s268
      %p280 = scmp.eq.s32.totalorder %s27, 1
      %p281 = por %p279, %p280
      %p283 = scmp.ne.s32.totalorder %s268, %s282
      %p284 = scmp.eq.s32.totalorder %s27, 0
      %p285 = por %p283, %p284
      %s287 = sadd.s32 %s286, 1
      %p290 = scmp.eq.s32.totalorder %s21, 1
      %p291 = scmp.ne.s32.totalorder %s286, %s288
      %p292 = scmp.eq.s32.totalorder %s21, 0
      %p293 = por %p291, %p292
      %p294 = scmp.ne.s32.totalorder %s286, %s288
      %p295 = scmp.eq.s32.totalorder %s26, 1
      %p296 = por %p294, %p295
      %p297 = scmp.ne.s32.totalorder %s288, %s289
      %p298 = scmp.eq.s32.totalorder %s26, 0
      %p299 = por %p297, %p298
      %p300 = scmp.ne.s32.totalorder %s288, %s289
      %p301 = scmp.eq.s32.totalorder %s27, 1
      %p302 = por %p300, %p301
      %p304 = scmp.ne.s32.totalorder %s289, %s303
      %p305 = scmp.eq.s32.totalorder %s27, 0
      %p306 = por %p304, %p305
      %s307 = ssub.s32 %s21, %s28
      %p308 = scmp.eq.s32.totalorder %s307, 0
      %s310 = sadd.s32 %s309, 1
      %s311 = scalar_select %p308, %s309, %s310
      %p314 = pneg %p308
      %p315 = scmp.eq.s32.totalorder %s21, 1
      %p316 = por %p314, %p315
      %p317 = scmp.ne.s32.totalorder %s309, %s312
      %p318 = scmp.eq.s32.totalorder %s21, 0
      %p319 = por %p317, %p318
      %p320 = scmp.ne.s32.totalorder %s309, %s312
      %p321 = scmp.eq.s32.totalorder %s26, 1
      %p322 = por %p320, %p321
      %p323 = scmp.ne.s32.totalorder %s312, %s313
      %p324 = scmp.eq.s32.totalorder %s26, 0
      %p325 = por %p323, %p324
      %p326 = scmp.ne.s32.totalorder %s312, %s313
      %p327 = scmp.eq.s32.totalorder %s27, 1
      %p328 = por %p326, %p327
      %p330 = scmp.ne.s32.totalorder %s313, %s329
      %p331 = scmp.eq.s32.totalorder %s27, 0
      %p332 = por %p330, %p331
      %p333 = scmp.le.s32.totalorder 1, %s21
      %p334 = scmp.lt.s32.totalorder %s21, 3
      %p335 = pnand %p333, %p334
      %p336 = pneg %p335
      // Predicated region
      $region9: #{transformer_encoder.2} parent=5 // pred_check
        _
      $region10: #{transformer_encoder.2} parent=5 // pred_check_branch
        %338 = sbr.rel (%p335) target = $region12
      $region11: #{transformer_encoder.2} parent=5 // pred_region
        %s339 = ssub.s32 %s21, 1
        // Predicated region
        $region13: #{transformer_encoder.2} parent=11 // pred_check
          %p340 = pneg %p68
        $region14: #{transformer_encoder.2} parent=11 // pred_check_branch
          %342 = sbr.rel (%p340) target = $region16
        $region15: #{transformer_encoder.2} parent=11 // pred_region
          %s344 = ssub.s32 3072, 3072
          %345 = vsyncadd [#allocation3], %s344
          %s346 = sshll.u32 [#allocation2], 4
          %s347 = int_to_ptr.vmem [resolvable:$true] %s346
          %352 = dma.hbm_to_vmem [thread:$0]  %s1, 3072, %s347, [#allocation3], 192, 192, 12
        $region16: #{transformer_encoder.2} parent=11 // pred_fallthru
          _
        // Predicated region
        $region17: #{transformer_encoder.2} parent=11 // pred_check
          %p353 = pneg %p89
        $region18: #{transformer_encoder.2} parent=11 // pred_check_branch
          %355 = sbr.rel (%p353) target = $region20
        $region19: #{transformer_encoder.2} parent=11 // pred_region
          _
        $region20: #{transformer_encoder.2} parent=11 // pred_fallthru
          _
        // Predicated region
        $region21: #{transformer_encoder.2} parent=11 // pred_check
          %p356 = pneg %p110
        $region22: #{transformer_encoder.2} parent=11 // pred_check_branch
          %358 = sbr.rel (%p356) target = $region24
        $region23: #{transformer_encoder.2} parent=11 // pred_region
          _
        $region24: #{transformer_encoder.2} parent=11 // pred_fallthru
          _
        // Predicated region
        $region25: #{transformer_encoder.2} parent=11 // pred_check
          %p359 = pneg %p131
        $region26: #{transformer_encoder.2} parent=11 // pred_check_branch
          %361 = sbr.rel (%p359) target = $region28
        $region27: #{transformer_encoder.2} parent=11 // pred_region
          _
        $region28: #{transformer_encoder.2} parent=11 // pred_fallthru
          _
        // Predicated region
        $region29: #{transformer_encoder.2} parent=11 // pred_check
          %p362 = pneg %p152
        $region30: #{transformer_encoder.2} parent=11 // pred_check_branch
          %364 = sbr.rel (%p362) target = $region32
        $region31: #{transformer_encoder.2} parent=11 // pred_region
          _
        $region32: #{transformer_encoder.2} parent=11 // pred_fallthru
          _
        // Predicated region
        $region33: #{transformer_encoder.2} parent=11 // pred_check
          %p365 = pneg %p173
        $region34: #{transformer_encoder.2} parent=11 // pred_check_branch
          %367 = sbr.rel (%p365) target = $region36
        $region35: #{transformer_encoder.2} parent=11 // pred_region
          _
        $region36: #{transformer_encoder.2} parent=11 // pred_fallthru
          _
        // Predicated region
        $region37: #{transformer_encoder.2} parent=11 // pred_check
          %p368 = pneg %p194
        $region38: #{transformer_encoder.2} parent=11 // pred_check_branch
          %370 = sbr.rel (%p368) target = $region40
        $region39: #{transformer_encoder.2} parent=11 // pred_region
          %s372 = ssub.s32 2048, 2048
          %373 = vsyncadd [#allocation5], %s372
          %s374 = sshll.u32 [#allocation4], 4
          %s375 = int_to_ptr.vmem [resolvable:$true] %s374
          %380 = dma.hbm_to_vmem [thread:$0]  %s7, 2048, %s375, [#allocation5], 128, 128, 8
        $region40: #{transformer_encoder.2} parent=11 // pred_fallthru
          _
        // Predicated region
        $region41: #{transformer_encoder.2} parent=11 // pred_check
          %p381 = pneg %p215
        $region42: #{transformer_encoder.2} parent=11 // pred_check_branch
          %383 = sbr.rel (%p381) target = $region44
        $region43: #{transformer_encoder.2} parent=11 // pred_region
          _
        $region44: #{transformer_encoder.2} parent=11 // pred_fallthru
          _
        // Predicated region
        $region45: #{transformer_encoder.2} parent=11 // pred_check
          %p384 = pneg %p236
        $region46: #{transformer_encoder.2} parent=11 // pred_check_branch
          %386 = sbr.rel (%p384) target = $region48
        $region47: #{transformer_encoder.2} parent=11 // pred_region
          %s388 = ssub.s32 2048, 2048
          %389 = vsyncadd [#allocation5], %s388
          %s390 = sshll.u32 [#allocation6], 4
          %s391 = int_to_ptr.vmem [resolvable:$true] %s390
          %396 = dma.hbm_to_vmem [thread:$0]  %s9, 2048, %s391, [#allocation5], 64, 64, 4
        $region48: #{transformer_encoder.2} parent=11 // pred_fallthru
          _
        // Predicated region
        $region49: #{transformer_encoder.2} parent=11 // pred_check
          %p397 = pneg %p257
        $region50: #{transformer_encoder.2} parent=11 // pred_check_branch
          %399 = sbr.rel (%p397) target = $region52
        $region51: #{transformer_encoder.2} parent=11 // pred_region
          _
        $region52: #{transformer_encoder.2} parent=11 // pred_fallthru
          _
        // Predicated region
        $region53: #{transformer_encoder.2} parent=11 // pred_check
          %p400 = pneg %p278
        $region54: #{transformer_encoder.2} parent=11 // pred_check_branch
          %402 = sbr.rel (%p400) target = $region56
        $region55: #{transformer_encoder.2} parent=11 // pred_region
          _
        $region56: #{transformer_encoder.2} parent=11 // pred_fallthru
          _
        // Predicated region
        $region57: #{transformer_encoder.2} parent=11 // pred_check
          %p403 = pneg %p299
        $region58: #{transformer_encoder.2} parent=11 // pred_check_branch
          %405 = sbr.rel (%p403) target = $region60
        $region59: #{transformer_encoder.2} parent=11 // pred_region
          _
        $region60: #{transformer_encoder.2} parent=11 // pred_fallthru
          _
      $region12: #{transformer_encoder.2} parent=5 // pred_fallthru
        _
      %p406 = scmp.lt.s32.totalorder %s21, 2
      // Predicated region
      $region61: #{transformer_encoder.2} parent=5 // pred_check
        %p407 = pneg %p406
      $region62: #{transformer_encoder.2} parent=5 // pred_check_branch
        %409 = sbr.rel (%p407) target = $region64
      $region63: #{transformer_encoder.2} parent=5 // pred_region
        // Predicated region
        $region65: #{transformer_encoder.2} parent=63 // pred_check
          %p410 = pneg %p41
        $region66: #{transformer_encoder.2} parent=63 // pred_check_branch
          %412 = sbr.rel (%p410) target = $region68
        $region67: #{transformer_encoder.2} parent=63 // pred_region
          %p413 = scmp.lt.s32.totalorder %s21, 1
          %s414 = scalar_select %p413, %s21, 1
          %s415 = smul.addr %s414, 8
          %s416 = scalar_lea.vmem %s0, %s415
        $region68: #{transformer_encoder.2} parent=63 // pred_fallthru
          _
      $region64: #{transformer_encoder.2} parent=5 // pred_fallthru
        _
      %p417 = scmp.le.s32.totalorder 1, %s21
      %p418 = scmp.lt.s32.totalorder %s21, 3
      %p419 = pnand %p417, %p418
      %p420 = pneg %p419
      // Predicated region
      $region69: #{transformer_encoder.2} parent=5 // pred_check
        _
      $region70: #{transformer_encoder.2} parent=5 // pred_check_branch
        %422 = sbr.rel (%p419) target = $region72
      $region71: #{transformer_encoder.2} parent=5 // pred_region
        %s423 = ssub.s32 %s21, 1
        // Predicated region
        $region73: #{transformer_encoder.2} parent=71 // pred_check
          %p424 = pneg %p68
        $region74: #{transformer_encoder.2} parent=71 // pred_check_branch
          %426 = sbr.rel (%p424) target = $region76
        $region75: #{transformer_encoder.2} parent=71 // pred_region
          %427 = dma.done [#allocation3], 3072
        $region76: #{transformer_encoder.2} parent=71 // pred_fallthru
          _
        // Predicated region
        $region77: #{transformer_encoder.2} parent=71 // pred_check
          %p428 = pneg %p194
        $region78: #{transformer_encoder.2} parent=71 // pred_check_branch
          %430 = sbr.rel (%p428) target = $region80
        $region79: #{transformer_encoder.2} parent=71 // pred_region
          %431 = dma.done [#allocation5], 2048
        $region80: #{transformer_encoder.2} parent=71 // pred_fallthru
          _
        // Predicated region
        $region81: #{transformer_encoder.2} parent=71 // pred_check
          %p432 = pneg %p236
        $region82: #{transformer_encoder.2} parent=71 // pred_check_branch
          %434 = sbr.rel (%p432) target = $region84
        $region83: #{transformer_encoder.2} parent=71 // pred_region
          %435 = dma.done [#allocation5], 2048
        $region84: #{transformer_encoder.2} parent=71 // pred_fallthru
          _
        %p436 = scmp.lt.s32.totalorder %s26, 1
        %s437 = scalar_select %p436, %s26, 1
        %s438 = smul.addr %s437, 8
        %s439 = scalar_lea.vmem %s0, %s438
        %p440 = pneg %p47
        %p441 = pneg %p44
        %p442 = pneg %p68
        %p443 = pneg %p65
        %p444 = pneg %p89
        %p445 = pneg %p86
        %p446 = pneg %p110
        %p447 = pneg %p107
        %p448 = pneg %p131
        %p449 = pneg %p128
        %p450 = pneg %p152
        %p451 = pneg %p149
        %p452 = pneg %p173
        %p453 = pneg %p170
        %p454 = pneg %p194
        %p455 = pneg %p191
        %p456 = pneg %p215
        %p457 = pneg %p212
        %p458 = pneg %p236
        %p459 = pneg %p233
        %p460 = pneg %p257
        %p461 = pneg %p254
        %p462 = pneg %p278
        %p463 = pneg %p275
        %p464 = pneg %p299
        %p465 = pneg %p296
        %p466 = pneg %p325
        %p467 = pneg %p322
        %p468 = scmp.lt.s32.totalorder %s26, 1
        %s469 = scalar_select %p468, %s26, 1
        %s470 = smul.addr %s469, 8
        %s471 = scalar_lea.vmem %s13, %s470
        %p472 = scmp.lt.s32.totalorder %s26, 1
        %s473 = scalar_select %p472, %s26, 1
        %s474 = smul.addr %s473, 8
        %s475 = scalar_lea.vmem %s0, %s474
        %p476 = scmp.lt.s32.totalorder %s26, 1
        %s477 = scalar_select %p476, %s26, 1
        %s478 = smul.addr %s477, 8
        %s479 = scalar_lea.vmem %s13, %s478
        %v481 = vld [vmem:[%s475] sm:$0xff]
        %v482 = vpack.c.bf16 %v481, %v481
        %v483 = vld [vmem:[#allocation2] sm:$0xff]
        %v484 = vld [vmem:[#allocation2 + $0x8] sm:$0xf]
        %v485 = vld [vmem:[#allocation2 + $0xc] sm:$0xff]
        %v486 = vld [vmem:[#allocation2 + $0x14] sm:$0xf]
        %v487 = vld [vmem:[#allocation2 + $0x18] sm:$0xff]
        %v488 = vld [vmem:[#allocation2 + $0x20] sm:$0xf]
        %v489 = vld [vmem:[#allocation2 + $0x24] sm:$0xff]
        %v490 = vld [vmem:[#allocation2 + $0x2c] sm:$0xf]
        %v491 = vld [vmem:[#allocation2 + $0x30] sm:$0xff]
        %v492 = vld [vmem:[#allocation2 + $0x38] sm:$0xf]
        %v493 = vld [vmem:[#allocation2 + $0x3c] sm:$0xff]
        %v494 = vld [vmem:[#allocation2 + $0x44] sm:$0xf]
        %v495 = vld [vmem:[#allocation2 + $0x48] sm:$0xff]
        %v496 = vld [vmem:[#allocation2 + $0x50] sm:$0xf]
        %v497 = vld [vmem:[#allocation2 + $0x54] sm:$0xff]
        %v498 = vld [vmem:[#allocation2 + $0x5c] sm:$0xf]
        %v499 = vld [vmem:[#allocation2 + $0x60] sm:$0xff]
        %v500 = vld [vmem:[#allocation2 + $0x68] sm:$0xf]
        %v501 = vld [vmem:[#allocation2 + $0x6c] sm:$0xff]
        %v502 = vld [vmem:[#allocation2 + $0x74] sm:$0xf]
        %v503 = vld [vmem:[#allocation2 + $0x78] sm:$0xff]
        %v504 = vld [vmem:[#allocation2 + $0x80] sm:$0xf]
        %v505 = vld [vmem:[#allocation2 + $0x84] sm:$0xff]
        %v506 = vld [vmem:[#allocation2 + $0x8c] sm:$0xf]
        %v507 = vld [vmem:[#allocation2 + $0x90] sm:$0xff]
        %v508 = vld [vmem:[#allocation2 + $0x98] sm:$0xf]
        %v509 = vld [vmem:[#allocation2 + $0x9c] sm:$0xff]
        %v510 = vld [vmem:[#allocation2 + $0xa4] sm:$0xf]
        %v511 = vld [vmem:[#allocation2 + $0xa8] sm:$0xff]
        %v512 = vld [vmem:[#allocation2 + $0xb0] sm:$0xf]
        %v513 = vld [vmem:[#allocation2 + $0xb4] sm:$0xff]
        %v514 = vld [vmem:[#allocation2 + $0xbc] sm:$0xf]
        %v515 = vld [vmem:[%s2] sm:$0x7]
        %v517 = vlaneseq
        %v518 = vshrl.u32 %v517, 7
        %v519 = vsub.s32 0, %v518
        %v520 = vrot.slane %v515, %v519
        %v521 = vlaneseq
        %v522 = vshrl.u32 %v521, 7
        %v523 = vsub.s32 1, %v522
        %v524 = vrot.slane %v515, %v523
        %v525 = vlaneseq
        %v526 = vshrl.u32 %v525, 7
        %v527 = vsub.s32 2, %v526
        %v528 = vrot.slane %v515, %v527
        %v564 = vunpack.c.l.b16 %v483
        %v565 = vunpack.c.h.b16 %v483
        %v566 = vunpack.c.l.b16 %v484
        %v567 = vunpack.c.l.b16 %v485
        %v568 = vunpack.c.h.b16 %v485
        %v569 = vunpack.c.l.b16 %v486
        %v570 = vunpack.c.l.b16 %v487
        %v571 = vunpack.c.h.b16 %v487
        %v572 = vunpack.c.l.b16 %v488
        %v573 = vunpack.c.l.b16 %v489
        %v574 = vunpack.c.h.b16 %v489
        %v575 = vunpack.c.l.b16 %v490
        %v576 = vunpack.c.l.b16 %v491
        %v577 = vunpack.c.h.b16 %v491
        %v578 = vunpack.c.l.b16 %v492
        %v579 = vunpack.c.l.b16 %v493
        %v580 = vunpack.c.h.b16 %v493
        %v581 = vunpack.c.l.b16 %v494
        %v582 = vunpack.c.l.b16 %v495
        %v583 = vunpack.c.h.b16 %v495
        %v584 = vunpack.c.l.b16 %v496
        %v585 = vunpack.c.l.b16 %v497
        %v586 = vunpack.c.h.b16 %v497
        %v587 = vunpack.c.l.b16 %v498
        %v588 = vunpack.c.l.b16 %v499
        %v589 = vunpack.c.h.b16 %v499
        %v590 = vunpack.c.l.b16 %v500
        %v591 = vunpack.c.l.b16 %v501
        %v592 = vunpack.c.h.b16 %v501
        %v593 = vunpack.c.l.b16 %v502
        %v594 = vunpack.c.l.b16 %v503
        %v595 = vunpack.c.h.b16 %v503
        %v596 = vunpack.c.l.b16 %v504
        %v597 = vunpack.c.l.b16 %v505
        %v598 = vunpack.c.h.b16 %v505
        %v599 = vunpack.c.l.b16 %v506
        %v600 = vunpack.c.l.b16 %v507
        %v601 = vunpack.c.h.b16 %v507
        %v602 = vunpack.c.l.b16 %v508
        %v603 = vunpack.c.l.b16 %v509
        %v604 = vunpack.c.h.b16 %v509
        %v605 = vunpack.c.l.b16 %v510
        %v606 = vunpack.c.l.b16 %v511
        %v607 = vunpack.c.h.b16 %v511
        %v608 = vunpack.c.l.b16 %v512
        %v609 = vunpack.c.l.b16 %v513
        %v610 = vunpack.c.h.b16 %v513
        %v611 = vunpack.c.l.b16 %v514
        %v612 = vpack.c.b16 %v567, %v564
        %v613 = vpack.c.b16 %v568, %v565
        %v614 = vpack.c.b16 %v569, %v566
        %v615 = vpack.c.b16 %v573, %v570
        %v616 = vpack.c.b16 %v574, %v571
        %v617 = vpack.c.b16 %v575, %v572
        %v618 = vpack.c.b16 %v579, %v576
        %v619 = vpack.c.b16 %v580, %v577
        %v620 = vpack.c.b16 %v581, %v578
        %v621 = vpack.c.b16 %v585, %v582
        %v622 = vpack.c.b16 %v586, %v583
        %v623 = vpack.c.b16 %v587, %v584
        %v624 = vpack.c.b16 %v591, %v588
        %v625 = vpack.c.b16 %v592, %v589
        %v626 = vpack.c.b16 %v593, %v590
        %v627 = vpack.c.b16 %v597, %v594
        %v628 = vpack.c.b16 %v598, %v595
        %v629 = vpack.c.b16 %v599, %v596
        %v630 = vpack.c.b16 %v603, %v600
        %v631 = vpack.c.b16 %v604, %v601
        %v632 = vpack.c.b16 %v605, %v602
        %v633 = vpack.c.b16 %v609, %v606
        %v634 = vpack.c.b16 %v610, %v607
        %v635 = vpack.c.b16 %v611, %v608
        %660 = vmatprep.subr.bf16.mxu0 %v613
        %661 = vmatpush1.bf16.msra.mxu0 %v612
        %662 = vmatprep.subr.bf16.mxu0 %v616
        %663 = vmatpush1.bf16.msra.mxu0 %v615
        %664 = vmatprep.subr.bf16.mxu0 %v619
        %665 = vmatpush1.bf16.msra.mxu0 %v618
        %666 = vmatprep.subr.bf16.mxu0 %v622
        %667 = vmatpush1.bf16.msra.mxu0 %v621
        %668 = vmatprep.subr.bf16.mxu0 %v625
        %669 = vmatpush1.bf16.msra.mxu0 %v624
        %670 = vmatprep.subr.bf16.mxu0 %v628
        %671 = vmatpush1.bf16.msra.mxu0 %v627
        %672 = vmatprep.subr.bf16.mxu0 %v631
        %673 = vmatpush1.bf16.msra.mxu0 %v630
        %674 = vmatprep.subr.bf16.mxu0 %v634
        %675 = vmatpush1.bf16.msra.mxu0 %v633
        %676 = vmatprep.subr.bf16.mxu0 0
        %677 = vmatpush1.bf16.msra.mxu0 0
        %678 = vmatprep.subr.bf16.mxu0 0
        %679 = vmatpush1.bf16.msra.mxu0 0
        %680 = vmatprep.subr.bf16.mxu0 0
        %681 = vmatpush1.bf16.msra.mxu0 0
        %682 = vmatprep.subr.bf16.mxu0 0
        %683 = vmatpush1.bf16.msra.mxu0 0
        %684 = vmatprep.subr.bf16.mxu0 0
        %685 = vmatpush1.bf16.msra.mxu0 0
        %686 = vmatprep.subr.bf16.mxu0 0
        %687 = vmatpush1.bf16.msra.mxu0 0
        %688 = vmatprep.subr.bf16.mxu0 0
        %689 = vmatpush1.bf16.msra.mxu0 0
        %690 = vmatprep.subr.bf16.mxu0 0
        %691 = vmatpush1.bf16.msra.mxu0 0
        %692 = vmatprep.mubr.bf16.mxu0 0
        %693 = vmatmul.mubr.bf16.gmra.mrb[0].mxu0 %v482
        %v694 = vpop.f32.mrb[0].mxu0
        %v695 = vadd.f32 %v520, %v694
        %v696 = vpop.f32.mrb[0].mxu0
        %v697 = vadd.f32 %v524, %v696
        %v698 = vpop.f32.mrb[0].mxu0
        %v699 = vpop.f32.mrb[0].mxu0
        %700 = vdwg.mxu0
        %701 = vmatprep.subr.bf16.mxu0 0
        %702 = vmatpush1.bf16.msra.mxu0 %v614
        %703 = vmatprep.subr.bf16.mxu0 0
        %704 = vmatpush1.bf16.msra.mxu0 %v617
        %705 = vmatprep.subr.bf16.mxu0 0
        %706 = vmatpush1.bf16.msra.mxu0 %v620
        %707 = vmatprep.subr.bf16.mxu0 0
        %708 = vmatpush1.bf16.msra.mxu0 %v623
        %709 = vmatprep.subr.bf16.mxu0 0
        %710 = vmatpush1.bf16.msra.mxu0 %v626
        %711 = vmatprep.subr.bf16.mxu0 0
        %712 = vmatpush1.bf16.msra.mxu0 %v629
        %713 = vmatprep.subr.bf16.mxu0 0
        %714 = vmatpush1.bf16.msra.mxu0 %v632
        %715 = vmatprep.subr.bf16.mxu0 0
        %716 = vmatpush1.bf16.msra.mxu0 %v635
        %717 = vmatprep.subr.bf16.mxu0 0
        %718 = vmatpush1.bf16.msra.mxu0 0
        %719 = vmatprep.subr.bf16.mxu0 0
        %720 = vmatpush1.bf16.msra.mxu0 0
        %721 = vmatprep.subr.bf16.mxu0 0
        %722 = vmatpush1.bf16.msra.mxu0 0
        %723 = vmatprep.subr.bf16.mxu0 0
        %724 = vmatpush1.bf16.msra.mxu0 0
        %725 = vmatprep.subr.bf16.mxu0 0
        %726 = vmatpush1.bf16.msra.mxu0 0
        %727 = vmatprep.subr.bf16.mxu0 0
        %728 = vmatpush1.bf16.msra.mxu0 0
        %729 = vmatprep.subr.bf16.mxu0 0
        %730 = vmatpush1.bf16.msra.mxu0 0
        %731 = vmatprep.subr.bf16.mxu0 0
        %732 = vmatpush1.bf16.msra.mxu0 0
        %733 = vmatprep.mubr.bf16.mxu0 0
        %734 = vmatmul.mubr.bf16.gmra.mrb[0].mxu0 %v482
        %v735 = vpop.f32.mrb[0].mxu0
        %v736 = vadd.f32 %v528, %v735
        %v737 = vpop.f32.mrb[0].mxu0
        %v738 = vpop.f32.mrb[0].mxu0
        %v739 = vpop.f32.mrb[0].mxu0
        %740 = vdwg.mxu0
        %v741 = vpack.c.bf16 %v695, %v695
        %v742 = vpack.c.bf16 %v697, %v697
        %v743 = vpack.c.bf16 %v736, %v736
        %vm744 = vcmask 261120
        %v746 = vsel %vm744, %v741, 0
        %v749 = vsel %vm744, %v742, 0
        %751 = vmatprep.subr.bf16.mxu0 0
        %752 = vmatpush1.bf16.xpose.msra.mxu0 %v749
        %753 = vmatprep.subr.bf16.mxu0 0
        %754 = vmatpush1.bf16.xpose.msra.mxu0 0
        %755 = vmatprep.subr.bf16.mxu0 0
        %756 = vmatpush1.bf16.xpose.msra.mxu0 0
        %757 = vmatprep.subr.bf16.mxu0 0
        %758 = vmatpush1.bf16.xpose.msra.mxu0 0
        %759 = vmatprep.subr.bf16.mxu0 0
        %760 = vmatpush1.bf16.xpose.msra.mxu0 0
        %761 = vmatprep.subr.bf16.mxu0 0
        %762 = vmatpush1.bf16.xpose.msra.mxu0 0
        %763 = vmatprep.subr.bf16.mxu0 0
        %764 = vmatpush1.bf16.xpose.msra.mxu0 0
        %765 = vmatprep.subr.bf16.mxu0 0
        %766 = vmatpush1.bf16.xpose.msra.mxu0 0
        %767 = vmatprep.subr.bf16.mxu0 0
        %768 = vmatpush1.bf16.xpose.msra.mxu0 0
        %769 = vmatprep.subr.bf16.mxu0 0
        %770 = vmatpush1.bf16.xpose.msra.mxu0 0
        %771 = vmatprep.subr.bf16.mxu0 0
        %772 = vmatpush1.bf16.xpose.msra.mxu0 0
        %773 = vmatprep.subr.bf16.mxu0 0
        %774 = vmatpush1.bf16.xpose.msra.mxu0 0
        %775 = vmatprep.subr.bf16.mxu0 0
        %776 = vmatpush1.bf16.xpose.msra.mxu0 0
        %777 = vmatprep.subr.bf16.mxu0 0
        %778 = vmatpush1.bf16.xpose.msra.mxu0 0
        %779 = vmatprep.subr.bf16.mxu0 0
        %780 = vmatpush1.bf16.xpose.msra.mxu0 0
        %781 = vmatprep.subr.bf16.mxu0 0
        %782 = vmatpush1.bf16.xpose.msra.mxu0 0
        %783 = vmatprep.mubr.bf16.mxu0 0
        %784 = vmatmul.mubr.bf16.gmra.mrb[0].mxu0 %v746
        %v785 = vpop.f32.mrb[0].mxu0
        %v786 = vadd.f32 0.0, %v785
        %v787 = vpop.f32.mrb[0].mxu0
        %v788 = vpop.f32.mrb[0].mxu0
        %v789 = vpop.f32.mrb[0].mxu0
        %790 = vdwg.mxu0
        %vm791 = vcmask 64512
        %v792 = vsel %vm791, %v786, -inf
        %793 = vmax.xlane.f32.xlu0 %v792
        %v794 = vpop.xlane.xlu0 %793
        %v795 = vsub.f32 %v786, %v794
        %v796 = vmul.f32 %v795, 1.442695
        %v797 = vpow.pop %v796
        %v798 = vsel %vm791, %v797, 0.0
        %799 = vadd.xlane.f32.xlu0 %v798
        %v800 = vpop.xlane.xlu0 %799
        %v801 = vrcp.pop %v800
        %v802 = vmul.f32 %v797, %v801
        %v803 = vpack.c.bf16 %v802, %v802
        %v805 = vsel %vm791, %v803, 0
        %vm807 = vcmask 1043456
        %v809 = vsel %vm807, %v743, 0
        %811 = vmatprep.subr.bf16.mxu0 0
        %812 = vmatpush1.bf16.msra.mxu0 %v809
        %813 = vmatprep.subr.bf16.mxu0 0
        %814 = vmatpush1.bf16.msra.mxu0 0
        %815 = vmatprep.subr.bf16.mxu0 0
        %816 = vmatpush1.bf16.msra.mxu0 0
        %817 = vmatprep.subr.bf16.mxu0 0
        %818 = vmatpush1.bf16.msra.mxu0 0
        %819 = vmatprep.subr.bf16.mxu0 0
        %820 = vmatpush1.bf16.msra.mxu0 0
        %821 = vmatprep.subr.bf16.mxu0 0
        %822 = vmatpush1.bf16.msra.mxu0 0
        %823 = vmatprep.subr.bf16.mxu0 0
        %824 = vmatpush1.bf16.msra.mxu0 0
        %825 = vmatprep.subr.bf16.mxu0 0
        %826 = vmatpush1.bf16.msra.mxu0 0
        %827 = vmatprep.subr.bf16.mxu0 0
        %828 = vmatpush1.bf16.msra.mxu0 0
        %829 = vmatprep.subr.bf16.mxu0 0
        %830 = vmatpush1.bf16.msra.mxu0 0
        %831 = vmatprep.subr.bf16.mxu0 0
        %832 = vmatpush1.bf16.msra.mxu0 0
        %833 = vmatprep.subr.bf16.mxu0 0
        %834 = vmatpush1.bf16.msra.mxu0 0
        %835 = vmatprep.subr.bf16.mxu0 0
        %836 = vmatpush1.bf16.msra.mxu0 0
        %837 = vmatprep.subr.bf16.mxu0 0
        %838 = vmatpush1.bf16.msra.mxu0 0
        %839 = vmatprep.subr.bf16.mxu0 0
        %840 = vmatpush1.bf16.msra.mxu0 0
        %841 = vmatprep.subr.bf16.mxu0 0
        %842 = vmatpush1.bf16.msra.mxu0 0
        %843 = vmatprep.mubr.bf16.mxu0 0
        %844 = vmatmul.mubr.bf16.gmra.mrb[0].mxu0 %v805
        %v845 = vpop.f32.mrb[0].mxu0
        %v846 = vadd.f32 0.0, %v845
        %v847 = vpop.f32.mrb[0].mxu0
        %v848 = vpop.f32.mrb[0].mxu0
        %v849 = vpop.f32.mrb[0].mxu0
        %850 = vdwg.mxu0
        %852 = vrot.lane.b32.xlu0 %v741, 96
        %v853 = vpop.permute.xlu0 %852
        %855 = vrot.lane.b32.xlu0 %v742, 96
        %v856 = vpop.permute.xlu0 %855
        %v858 = vsel %vm744, %v853, 0
        %v861 = vsel %vm744, %v856, 0
        %863 = vmatprep.subr.bf16.mxu0 0
        %864 = vmatpush1.bf16.xpose.msra.mxu0 %v861
        %865 = vmatprep.subr.bf16.mxu0 0
        %866 = vmatpush1.bf16.xpose.msra.mxu0 0
        %867 = vmatprep.subr.bf16.mxu0 0
        %868 = vmatpush1.bf16.xpose.msra.mxu0 0
        %869 = vmatprep.subr.bf16.mxu0 0
        %870 = vmatpush1.bf16.xpose.msra.mxu0 0
        %871 = vmatprep.subr.bf16.mxu0 0
        %872 = vmatpush1.bf16.xpose.msra.mxu0 0
        %873 = vmatprep.subr.bf16.mxu0 0
        %874 = vmatpush1.bf16.xpose.msra.mxu0 0
        %875 = vmatprep.subr.bf16.mxu0 0
        %876 = vmatpush1.bf16.xpose.msra.mxu0 0
        %877 = vmatprep.subr.bf16.mxu0 0
        %878 = vmatpush1.bf16.xpose.msra.mxu0 0
        %879 = vmatprep.subr.bf16.mxu0 0
        %880 = vmatpush1.bf16.xpose.msra.mxu0 0
        %881 = vmatprep.subr.bf16.mxu0 0
        %882 = vmatpush1.bf16.xpose.msra.mxu0 0
        %883 = vmatprep.subr.bf16.mxu0 0
        %884 = vmatpush1.bf16.xpose.msra.mxu0 0
        %885 = vmatprep.subr.bf16.mxu0 0
        %886 = vmatpush1.bf16.xpose.msra.mxu0 0
        %887 = vmatprep.subr.bf16.mxu0 0
        %888 = vmatpush1.bf16.xpose.msra.mxu0 0
        %889 = vmatprep.subr.bf16.mxu0 0
        %890 = vmatpush1.bf16.xpose.msra.mxu0 0
        %891 = vmatprep.subr.bf16.mxu0 0
        %892 = vmatpush1.bf16.xpose.msra.mxu0 0
        %893 = vmatprep.subr.bf16.mxu0 0
        %894 = vmatpush1.bf16.xpose.msra.mxu0 0
        %895 = vmatprep.mubr.bf16.mxu0 0
        %896 = vmatmul.mubr.bf16.gmra.mrb[0].mxu0 %v858
        %v897 = vpop.f32.mrb[0].mxu0
        %v898 = vadd.f32 0.0, %v897
        %v899 = vpop.f32.mrb[0].mxu0
        %v900 = vpop.f32.mrb[0].mxu0
        %v901 = vpop.f32.mrb[0].mxu0
        %902 = vdwg.mxu0
        %v903 = vsel %vm791, %v898, -inf
        %904 = vmax.xlane.f32.xlu0 %v903
        %v905 = vpop.xlane.xlu0 %904
        %v906 = vsub.f32 %v898, %v905
        %v907 = vmul.f32 %v906, 1.442695
        %v908 = vpow.pop %v907
        %v909 = vsel %vm791, %v908, 0.0
        %910 = vadd.xlane.f32.xlu0 %v909
        %v911 = vpop.xlane.xlu0 %910
        %v912 = vrcp.pop %v911
        %v913 = vmul.f32 %v908, %v912
        %v914 = vpack.c.bf16 %v913, %v913
        %916 = vrot.lane.b32.xlu0 %v743, 96
        %v917 = vpop.permute.xlu0 %916
        %v919 = vsel %vm791, %v914, 0
        %v922 = vsel %vm807, %v917, 0
        %924 = vmatprep.subr.bf16.mxu0 0
        %925 = vmatpush1.bf16.msra.mxu0 %v922
        %926 = vmatprep.subr.bf16.mxu0 0
        %927 = vmatpush1.bf16.msra.mxu0 0
        %928 = vmatprep.subr.bf16.mxu0 0
        %929 = vmatpush1.bf16.msra.mxu0 0
        %930 = vmatprep.subr.bf16.mxu0 0
        %931 = vmatpush1.bf16.msra.mxu0 0
        %932 = vmatprep.subr.bf16.mxu0 0
        %933 = vmatpush1.bf16.msra.mxu0 0
        %934 = vmatprep.subr.bf16.mxu0 0
        %935 = vmatpush1.bf16.msra.mxu0 0
        %936 = vmatprep.subr.bf16.mxu0 0
        %937 = vmatpush1.bf16.msra.mxu0 0
        %938 = vmatprep.subr.bf16.mxu0 0
        %939 = vmatpush1.bf16.msra.mxu0 0
        %940 = vmatprep.subr.bf16.mxu0 0
        %941 = vmatpush1.bf16.msra.mxu0 0
        %942 = vmatprep.subr.bf16.mxu0 0
        %943 = vmatpush1.bf16.msra.mxu0 0
        %944 = vmatprep.subr.bf16.mxu0 0
        %945 = vmatpush1.bf16.msra.mxu0 0
        %946 = vmatprep.subr.bf16.mxu0 0
        %947 = vmatpush1.bf16.msra.mxu0 0
        %948 = vmatprep.subr.bf16.mxu0 0
        %949 = vmatpush1.bf16.msra.mxu0 0
        %950 = vmatprep.subr.bf16.mxu0 0
        %951 = vmatpush1.bf16.msra.mxu0 0
        %952 = vmatprep.subr.bf16.mxu0 0
        %953 = vmatpush1.bf16.msra.mxu0 0
        %954 = vmatprep.subr.bf16.mxu0 0
        %955 = vmatpush1.bf16.msra.mxu0 0
        %956 = vmatprep.mubr.bf16.mxu0 0
        %957 = vmatmul.mubr.bf16.gmra.mrb[0].mxu0 %v919
        %v958 = vpop.f32.mrb[0].mxu0
        %v959 = vadd.f32 0.0, %v958
        %v960 = vpop.f32.mrb[0].mxu0
        %v961 = vpop.f32.mrb[0].mxu0
        %v962 = vpop.f32.mrb[0].mxu0
        %963 = vdwg.mxu0
        %964 = vrot.lane.b32.xlu0 %v741, 64
        %v965 = vpop.permute.xlu0 %964
        %966 = vrot.lane.b32.xlu0 %v742, 64
        %v967 = vpop.permute.xlu0 %966
        %v969 = vsel %vm744, %v965, 0
        %v972 = vsel %vm744, %v967, 0
        %974 = vmatprep.subr.bf16.mxu0 0
        %975 = vmatpush1.bf16.xpose.msra.mxu0 %v972
        %976 = vmatprep.subr.bf16.mxu0 0
        %977 = vmatpush1.bf16.xpose.msra.mxu0 0
        %978 = vmatprep.subr.bf16.mxu0 0
        %979 = vmatpush1.bf16.xpose.msra.mxu0 0
        %980 = vmatprep.subr.bf16.mxu0 0
        %981 = vmatpush1.bf16.xpose.msra.mxu0 0
        %982 = vmatprep.subr.bf16.mxu0 0
        %983 = vmatpush1.bf16.xpose.msra.mxu0 0
        %984 = vmatprep.subr.bf16.mxu0 0
        %985 = vmatpush1.bf16.xpose.msra.mxu0 0
        %986 = vmatprep.subr.bf16.mxu0 0
        %987 = vmatpush1.bf16.xpose.msra.mxu0 0
        %988 = vmatprep.subr.bf16.mxu0 0
        %989 = vmatpush1.bf16.xpose.msra.mxu0 0
        %990 = vmatprep.subr.bf16.mxu0 0
        %991 = vmatpush1.bf16.xpose.msra.mxu0 0
        %992 = vmatprep.subr.bf16.mxu0 0
        %993 = vmatpush1.bf16.xpose.msra.mxu0 0
        %994 = vmatprep.subr.bf16.mxu0 0
        %995 = vmatpush1.bf16.xpose.msra.mxu0 0
        %996 = vmatprep.subr.bf16.mxu0 0
        %997 = vmatpush1.bf16.xpose.msra.mxu0 0
        %998 = vmatprep.subr.bf16.mxu0 0
        %999 = vmatpush1.bf16.xpose.msra.mxu0 0
        %1000 = vmatprep.subr.bf16.mxu0 0
        %1001 = vmatpush1.bf16.xpose.msra.mxu0 0
        %1002 = vmatprep.subr.bf16.mxu0 0
        %1003 = vmatpush1.bf16.xpose.msra.mxu0 0
        %1004 = vmatprep.subr.bf16.mxu0 0
        %1005 = vmatpush1.bf16.xpose.msra.mxu0 0
        %1006 = vmatprep.mubr.bf16.mxu0 0
        %1007 = vmatmul.mubr.bf16.gmra.mrb[0].mxu0 %v969
        %v1008 = vpop.f32.mrb[0].mxu0
        %v1009 = vadd.f32 0.0, %v1008
        %v1010 = vpop.f32.mrb[0].mxu0
        %v1011 = vpop.f32.mrb[0].mxu0
        %v1012 = vpop.f32.mrb[0].mxu0
        %1013 = vdwg.mxu0
        %v1014 = vsel %vm791, %v1009, -inf
        %1015 = vmax.xlane.f32.xlu0 %v1014
        %v1016 = vpop.xlane.xlu0 %1015
        %v1017 = vsub.f32 %v1009, %v1016
        %v1018 = vmul.f32 %v1017, 1.442695
        %v1019 = vpow.pop %v1018
        %v1020 = vsel %vm791, %v1019, 0.0
        %1021 = vadd.xlane.f32.xlu0 %v1020
        %v1022 = vpop.xlane.xlu0 %1021
        %v1023 = vrcp.pop %v1022
        %v1024 = vmul.f32 %v1019, %v1023
        %v1025 = vpack.c.bf16 %v1024, %v1024
        %1026 = vrot.lane.b32.xlu0 %v743, 64
        %v1027 = vpop.permute.xlu0 %1026
        %v1029 = vsel %vm791, %v1025, 0
        %v1032 = vsel %vm807, %v1027, 0
        %1034 = vmatprep.subr.bf16.mxu0 0
        %1035 = vmatpush1.bf16.msra.mxu0 %v1032
        %1036 = vmatprep.subr.bf16.mxu0 0
        %1037 = vmatpush1.bf16.msra.mxu0 0
        %1038 = vmatprep.subr.bf16.mxu0 0
        %1039 = vmatpush1.bf16.msra.mxu0 0
        %1040 = vmatprep.subr.bf16.mxu0 0
        %1041 = vmatpush1.bf16.msra.mxu0 0
        %1042 = vmatprep.subr.bf16.mxu0 0
        %1043 = vmatpush1.bf16.msra.mxu0 0
        %1044 = vmatprep.subr.bf16.mxu0 0
        %1045 = vmatpush1.bf16.msra.mxu0 0
        %1046 = vmatprep.subr.bf16.mxu0 0
        %1047 = vmatpush1.bf16.msra.mxu0 0
        %1048 = vmatprep.subr.bf16.mxu0 0
        %1049 = vmatpush1.bf16.msra.mxu0 0
        %1050 = vmatprep.subr.bf16.mxu0 0
        %1051 = vmatpush1.bf16.msra.mxu0 0
        %1052 = vmatprep.subr.bf16.mxu0 0
        %1053 = vmatpush1.bf16.msra.mxu0 0
        %1054 = vmatprep.subr.bf16.mxu0 0
        %1055 = vmatpush1.bf16.msra.mxu0 0
        %1056 = vmatprep.subr.bf16.mxu0 0
        %1057 = vmatpush1.bf16.msra.mxu0 0
        %1058 = vmatprep.subr.bf16.mxu0 0
        %1059 = vmatpush1.bf16.msra.mxu0 0
        %1060 = vmatprep.subr.bf16.mxu0 0
        %1061 = vmatpush1.bf16.msra.mxu0 0
        %1062 = vmatprep.subr.bf16.mxu0 0
        %1063 = vmatpush1.bf16.msra.mxu0 0
        %1064 = vmatprep.subr.bf16.mxu0 0
        %1065 = vmatpush1.bf16.msra.mxu0 0
        %1066 = vmatprep.mubr.bf16.mxu0 0
        %1067 = vmatmul.mubr.bf16.gmra.mrb[0].mxu0 %v1029
        %v1068 = vpop.f32.mrb[0].mxu0
        %v1069 = vadd.f32 0.0, %v1068
        %v1070 = vpop.f32.mrb[0].mxu0
        %v1071 = vpop.f32.mrb[0].mxu0
        %v1072 = vpop.f32.mrb[0].mxu0
        %1073 = vdwg.mxu0
        %1074 = vrot.lane.b32.xlu0 %v741, 32
        %v1075 = vpop.permute.xlu0 %1074
        %1076 = vrot.lane.b32.xlu0 %v742, 32
        %v1077 = vpop.permute.xlu0 %1076
        %v1079 = vsel %vm744, %v1075, 0
        %v1082 = vsel %vm744, %v1077, 0
        %1084 = vmatprep.subr.bf16.mxu0 0
        %1085 = vmatpush1.bf16.xpose.msra.mxu0 %v1082
        %1086 = vmatprep.subr.bf16.mxu0 0
        %1087 = vmatpush1.bf16.xpose.msra.mxu0 0
        %1088 = vmatprep.subr.bf16.mxu0 0
        %1089 = vmatpush1.bf16.xpose.msra.mxu0 0
        %1090 = vmatprep.subr.bf16.mxu0 0
        %1091 = vmatpush1.bf16.xpose.msra.mxu0 0
        %1092 = vmatprep.subr.bf16.mxu0 0
        %1093 = vmatpush1.bf16.xpose.msra.mxu0 0
        %1094 = vmatprep.subr.bf16.mxu0 0
        %1095 = vmatpush1.bf16.xpose.msra.mxu0 0
        %1096 = vmatprep.subr.bf16.mxu0 0
        %1097 = vmatpush1.bf16.xpose.msra.mxu0 0
        %1098 = vmatprep.subr.bf16.mxu0 0
        %1099 = vmatpush1.bf16.xpose.msra.mxu0 0
        %1100 = vmatprep.subr.bf16.mxu0 0
        %1101 = vmatpush1.bf16.xpose.msra.mxu0 0
        %1102 = vmatprep.subr.bf16.mxu0 0
        %1103 = vmatpush1.bf16.xpose.msra.mxu0 0
        %1104 = vmatprep.subr.bf16.mxu0 0
        %1105 = vmatpush1.bf16.xpose.msra.mxu0 0
        %1106 = vmatprep.subr.bf16.mxu0 0
        %1107 = vmatpush1.bf16.xpose.msra.mxu0 0
        %1108 = vmatprep.subr.bf16.mxu0 0
        %1109 = vmatpush1.bf16.xpose.msra.mxu0 0
        %1110 = vmatprep.subr.bf16.mxu0 0
        %1111 = vmatpush1.bf16.xpose.msra.mxu0 0
        %1112 = vmatprep.subr.bf16.mxu0 0
        %1113 = vmatpush1.bf16.xpose.msra.mxu0 0
        %1114 = vmatprep.subr.bf16.mxu0 0
        %1115 = vmatpush1.bf16.xpose.msra.mxu0 0
        %1116 = vmatprep.mubr.bf16.mxu0 0
        %1117 = vmatmul.mubr.bf16.gmra.mrb[0].mxu0 %v1079
        %v1118 = vpop.f32.mrb[0].mxu0
        %v1119 = vadd.f32 0.0, %v1118
        %v1120 = vpop.f32.mrb[0].mxu0
        %v1121 = vpop.f32.mrb[0].mxu0
        %v1122 = vpop.f32.mrb[0].mxu0
        %1123 = vdwg.mxu0
        %v1124 = vsel %vm791, %v1119, -inf
        %1125 = vmax.xlane.f32.xlu0 %v1124
        %v1126 = vpop.xlane.xlu0 %1125
        %v1127 = vsub.f32 %v1119, %v1126
        %v1128 = vmul.f32 %v1127, 1.442695
        %v1129 = vpow.pop %v1128
        %v1130 = vsel %vm791, %v1129, 0.0
        %1131 = vadd.xlane.f32.xlu0 %v1130
        %v1132 = vpop.xlane.xlu0 %1131
        %v1133 = vrcp.pop %v1132
        %v1134 = vmul.f32 %v1129, %v1133
        %v1135 = vpack.c.bf16 %v1134, %v1134
        %1136 = vrot.lane.b32.xlu0 %v743, 32
        %v1137 = vpop.permute.xlu0 %1136
        %v1139 = vsel %vm791, %v1135, 0
        %v1142 = vsel %vm807, %v1137, 0
        %1144 = vmatprep.subr.bf16.mxu0 0
        %1145 = vmatpush1.bf16.msra.mxu0 %v1142
        %1146 = vmatprep.subr.bf16.mxu0 0
        %1147 = vmatpush1.bf16.msra.mxu0 0
        %1148 = vmatprep.subr.bf16.mxu0 0
        %1149 = vmatpush1.bf16.msra.mxu0 0
        %1150 = vmatprep.subr.bf16.mxu0 0
        %1151 = vmatpush1.bf16.msra.mxu0 0
        %1152 = vmatprep.subr.bf16.mxu0 0
        %1153 = vmatpush1.bf16.msra.mxu0 0
        %1154 = vmatprep.subr.bf16.mxu0 0
        %1155 = vmatpush1.bf16.msra.mxu0 0
        %1156 = vmatprep.subr.bf16.mxu0 0
        %1157 = vmatpush1.bf16.msra.mxu0 0
        %1158 = vmatprep.subr.bf16.mxu0 0
        %1159 = vmatpush1.bf16.msra.mxu0 0
        %1160 = vmatprep.subr.bf16.mxu0 0
        %1161 = vmatpush1.bf16.msra.mxu0 0
        %1162 = vmatprep.subr.bf16.mxu0 0
        %1163 = vmatpush1.bf16.msra.mxu0 0
        %1164 = vmatprep.subr.bf16.mxu0 0
        %1165 = vmatpush1.bf16.msra.mxu0 0
        %1166 = vmatprep.subr.bf16.mxu0 0
        %1167 = vmatpush1.bf16.msra.mxu0 0
        %1168 = vmatprep.subr.bf16.mxu0 0
        %1169 = vmatpush1.bf16.msra.mxu0 0
        %1170 = vmatprep.subr.bf16.mxu0 0
        %1171 = vmatpush1.bf16.msra.mxu0 0
        %1172 = vmatprep.subr.bf16.mxu0 0
        %1173 = vmatpush1.bf16.msra.mxu0 0
        %1174 = vmatprep.subr.bf16.mxu0 0
        %1175 = vmatpush1.bf16.msra.mxu0 0
        %1176 = vmatprep.mubr.bf16.mxu0 0
        %1177 = vmatmul.mubr.bf16.gmra.mrb[0].mxu0 %v1139
        %v1178 = vpop.f32.mrb[0].mxu0
        %v1179 = vadd.f32 0.0, %v1178
        %v1180 = vpop.f32.mrb[0].mxu0
        %v1181 = vpop.f32.mrb[0].mxu0
        %v1182 = vpop.f32.mrb[0].mxu0
        %1183 = vdwg.mxu0
        %1185 = vrot.lane.b32.xlu0 %v959, 32
        %v1186 = vpop.permute.xlu0 %1185
        %1189 = vrot.lane.b32.xlu0 %v1069, 64
        %v1190 = vpop.permute.xlu0 %1189
        %1193 = vrot.lane.b32.xlu0 %v1179, 96
        %v1194 = vpop.permute.xlu0 %1193
        %v1196 = vsel %vm744, %v846, %v1186
        %vm1197 = vcmask 523264
        %v1198 = vsel %vm1197, %v1196, %v1190
        %vm1199 = vcmask 785408
        %v1200 = vsel %vm1199, %v1198, %v1194
        %v1201 = vpack.c.bf16 %v1200, %v1200
        %v1202 = vld [vmem:[%s3] sm:$0xf]
        %v1203 = vld [vmem:[%s3 + $0x4] sm:$0xf]
        %v1204 = vld [vmem:[%s3 + $0x8] sm:$0xf]
        %v1205 = vld [vmem:[%s3 + $0xc] sm:$0xf]
        %v1206 = vld [vmem:[%s3 + $0x10] sm:$0xf]
        %v1207 = vld [vmem:[%s3 + $0x14] sm:$0xf]
        %v1208 = vld [vmem:[%s3 + $0x18] sm:$0xf]
        %v1209 = vld [vmem:[%s3 + $0x1c] sm:$0xf]
        %v1210 = vld [vmem:[%s3 + $0x20] sm:$0xf]
        %v1211 = vld [vmem:[%s3 + $0x24] sm:$0xf]
        %v1212 = vld [vmem:[%s3 + $0x28] sm:$0xf]
        %v1213 = vld [vmem:[%s3 + $0x2c] sm:$0xf]
        %v1214 = vld [vmem:[%s3 + $0x30] sm:$0xf]
        %v1215 = vld [vmem:[%s3 + $0x34] sm:$0xf]
        %v1216 = vld [vmem:[%s3 + $0x38] sm:$0xf]
        %v1217 = vld [vmem:[%s3 + $0x3c] sm:$0xf]
        %v1218 = vld [vmem:[%s4] sm:$0x1]
        %v1220 = vlaneseq
        %v1221 = vshrl.u32 %v1220, 7
        %v1222 = vsub.s32 0, %v1221
        %v1223 = vrot.slane %v1218, %v1222
        %v1241 = vunpack.c.l.b16 %v1202
        %v1242 = vunpack.c.l.b16 %v1203
        %v1243 = vunpack.c.l.b16 %v1204
        %v1244 = vunpack.c.l.b16 %v1205
        %v1245 = vunpack.c.l.b16 %v1206
        %v1246 = vunpack.c.l.b16 %v1207
        %v1247 = vunpack.c.l.b16 %v1208
        %v1248 = vunpack.c.l.b16 %v1209
        %v1249 = vunpack.c.l.b16 %v1210
        %v1250 = vunpack.c.l.b16 %v1211
        %v1251 = vunpack.c.l.b16 %v1212
        %v1252 = vunpack.c.l.b16 %v1213
        %v1253 = vunpack.c.l.b16 %v1214
        %v1254 = vunpack.c.l.b16 %v1215
        %v1255 = vunpack.c.l.b16 %v1216
        %v1256 = vunpack.c.l.b16 %v1217
        %v1257 = vpack.c.b16 %v1242, %v1241
        %v1258 = vpack.c.b16 %v1244, %v1243
        %v1259 = vpack.c.b16 %v1246, %v1245
        %v1260 = vpack.c.b16 %v1248, %v1247
        %v1261 = vpack.c.b16 %v1250, %v1249
        %v1262 = vpack.c.b16 %v1252, %v1251
        %v1263 = vpack.c.b16 %v1254, %v1253
        %v1264 = vpack.c.b16 %v1256, %v1255
        %1273 = vmatprep.subr.bf16.mxu0 0
        %1274 = vmatpush1.bf16.msra.mxu0 %v1257
        %1275 = vmatprep.subr.bf16.mxu0 0
        %1276 = vmatpush1.bf16.msra.mxu0 %v1258
        %1277 = vmatprep.subr.bf16.mxu0 0
        %1278 = vmatpush1.bf16.msra.mxu0 %v1259
        %1279 = vmatprep.subr.bf16.mxu0 0
        %1280 = vmatpush1.bf16.msra.mxu0 %v1260
        %1281 = vmatprep.subr.bf16.mxu0 0
        %1282 = vmatpush1.bf16.msra.mxu0 %v1261
        %1283 = vmatprep.subr.bf16.mxu0 0
        %1284 = vmatpush1.bf16.msra.mxu0 %v1262
        %1285 = vmatprep.subr.bf16.mxu0 0
        %1286 = vmatpush1.bf16.msra.mxu0 %v1263
        %1287 = vmatprep.subr.bf16.mxu0 0
        %1288 = vmatpush1.bf16.msra.mxu0 %v1264
        %1289 = vmatprep.subr.bf16.mxu0 0
        %1290 = vmatpush1.bf16.msra.mxu0 0
        %1291 = vmatprep.subr.bf16.mxu0 0
        %1292 = vmatpush1.bf16.msra.mxu0 0
        %1293 = vmatprep.subr.bf16.mxu0 0
        %1294 = vmatpush1.bf16.msra.mxu0 0
        %1295 = vmatprep.subr.bf16.mxu0 0
        %1296 = vmatpush1.bf16.msra.mxu0 0
        %1297 = vmatprep.subr.bf16.mxu0 0
        %1298 = vmatpush1.bf16.msra.mxu0 0
        %1299 = vmatprep.subr.bf16.mxu0 0
        %1300 = vmatpush1.bf16.msra.mxu0 0
        %1301 = vmatprep.subr.bf16.mxu0 0
        %1302 = vmatpush1.bf16.msra.mxu0 0
        %1303 = vmatprep.subr.bf16.mxu0 0
        %1304 = vmatpush1.bf16.msra.mxu0 0
        %1305 = vmatprep.mubr.bf16.mxu0 0
        %1306 = vmatmul.mubr.bf16.gmra.mrb[0].mxu0 %v1201
        %v1307 = vpop.f32.mrb[0].mxu0
        %v1308 = vadd.f32 %v1223, %v1307
        %v1309 = vpop.f32.mrb[0].mxu0
        %v1310 = vpop.f32.mrb[0].mxu0
        %v1311 = vpop.f32.mrb[0].mxu0
        %1312 = vdwg.mxu0
        %v1313 = vadd.f32 %v481, %v1308
        %1314 = vadd.xlane.f32.xlu0 %v1313
        %v1315 = vpop.xlane.xlu0 %1314
        %v1316 = vrcp.pop 128.0
        %v1317 = vmul.f32 %v1315, %v1316
        %v1318 = vsub.f32 %v1313, %v1317
        %v1319 = vmul.f32 %v1318, %v1318
        %1320 = vadd.xlane.f32.xlu0 %v1319
        %v1321 = vpop.xlane.xlu0 %1320
        %v1322 = vmul.f32 %v1321, %v1316
        %v1323 = vadd.f32 %v1322, 1e-05
        %v1324 = vrsqrt.pop %v1323
        %v1325 = vmul.f32 %v1318, %v1324
        %v1326 = vld [vmem:[%s5] sm:$0x1]
        %v1328 = vlaneseq
        %v1329 = vshrl.u32 %v1328, 7
        %v1330 = vsub.s32 0, %v1329
        %v1331 = vrot.slane %v1326, %v1330
        %v1333 = vmul.f32 %v1325, %v1331
        %v1334 = vld [vmem:[%s6] sm:$0x1]
        %v1336 = vlaneseq
        %v1337 = vshrl.u32 %v1336, 7
        %v1338 = vsub.s32 0, %v1337
        %v1339 = vrot.slane %v1334, %v1338
        %v1341 = vadd.f32 %v1333, %v1339
        %v1342 = vpack.c.bf16 %v1341, %v1341
        %v1343 = vld [vmem:[#allocation4] sm:$0xff]
        %v1344 = vld [vmem:[#allocation4 + $0x8] sm:$0xff]
        %v1345 = vld [vmem:[#allocation4 + $0x10] sm:$0xff]
        %v1346 = vld [vmem:[#allocation4 + $0x18] sm:$0xff]
        %v1347 = vld [vmem:[#allocation4 + $0x20] sm:$0xff]
        %v1348 = vld [vmem:[#allocation4 + $0x28] sm:$0xff]
        %v1349 = vld [vmem:[#allocation4 + $0x30] sm:$0xff]
        %v1350 = vld [vmem:[#allocation4 + $0x38] sm:$0xff]
        %v1351 = vld [vmem:[#allocation4 + $0x40] sm:$0xff]
        %v1352 = vld [vmem:[#allocation4 + $0x48] sm:$0xff]
        %v1353 = vld [vmem:[#allocation4 + $0x50] sm:$0xff]
        %v1354 = vld [vmem:[#allocation4 + $0x58] sm:$0xff]
        %v1355 = vld [vmem:[#allocation4 + $0x60] sm:$0xff]
        %v1356 = vld [vmem:[#allocation4 + $0x68] sm:$0xff]
        %v1357 = vld [vmem:[#allocation4 + $0x70] sm:$0xff]
        %v1358 = vld [vmem:[#allocation4 + $0x78] sm:$0xff]
        %v1359 = vld [vmem:[%s8] sm:$0x3]
        %v1361 = vlaneseq
        %v1362 = vshrl.u32 %v1361, 7
        %v1363 = vsub.s32 0, %v1362
        %v1364 = vrot.slane %v1359, %v1363
        %v1365 = vlaneseq
        %v1366 = vshrl.u32 %v1365, 7
        %v1367 = vsub.s32 1, %v1366
        %v1368 = vrot.slane %v1359, %v1367
        %v1387 = vunpack.c.l.b16 %v1343
        %v1388 = vunpack.c.h.b16 %v1343
        %v1389 = vunpack.c.l.b16 %v1344
        %v1390 = vunpack.c.h.b16 %v1344
        %v1391 = vunpack.c.l.b16 %v1345
        %v1392 = vunpack.c.h.b16 %v1345
        %v1393 = vunpack.c.l.b16 %v1346
        %v1394 = vunpack.c.h.b16 %v1346
        %v1395 = vunpack.c.l.b16 %v1347
        %v1396 = vunpack.c.h.b16 %v1347
        %v1397 = vunpack.c.l.b16 %v1348
        %v1398 = vunpack.c.h.b16 %v1348
        %v1399 = vunpack.c.l.b16 %v1349
        %v1400 = vunpack.c.h.b16 %v1349
        %v1401 = vunpack.c.l.b16 %v1350
        %v1402 = vunpack.c.h.b16 %v1350
        %v1403 = vunpack.c.l.b16 %v1351
        %v1404 = vunpack.c.h.b16 %v1351
        %v1405 = vunpack.c.l.b16 %v1352
        %v1406 = vunpack.c.h.b16 %v1352
        %v1407 = vunpack.c.l.b16 %v1353
        %v1408 = vunpack.c.h.b16 %v1353
        %v1409 = vunpack.c.l.b16 %v1354
        %v1410 = vunpack.c.h.b16 %v1354
        %v1411 = vunpack.c.l.b16 %v1355
        %v1412 = vunpack.c.h.b16 %v1355
        %v1413 = vunpack.c.l.b16 %v1356
        %v1414 = vunpack.c.h.b16 %v1356
        %v1415 = vunpack.c.l.b16 %v1357
        %v1416 = vunpack.c.h.b16 %v1357
        %v1417 = vunpack.c.l.b16 %v1358
        %v1418 = vunpack.c.h.b16 %v1358
        %v1419 = vpack.c.b16 %v1389, %v1387
        %v1420 = vpack.c.b16 %v1390, %v1388
        %v1421 = vpack.c.b16 %v1393, %v1391
        %v1422 = vpack.c.b16 %v1394, %v1392
        %v1423 = vpack.c.b16 %v1397, %v1395
        %v1424 = vpack.c.b16 %v1398, %v1396
        %v1425 = vpack.c.b16 %v1401, %v1399
        %v1426 = vpack.c.b16 %v1402, %v1400
        %v1427 = vpack.c.b16 %v1405, %v1403
        %v1428 = vpack.c.b16 %v1406, %v1404
        %v1429 = vpack.c.b16 %v1409, %v1407
        %v1430 = vpack.c.b16 %v1410, %v1408
        %v1431 = vpack.c.b16 %v1413, %v1411
        %v1432 = vpack.c.b16 %v1414, %v1412
        %v1433 = vpack.c.b16 %v1417, %v1415
        %v1434 = vpack.c.b16 %v1418, %v1416
        %1451 = vmatprep.subr.bf16.mxu0 %v1420
        %1452 = vmatpush1.bf16.msra.mxu0 %v1419
        %1453 = vmatprep.subr.bf16.mxu0 %v1422
        %1454 = vmatpush1.bf16.msra.mxu0 %v1421
        %1455 = vmatprep.subr.bf16.mxu0 %v1424
        %1456 = vmatpush1.bf16.msra.mxu0 %v1423
        %1457 = vmatprep.subr.bf16.mxu0 %v1426
        %1458 = vmatpush1.bf16.msra.mxu0 %v1425
        %1459 = vmatprep.subr.bf16.mxu0 %v1428
        %1460 = vmatpush1.bf16.msra.mxu0 %v1427
        %1461 = vmatprep.subr.bf16.mxu0 %v1430
        %1462 = vmatpush1.bf16.msra.mxu0 %v1429
        %1463 = vmatprep.subr.bf16.mxu0 %v1432
        %1464 = vmatpush1.bf16.msra.mxu0 %v1431
        %1465 = vmatprep.subr.bf16.mxu0 %v1434
        %1466 = vmatpush1.bf16.msra.mxu0 %v1433
        %1467 = vmatprep.subr.bf16.mxu0 0
        %1468 = vmatpush1.bf16.msra.mxu0 0
        %1469 = vmatprep.subr.bf16.mxu0 0
        %1470 = vmatpush1.bf16.msra.mxu0 0
        %1471 = vmatprep.subr.bf16.mxu0 0
        %1472 = vmatpush1.bf16.msra.mxu0 0
        %1473 = vmatprep.subr.bf16.mxu0 0
        %1474 = vmatpush1.bf16.msra.mxu0 0
        %1475 = vmatprep.subr.bf16.mxu0 0
        %1476 = vmatpush1.bf16.msra.mxu0 0
        %1477 = vmatprep.subr.bf16.mxu0 0
        %1478 = vmatpush1.bf16.msra.mxu0 0
        %1479 = vmatprep.subr.bf16.mxu0 0
        %1480 = vmatpush1.bf16.msra.mxu0 0
        %1481 = vmatprep.subr.bf16.mxu0 0
        %1482 = vmatpush1.bf16.msra.mxu0 0
        %1483 = vmatprep.mubr.bf16.mxu0 0
        %1484 = vmatmul.mubr.bf16.gmra.mrb[0].mxu0 %v1342
        %v1485 = vpop.f32.mrb[0].mxu0
        %v1486 = vadd.f32 %v1364, %v1485
        %v1487 = vpop.f32.mrb[0].mxu0
        %v1488 = vadd.f32 %v1368, %v1487
        %v1489 = vpop.f32.mrb[0].mxu0
        %v1490 = vpop.f32.mrb[0].mxu0
        %1491 = vdwg.mxu0
        %v1492 = vmax.f32 %v1486, 0.0
        %v1493 = vmax.f32 %v1488, 0.0
        %v1494 = vpack.c.bf16 %v1492, %v1492
        %v1495 = vpack.c.bf16 %v1493, %v1493
        %v1496 = vld [vmem:[#allocation6] sm:$0xf]
        %v1497 = vld [vmem:[#allocation6 + $0x4] sm:$0xf]
        %v1498 = vld [vmem:[#allocation6 + $0x8] sm:$0xf]
        %v1499 = vld [vmem:[#allocation6 + $0xc] sm:$0xf]
        %v1500 = vld [vmem:[#allocation6 + $0x10] sm:$0xf]
        %v1501 = vld [vmem:[#allocation6 + $0x14] sm:$0xf]
        %v1502 = vld [vmem:[#allocation6 + $0x18] sm:$0xf]
        %v1503 = vld [vmem:[#allocation6 + $0x1c] sm:$0xf]
        %v1504 = vld [vmem:[#allocation6 + $0x20] sm:$0xf]
        %v1505 = vld [vmem:[#allocation6 + $0x24] sm:$0xf]
        %v1506 = vld [vmem:[#allocation6 + $0x28] sm:$0xf]
        %v1507 = vld [vmem:[#allocation6 + $0x2c] sm:$0xf]
        %v1508 = vld [vmem:[#allocation6 + $0x30] sm:$0xf]
        %v1509 = vld [vmem:[#allocation6 + $0x34] sm:$0xf]
        %v1510 = vld [vmem:[#allocation6 + $0x38] sm:$0xf]
        %v1511 = vld [vmem:[#allocation6 + $0x3c] sm:$0xf]
        %v1512 = vld [vmem:[#allocation6 + $0x40] sm:$0xf]
        %v1513 = vld [vmem:[#allocation6 + $0x44] sm:$0xf]
        %v1514 = vld [vmem:[#allocation6 + $0x48] sm:$0xf]
        %v1515 = vld [vmem:[#allocation6 + $0x4c] sm:$0xf]
        %v1516 = vld [vmem:[#allocation6 + $0x50] sm:$0xf]
        %v1517 = vld [vmem:[#allocation6 + $0x54] sm:$0xf]
        %v1518 = vld [vmem:[#allocation6 + $0x58] sm:$0xf]
        %v1519 = vld [vmem:[#allocation6 + $0x5c] sm:$0xf]
        %v1520 = vld [vmem:[#allocation6 + $0x60] sm:$0xf]
        %v1521 = vld [vmem:[#allocation6 + $0x64] sm:$0xf]
        %v1522 = vld [vmem:[#allocation6 + $0x68] sm:$0xf]
        %v1523 = vld [vmem:[#allocation6 + $0x6c] sm:$0xf]
        %v1524 = vld [vmem:[#allocation6 + $0x70] sm:$0xf]
        %v1525 = vld [vmem:[#allocation6 + $0x74] sm:$0xf]
        %v1526 = vld [vmem:[#allocation6 + $0x78] sm:$0xf]
        %v1527 = vld [vmem:[#allocation6 + $0x7c] sm:$0xf]
        %v1528 = vld [vmem:[%s10] sm:$0x1]
        %v1530 = vlaneseq
        %v1531 = vshrl.u32 %v1530, 7
        %v1532 = vsub.s32 0, %v1531
        %v1533 = vrot.slane %v1528, %v1532
        %v1567 = vunpack.c.l.b16 %v1496
        %v1568 = vunpack.c.l.b16 %v1497
        %v1569 = vunpack.c.l.b16 %v1498
        %v1570 = vunpack.c.l.b16 %v1499
        %v1571 = vunpack.c.l.b16 %v1500
        %v1572 = vunpack.c.l.b16 %v1501
        %v1573 = vunpack.c.l.b16 %v1502
        %v1574 = vunpack.c.l.b16 %v1503
        %v1575 = vunpack.c.l.b16 %v1504
        %v1576 = vunpack.c.l.b16 %v1505
        %v1577 = vunpack.c.l.b16 %v1506
        %v1578 = vunpack.c.l.b16 %v1507
        %v1579 = vunpack.c.l.b16 %v1508
        %v1580 = vunpack.c.l.b16 %v1509
        %v1581 = vunpack.c.l.b16 %v1510
        %v1582 = vunpack.c.l.b16 %v1511
        %v1583 = vunpack.c.l.b16 %v1512
        %v1584 = vunpack.c.l.b16 %v1513
        %v1585 = vunpack.c.l.b16 %v1514
        %v1586 = vunpack.c.l.b16 %v1515
        %v1587 = vunpack.c.l.b16 %v1516
        %v1588 = vunpack.c.l.b16 %v1517
        %v1589 = vunpack.c.l.b16 %v1518
        %v1590 = vunpack.c.l.b16 %v1519
        %v1591 = vunpack.c.l.b16 %v1520
        %v1592 = vunpack.c.l.b16 %v1521
        %v1593 = vunpack.c.l.b16 %v1522
        %v1594 = vunpack.c.l.b16 %v1523
        %v1595 = vunpack.c.l.b16 %v1524
        %v1596 = vunpack.c.l.b16 %v1525
        %v1597 = vunpack.c.l.b16 %v1526
        %v1598 = vunpack.c.l.b16 %v1527
        %v1599 = vpack.c.b16 %v1568, %v1567
        %v1600 = vpack.c.b16 %v1570, %v1569
        %v1601 = vpack.c.b16 %v1572, %v1571
        %v1602 = vpack.c.b16 %v1574, %v1573
        %v1603 = vpack.c.b16 %v1576, %v1575
        %v1604 = vpack.c.b16 %v1578, %v1577
        %v1605 = vpack.c.b16 %v1580, %v1579
        %v1606 = vpack.c.b16 %v1582, %v1581
        %v1607 = vpack.c.b16 %v1584, %v1583
        %v1608 = vpack.c.b16 %v1586, %v1585
        %v1609 = vpack.c.b16 %v1588, %v1587
        %v1610 = vpack.c.b16 %v1590, %v1589
        %v1611 = vpack.c.b16 %v1592, %v1591
        %v1612 = vpack.c.b16 %v1594, %v1593
        %v1613 = vpack.c.b16 %v1596, %v1595
        %v1614 = vpack.c.b16 %v1598, %v1597
        %1631 = vmatprep.subr.bf16.mxu0 0
        %1632 = vmatpush1.bf16.msra.mxu0 %v1599
        %1633 = vmatprep.subr.bf16.mxu0 0
        %1634 = vmatpush1.bf16.msra.mxu0 %v1600
        %1635 = vmatprep.subr.bf16.mxu0 0
        %1636 = vmatpush1.bf16.msra.mxu0 %v1601
        %1637 = vmatprep.subr.bf16.mxu0 0
        %1638 = vmatpush1.bf16.msra.mxu0 %v1602
        %1639 = vmatprep.subr.bf16.mxu0 0
        %1640 = vmatpush1.bf16.msra.mxu0 %v1603
        %1641 = vmatprep.subr.bf16.mxu0 0
        %1642 = vmatpush1.bf16.msra.mxu0 %v1604
        %1643 = vmatprep.subr.bf16.mxu0 0
        %1644 = vmatpush1.bf16.msra.mxu0 %v1605
        %1645 = vmatprep.subr.bf16.mxu0 0
        %1646 = vmatpush1.bf16.msra.mxu0 %v1606
        %1647 = vmatprep.subr.bf16.mxu0 0
        %1648 = vmatpush1.bf16.msra.mxu0 %v1607
        %1649 = vmatprep.subr.bf16.mxu0 0
        %1650 = vmatpush1.bf16.msra.mxu0 %v1608
        %1651 = vmatprep.subr.bf16.mxu0 0
        %1652 = vmatpush1.bf16.msra.mxu0 %v1609
        %1653 = vmatprep.subr.bf16.mxu0 0
        %1654 = vmatpush1.bf16.msra.mxu0 %v1610
        %1655 = vmatprep.subr.bf16.mxu0 0
        %1656 = vmatpush1.bf16.msra.mxu0 %v1611
        %1657 = vmatprep.subr.bf16.mxu0 0
        %1658 = vmatpush1.bf16.msra.mxu0 %v1612
        %1659 = vmatprep.subr.bf16.mxu0 0
        %1660 = vmatpush1.bf16.msra.mxu0 %v1613
        %1661 = vmatprep.subr.bf16.mxu0 0
        %1662 = vmatpush1.bf16.msra.mxu0 %v1614
        %1663 = vmatprep.mubr.bf16.mxu0 %v1495
        %1664 = vmatmul.mubr.bf16.gmra.mrb[0].mxu0 %v1494
        %v1665 = vpop.f32.mrb[0].mxu0
        %v1666 = vadd.f32 %v1533, %v1665
        %v1667 = vpop.f32.mrb[0].mxu0
        %v1668 = vpop.f32.mrb[0].mxu0
        %v1669 = vpop.f32.mrb[0].mxu0
        %1670 = vdwg.mxu0
        %v1671 = vadd.f32 %v1341, %v1666
        %1672 = vadd.xlane.f32.xlu0 %v1671
        %v1673 = vpop.xlane.xlu0 %1672
        %v1674 = vmul.f32 %v1673, %v1316
        %v1675 = vsub.f32 %v1671, %v1674
        %v1676 = vmul.f32 %v1675, %v1675
        %1677 = vadd.xlane.f32.xlu0 %v1676
        %v1678 = vpop.xlane.xlu0 %1677
        %v1679 = vmul.f32 %v1678, %v1316
        %v1680 = vadd.f32 %v1679, 1e-05
        %v1681 = vrsqrt.pop %v1680
        %v1682 = vmul.f32 %v1675, %v1681
        %v1683 = vld [vmem:[%s11] sm:$0x1]
        %v1685 = vlaneseq
        %v1686 = vshrl.u32 %v1685, 7
        %v1687 = vsub.s32 0, %v1686
        %v1688 = vrot.slane %v1683, %v1687
        %v1690 = vmul.f32 %v1682, %v1688
        %v1691 = vld [vmem:[%s12] sm:$0x1]
        %v1693 = vlaneseq
        %v1694 = vshrl.u32 %v1693, 7
        %v1695 = vsub.s32 0, %v1694
        %v1696 = vrot.slane %v1691, %v1695
        %v1698 = vadd.f32 %v1690, %v1696
        %1699 = vst [vmem:[%s479] sm:$0xff] %v1698
        %p1700 = scmp.lt.s32.totalorder %s26, 1
        %s1701 = scalar_select %p1700, %s26, 1
        %s1702 = smul.addr %s1701, 8
        %s1703 = scalar_lea.vmem %s13, %s1702
        // Predicated region
        $region85: #{transformer_encoder.2} parent=71 // pred_check
          %p1704 = pneg %p322
        $region86: #{transformer_encoder.2} parent=71 // pred_check_branch
          %1706 = sbr.rel (%p1704) target = $region88
        $region87: #{transformer_encoder.2} parent=71 // pred_region
          _
        $region88: #{transformer_encoder.2} parent=71 // pred_fallthru
          _
      $region72: #{transformer_encoder.2} parent=5 // pred_fallthru
        _
      %p1707 = scmp.le.s32.totalorder 2, %s21
      // Predicated region
      $region89: #{transformer_encoder.2} parent=5 // pred_check
        %p1708 = pneg %p1707
      $region90: #{transformer_encoder.2} parent=5 // pred_check_branch
        %1710 = sbr.rel (%p1708) target = $region92
      $region91: #{transformer_encoder.2} parent=5 // pred_region
        %s1711 = ssub.s32 %s21, 2
        // Predicated region
        $region93: #{transformer_encoder.2} parent=91 // pred_check
          %p1712 = pneg %p328
        $region94: #{transformer_encoder.2} parent=91 // pred_check_branch
          %1714 = sbr.rel (%p1712) target = $region96
        $region95: #{transformer_encoder.2} parent=91 // pred_region
          %p1715 = scmp.lt.s32.totalorder %s27, 1
          %s1716 = scalar_select %p1715, %s27, 1
          %s1717 = smul.addr %s1716, 8
          %s1718 = scalar_lea.vmem %s13, %s1717
        $region96: #{transformer_encoder.2} parent=91 // pred_fallthru
          _
      $region92: #{transformer_encoder.2} parent=5 // pred_fallthru
        _
    $region6: #{transformer_encoder.2} parent=1 // loop_footer
      %s25 = sadd.s32 1, %s21
    $region7: #{transformer_encoder.2} parent=1 // loop_footer_branch
      %20 = sbr.rel target = $region3
    $region8: #{transformer_encoder.2} parent=1 // loop_exit
      _
    %1719 = vsyncpa [#allocation3], 1
    %s1720 = scalar_lea.sflag [#allocation3], 1
    %1721 = vsyncpa %s1720, 1
    %1722 = vsyncpa [#allocation5], 1

</llo_original>
